<compile_context>
chip_gen: v6e
topology: v6e:2x2x1
jax: 0.10.0
libtpu: 0.0.40
codegen_flags: <defaults>
</compile_context>

<pallas_src>
import functools

import jax
import jax.numpy as jnp
from jax import lax
from jax.experimental import pallas as pl
from jax.experimental.pallas import tpu as pltpu


def _round_up(a, b):
    return (a + b - 1) // b * b


# ---------------------------------------------------------------------------
# Phase 1: fused fc1 (all layers) + layer-0 logits + streamed adj_att @ x_aug
#          + one fused Q|K projection matmul for all attention layers
# ---------------------------------------------------------------------------

def _proj_kernel(xq_ref, xk_ref, aat_ref, w1_ref, cls0_ref, wqk_ref, bqk_ref,
                 logit0_ref, hatt_ref, qk_ref, ax_acc):
    j = pl.program_id(1)
    nkv = pl.num_programs(1)
    hp = cls0_ref.shape[0]               # padded hidden width (multiple of 128)

    @pl.when(j == 0)
    def _():
        # One matmul for every layer's fc1 (+bias via the ones column of x_aug).
        h_all = jnp.dot(xq_ref[...], w1_ref[...],
                        preferred_element_type=jnp.float32)        # [TM, L*HP]
        # Layer 0 (no attention): L2-normalize, ReLU, classifier slice, done.
        h0 = h_all[:, :hp]
        ssq = jnp.sum(h0 * h0, axis=-1, keepdims=True)
        h0n = h0 * lax.rsqrt(jnp.maximum(ssq, 1e-24))              # F.normalize
        logit0_ref[...] = jnp.dot(jnp.maximum(h0n, 0.0), cls0_ref[...],
                                  preferred_element_type=jnp.float32)
        # Raw fc1 outputs of attention layers (the "values" for phase 2).
        hatt_ref[...] = h_all[:, hp:]
        ax_acc[...] = jnp.zeros(ax_acc.shape, jnp.float32)

    # Stream kv tiles of adj_att @ x_aug  (reduction over the second grid axis).
    ax_acc[...] += jnp.dot(aat_ref[...], xk_ref[...],
                           preferred_element_type=jnp.float32)     # [TM, FP]

    @pl.when(j == nkv - 1)
    def _():
        # Q|K of all attention layers at once:
        #   t_att_l = adj_att @ h_l = ax @ W1aug_l
        #   [Q_l|K_l] = t_att_l @ [Wq_l|Wk_l] + b  ==  ax @ (W1aug_l @ [Wq_l|Wk_l]) + b
        # with the inner products precomputed on the host -> one matmul here.
        qk_ref[...] = (jnp.dot(ax_acc[...], wqk_ref[...],
                               preferred_element_type=jnp.float32)
                       + bqk_ref[...])


# ---------------------------------------------------------------------------
# Phase 2: flash-style attention + blend + normalize + fused classifier head
# ---------------------------------------------------------------------------

def _attn_head_kernel(q_ref, k_ref, hv_ref, adj_ref, logit0_ref,
                      clsl_ref, bc_ref, watt_ref, o_ref,
                      m_sc, l_sc, acc_sm, acc_adj, logits_sc):
    l = pl.program_id(1)
    j = pl.program_id(2)
    nl = pl.num_programs(1)
    nkv = pl.num_programs(2)

    @pl.when(j == 0)
    def _():
        m_sc[...] = jnp.full(m_sc.shape, -jnp.inf, jnp.float32)
        l_sc[...] = jnp.zeros(l_sc.shape, jnp.float32)
        acc_sm[...] = jnp.zeros(acc_sm.shape, jnp.float32)
        acc_adj[...] = jnp.zeros(acc_adj.shape, jnp.float32)

    @pl.when(jnp.logical_and(l == 0, j == 0))
    def _():
        # Start the logits accumulator from the layer-0 contribution (phase 1).
        logits_sc[...] = logit0_ref[...]

    adj = adj_ref[0]                                                # [TM, TK]
    hv = hv_ref[...]                                                # [TK, HP]
    # Q @ K^T via dot_general (no explicit transpose through the XLU).
    s = lax.dot_general(q_ref[...], k_ref[...],
                        (((1,), (1,)), ((), ())),
                        preferred_element_type=jnp.float32)         # [TM, TK]
    s = jnp.where(adj > 0, s, -9e15)                                # _soft_max_att mask

    m_prev = m_sc[...]
    m_new = jnp.maximum(m_prev, jnp.max(s, axis=-1, keepdims=True))
    alpha = jnp.exp(m_prev - m_new)
    p = jnp.exp(s - m_new)
    l_sc[...] = alpha * l_sc[...] + jnp.sum(p, axis=-1, keepdims=True)
    acc_sm[...] = alpha * acc_sm[...] + jnp.dot(p, hv,
                                                preferred_element_type=jnp.float32)
    acc_adj[...] = acc_adj[...] + jnp.dot(adj, hv,
                                          preferred_element_type=jnp.float32)
    m_sc[...] = m_new

    @pl.when(j == nkv - 1)
    def _():
        wv = watt_ref[...]                      # [1, 2, HP] (w0 / w1 broadcast rows)
        w0 = wv[0, 0:1, :]
        w1 = wv[0, 1:2, :]
        out = (acc_sm[...] * pl.reciprocal(l_sc[...], approx=True) * w0
               + acc_adj[...] * w1)
        ssq = jnp.sum(out * out, axis=-1, keepdims=True)
        out = out * lax.rsqrt(jnp.maximum(ssq, 1e-24))              # F.normalize
        # ReLU + this layer's classifier slice (hop mask folded into clsl).
        logits_sc[...] += jnp.dot(jnp.maximum(out, 0.0), clsl_ref[0],
                                  preferred_element_type=jnp.float32)

    @pl.when(jnp.logical_and(l == nl - 1, j == nkv - 1))
    def _():
        logits = logits_sc[...] + bc_ref[...]   # padded classes carry -1e30 bias
        mm = jnp.max(logits, axis=-1, keepdims=True)
        lse = jnp.log(jnp.sum(jnp.exp(logits - mm), axis=-1, keepdims=True)) + mm
        o_ref[...] = logits - lse               # log_softmax(dim=1)


# ---------------------------------------------------------------------------
# GGAT forward (parameter packing/padding in plain JAX, hot path in Pallas)
# ---------------------------------------------------------------------------

@functools.partial(jax.jit, static_argnames=("nhid", "nclass", "tile"))
def ggat_forward(x, adj_list, adj_att, params, nhid, nclass, tile=128):
    nlayers = len(adj_list)
    natt = nlayers - 1
    assert nlayers >= 2 and adj_list[0] is None
    assert all(a is not None for a in adj_list[1:])

    n, nfeat = x.shape
    HP = _round_up(nhid, 128)            # padded hidden width
    FP = _round_up(nfeat + 1, 128)       # padded feature width (+1 ones column)
    CP = _round_up(nclass, 128)          # padded class width
    NP = _round_up(n, tile)              # padded node count
    nq = NP // tile
    nkv = NP // tile

    mask = jax.nn.softmax(params["hop_select"].astype(jnp.float32))       # [L]
    watt = jax.nn.softmax(params["w"].astype(jnp.float32), axis=-1)       # [A, 2]

    # x augmented with a ones column (folds fc1 bias into one matmul and makes
    # adj_att @ h == (adj_att @ x_aug) @ W1aug), zero-padded to [NP, FP].
    x_aug = jnp.concatenate([x.astype(jnp.float32),
                             jnp.ones((n, 1), jnp.float32)], axis=1)
    x_aug = jnp.pad(x_aug, ((0, NP - n), (0, FP - (nfeat + 1))))

    adj_att_p = jnp.pad(adj_att.astype(jnp.float32),
                        ((0, NP - n), (0, NP - n)))
    adj_stack = jnp.stack([a.astype(jnp.float32) for a in adj_list[1:]])
    adj_stack = jnp.pad(adj_stack, ((0, 0), (0, NP - n), (0, NP - n)))

    # Fused fc1 (+bias row) weights for all layers, zero-padded: [FP, L*HP].
    w1aug = jnp.zeros((FP, nlayers * HP), jnp.float32)
    for i in range(nlayers):
        w1aug = w1aug.at[:nfeat, i * HP:i * HP + nhid].set(
            params["fc1_w"][i].astype(jnp.float32))
        w1aug = w1aug.at[nfeat, i * HP:i * HP + nhid].set(
            params["fc1_b"][i].reshape(-1).astype(jnp.float32))

    # Fused Q|K projection weights for ALL attention layers, with the fc1
    # weights folded in:  Q_l = ax @ (W1aug_l @ Wq_l) + bq_l   (and same for K).
    # Layout per layer l: columns [l*2HP, l*2HP+HP) = Q, [l*2HP+HP, (l+1)*2HP) = K.
    wqk_f = jnp.zeros((FP, natt * 2 * HP), jnp.float32)
    bqk = jnp.zeros((1, natt * 2 * HP), jnp.float32)
    for l in range(natt):
        w1l = w1aug[:, (l + 1) * HP:(l + 1) * HP + nhid]            # [FP, nhid]
        wqk_f = wqk_f.at[:, l * 2 * HP:l * 2 * HP + nhid].set(
            w1l @ params["q_w"][l].astype(jnp.float32))
        wqk_f = wqk_f.at[:, l * 2 * HP + HP:l * 2 * HP + HP + nhid].set(
            w1l @ params["k_w"][l].astype(jnp.float32))
        bqk = bqk.at[0, l * 2 * HP:l * 2 * HP + nhid].set(
            params["q_b"][l].reshape(-1).astype(jnp.float32))
        bqk = bqk.at[0, l * 2 * HP + HP:l * 2 * HP + HP + nhid].set(
            params["k_b"][l].reshape(-1).astype(jnp.float32))

    # Classifier slices with the hop-select mask folded in (mask>0, ReLU commutes).
    cls_w = params["cls_w"].astype(jnp.float32)
    cls0 = jnp.zeros((HP, CP), jnp.float32).at[:nhid, :nclass].set(
        cls_w[:nhid] * mask[0])
    clsl = jnp.zeros((natt, HP, CP), jnp.float32)
    for l in range(natt):
        clsl = clsl.at[l, :nhid, :nclass].set(
            cls_w[(l + 1) * nhid:(l + 2) * nhid] * mask[l + 1])
    # Padded classes get -1e30 bias so they never affect max / sum-exp.
    bc = jnp.full((1, CP), -1e30, jnp.float32).at[0, :nclass].set(
        params["cls_b"].reshape(-1).astype(jnp.float32))
    # Per-layer attention blend weights, broadcast along lanes: [A, 2, HP].
    watt_b = jnp.broadcast_to(watt[:, :, None], (natt, 2, HP)).astype(jnp.float32)

    cparams = pltpu.CompilerParams(vmem_limit_bytes=32 * 1024 * 1024,
                                   dimension_semantics=("parallel", "arbitrary"))

    logit0, h_att, qk = pl.pallas_call(
        _proj_kernel,
        out_shape=(jax.ShapeDtypeStruct((NP, CP), jnp.float32),
                   jax.ShapeDtypeStruct((NP, natt * HP), jnp.float32),
                   jax.ShapeDtypeStruct((NP, natt * 2 * HP), jnp.float32)),
        grid_spec=pltpu.PrefetchScalarGridSpec(
            num_scalar_prefetch=0,
            grid=(nq, nkv),
            in_specs=[
                pl.BlockSpec((tile, FP), lambda i, j: (i, 0)),             # x rows (q)
                pl.BlockSpec((tile, FP), lambda i, j: (j, 0)),             # x rows (kv)
                pl.BlockSpec((tile, tile), lambda i, j: (i, j)),           # adj_att tile
                pl.BlockSpec((FP, nlayers * HP), lambda i, j: (0, 0)),     # fused fc1
                pl.BlockSpec((HP, CP), lambda i, j: (0, 0)),               # cls slice 0
                pl.BlockSpec((FP, natt * 2 * HP), lambda i, j: (0, 0)),    # fused Q|K w
                pl.BlockSpec((1, natt * 2 * HP), lambda i, j: (0, 0)),     # fused Q|K b
            ],
            out_specs=(
                pl.BlockSpec((tile, CP), lambda i, j: (i, 0)),
                pl.BlockSpec((tile, natt * HP), lambda i, j: (i, 0)),
                pl.BlockSpec((tile, natt * 2 * HP), lambda i, j: (i, 0)),
            ),
            scratch_shapes=[pltpu.VMEM((tile, FP), jnp.float32)],
        ),
        compiler_params=cparams,
    )(x_aug, x_aug, adj_att_p, w1aug, cls0, wqk_f, bqk)

    cparams2 = pltpu.CompilerParams(
        vmem_limit_bytes=32 * 1024 * 1024,
        dimension_semantics=("parallel", "arbitrary", "arbitrary"))

    logp = pl.pallas_call(
        _attn_head_kernel,
        out_shape=jax.ShapeDtypeStruct((NP, CP), jnp.float32),
        grid_spec=pltpu.PrefetchScalarGridSpec(
            num_scalar_prefetch=0,
            grid=(nq, natt, nkv),
            in_specs=[
                pl.BlockSpec((tile, HP), lambda i, l, j: (i, 2 * l)),      # Q tile
                pl.BlockSpec((tile, HP), lambda i, l, j: (j, 2 * l + 1)),  # K tile
                pl.BlockSpec((tile, HP), lambda i, l, j: (j, l)),          # h values
                pl.BlockSpec((1, tile, tile), lambda i, l, j: (l, i, j)),  # adj tile
                pl.BlockSpec((tile, CP), lambda i, l, j: (i, 0)),          # layer-0 logits
                pl.BlockSpec((1, HP, CP), lambda i, l, j: (l, 0, 0)),      # cls slice l+1
                pl.BlockSpec((1, CP), lambda i, l, j: (0, 0)),             # cls bias
                pl.BlockSpec((1, 2, HP), lambda i, l, j: (l, 0, 0)),       # w0/w1 rows
            ],
            out_specs=pl.BlockSpec((tile, CP), lambda i, l, j: (i, 0)),
            scratch_shapes=[
                pltpu.VMEM((tile, 1), jnp.float32),    # running max
                pltpu.VMEM((tile, 1), jnp.float32),    # running denom
                pltpu.VMEM((tile, HP), jnp.float32),   # softmax-branch accumulator
                pltpu.VMEM((tile, HP), jnp.float32),   # adj-branch accumulator
                pltpu.VMEM((tile, CP), jnp.float32),   # classifier logits accumulator
            ],
        ),
        compiler_params=cparams2,
    )(qk, qk, h_att, adj_stack, logit0, clsl, bc, watt_b)

    return logp[:n, :nclass]


# Pure-JAX reference (same math, no Pallas) for a sanity check.
def ggat_reference(x, adj_list, adj_att, params):
    mask = jax.nn.softmax(params["hop_select"], axis=-1)
    outs = []
    for i in range(len(adj_list)):
        tmp = x @ params["fc1_w"][i] + params["fc1_b"][i]
        if adj_list[i] is not None:
            watt = jax.nn.softmax(params["w"][i - 1], axis=-1)
            t_att = adj_att @ tmp
            q = t_att @ params["q_w"][i - 1] + params["q_b"][i - 1]
            k = t_att @ params["k_w"][i - 1] + params["k_b"][i - 1]
            s = q @ k.T
            s = jnp.where(adj_list[i] > 0, s, -9e15)
            att = jax.nn.softmax(s, axis=-1) * watt[0] + adj_list[i] * watt[1]
            tmp = att @ tmp
        norm = jnp.sqrt(jnp.sum(tmp * tmp, axis=1, keepdims=True))
        tmp = tmp / jnp.maximum(norm, 1e-12)
        outs.append(mask[i] * tmp)
    final = jnp.concatenate(outs, axis=1)
    logits = jnp.maximum(final, 0.0) @ params["cls_w"] + params["cls_b"]
    return jax.nn.log_softmax(logits, axis=1)


# ---------------------------------------------------------------------------
# Main
# ---------------------------------------------------------------------------

if __name__ == "__main__":
    N, NFEAT, NHID, NCLASS, NLAYERS = 200, 16, 32, 4, 3

    key = jax.random.PRNGKey(0)
    keys = jax.random.split(key, 16)

    # Node features.
    x = jax.random.normal(keys[0], (N, NFEAT), dtype=jnp.float32)

    # Deterministic symmetric adjacency with self loops, row-normalized.
    a_raw = (jax.random.uniform(keys[1], (N, N)) < 0.05).astype(jnp.float32)
    a_sym = jnp.clip(a_raw + a_raw.T + jnp.eye(N, dtype=jnp.float32), 0.0, 1.0)
    deg = jnp.sum(a_sym, axis=1, keepdims=True)
    adj1 = a_sym / deg                       # 1-hop, row-normalized
    adj2 = adj1 @ adj1                       # 2-hop
    adj_att = adj1
    adj_list = (None, adj1, adj2)            # adj_list[0] is None (raw features)

    def lin(k, fan_in, fan_out):
        bound = 1.0 / jnp.sqrt(fan_in)
        kw, kb = jax.random.split(k)
        w = jax.random.uniform(kw, (fan_in, fan_out), minval=-bound, maxval=bound,
                               dtype=jnp.float32)
        b = jax.random.uniform(kb, (1, fan_out), minval=-bound, maxval=bound,
                               dtype=jnp.float32)
        return w, b

    fc1 = [lin(keys[2 + i], NFEAT, NHID) for i in range(NLAYERS)]
    qs = [lin(keys[6 + i], NHID, NHID) for i in range(NLAYERS - 1)]
    ks = [lin(keys[9 + i], NHID, NHID) for i in range(NLAYERS - 1)]
    cls_w, cls_b = lin(keys[12], NHID * NLAYERS, NCLASS)

    params = {
        "fc1_w": [w for w, _ in fc1], "fc1_b": [b for _, b in fc1],
        "q_w": [w for w, _ in qs], "q_b": [b for _, b in qs],
        "k_w": [w for w, _ in ks], "k_b": [b for _, b in ks],
        "cls_w": cls_w, "cls_b": cls_b,
        "hop_select": jnp.ones((NLAYERS,), jnp.float32),        # nn.Parameter ones
        "w": jnp.ones((NLAYERS - 1, 2), jnp.float32),           # nn.Parameter ones
    }

    out = ggat_forward(x, adj_list, adj_att, params, NHID, NCLASS)
    out = jax.block_until_ready(out)

    ref = ggat_reference(x, adj_list, adj_att, params)
    assert out.shape == (N, NCLASS)
    assert bool(jnp.all(jnp.isfinite(out)))
    err = float(jnp.max(jnp.abs(out - ref)))
    assert err < 5e-2, f"kernel disagrees with JAX reference (max abs err {err})"

    print("KERNEL_OK")
</pallas_src>

<mosaic_0001>
module attributes {stable_mosaic.version = 11 : i64} {
  func.func @_proj_kernel(%arg0: i32, %arg1: i32, %arg2: memref<128x128xf32, #tpu.memory_space<vmem>>, %arg3: memref<128x128xf32, #tpu.memory_space<vmem>>, %arg4: memref<128x128xf32, #tpu.memory_space<vmem>>, %arg5: memref<128x384xf32, #tpu.memory_space<vmem>>, %arg6: memref<128x128xf32, #tpu.memory_space<vmem>>, %arg7: memref<128x512xf32, #tpu.memory_space<vmem>>, %arg8: memref<1x512xf32, #tpu.memory_space<vmem>>, %arg9: memref<128x128xf32, #tpu.memory_space<vmem>>, %arg10: memref<128x256xf32, #tpu.memory_space<vmem>>, %arg11: memref<128x512xf32, #tpu.memory_space<vmem>>, %arg12: memref<128x128xf32, #tpu.memory_space<vmem>>) attributes {dimension_semantics = [#tpu.dimension_semantics<parallel>, #tpu.dimension_semantics<arbitrary>], iteration_bounds = array<i64: 2, 2>, scalar_prefetch = 0 : i64, scratch_operands = 1 : i64, tpu.core_type = #tpu.core_type<tc>, window_params = [{transform_indices = @transform_0, window_bounds = array<i64: 128, 128>}, {transform_indices = @transform_1, window_bounds = array<i64: 128, 128>}, {transform_indices = @transform_2, window_bounds = array<i64: 128, 128>}, {pipeline_mode = #tpu.pipeline_mode<synchronous>, transform_indices = @transform_3, window_bounds = array<i64: 128, 384>}, {pipeline_mode = #tpu.pipeline_mode<synchronous>, transform_indices = @transform_4, window_bounds = array<i64: 128, 128>}, {pipeline_mode = #tpu.pipeline_mode<synchronous>, transform_indices = @transform_5, window_bounds = array<i64: 128, 512>}, {pipeline_mode = #tpu.pipeline_mode<synchronous>, transform_indices = @transform_6, window_bounds = array<i64: 1, 512>}, {transform_indices = @transform_7, window_bounds = array<i64: 128, 128>}, {transform_indices = @transform_8, window_bounds = array<i64: 128, 256>}, {transform_indices = @transform_9, window_bounds = array<i64: 128, 512>}]} {
    %c0_i32 = arith.constant 0 : i32
    %0 = arith.cmpi eq, %arg1, %c0_i32 : i32
    %1 = arith.extui %0 : i1 to i32
    %c0_i32_0 = arith.constant 0 : i32
    %2 = arith.cmpi ne, %1, %c0_i32_0 : i32
    scf.if %2 {
      %c0_9 = arith.constant 0 : index
      %c0_10 = arith.constant 0 : index
      %12 = vector.load %arg2[%c0_9, %c0_10] : memref<128x128xf32, #tpu.memory_space<vmem>>, vector<128x128xf32>
      %c0_11 = arith.constant 0 : index
      %c0_12 = arith.constant 0 : index
      %13 = vector.load %arg5[%c0_11, %c0_12] : memref<128x384xf32, #tpu.memory_space<vmem>>, vector<128x384xf32>
      %cst_13 = arith.constant dense<0.000000e+00> : vector<128x384xf32>
      %14 = tpu.matmul %12, %13, %cst_13 {dimension_numbers = #tpu.dot_dimension_numbers<[1], [0], [0], [1], [0, 0, 1, 1], [], []>} : vector<128x128xf32>, vector<128x384xf32>, vector<128x384xf32> -> vector<128x384xf32>
      %15 = vector.extract_strided_slice %14 {offsets = [0, 0], sizes = [128, 128], strides = [1, 1]} : vector<128x384xf32> to vector<128x128xf32>
      %16 = arith.mulf %15, %15 : vector<128x128xf32>
      %cst_14 = arith.constant dense<0.000000e+00> : vector<128xf32>
      %17 = vector.multi_reduction <add>, %16, %cst_14 [1] : vector<128x128xf32> to vector<128xf32>
      %18 = vector.shape_cast %17 : vector<128xf32> to vector<128x1xf32>
      %cst_15 = arith.constant 1.000000e-24 : f32
      %19 = vector.broadcast %cst_15 : f32 to vector<128x1xf32>
      %20 = arith.maximumf %18, %19 : vector<128x1xf32>
      %21 = math.rsqrt %20 : vector<128x1xf32>
      %22 = vector.broadcast %21 : vector<128x1xf32> to vector<128x128xf32>
      %23 = arith.mulf %15, %22 : vector<128x128xf32>
      %cst_16 = arith.constant 0.000000e+00 : f32
      %24 = vector.broadcast %cst_16 : f32 to vector<128x128xf32>
      %25 = arith.maximumf %23, %24 : vector<128x128xf32>
      %c0_17 = arith.constant 0 : index
      %c0_18 = arith.constant 0 : index
      %26 = vector.load %arg6[%c0_17, %c0_18] : memref<128x128xf32, #tpu.memory_space<vmem>>, vector<128x128xf32>
      %cst_19 = arith.constant dense<0.000000e+00> : vector<128x128xf32>
      %27 = tpu.matmul %25, %26, %cst_19 {dimension_numbers = #tpu.dot_dimension_numbers<[1], [0], [0], [1], [0, 0, 1, 1], [], []>} : vector<128x128xf32>, vector<128x128xf32>, vector<128x128xf32> -> vector<128x128xf32>
      %c0_20 = arith.constant 0 : index
      %c0_21 = arith.constant 0 : index
      %28 = vector.load %arg9[%c0_20, %c0_21] : memref<128x128xf32, #tpu.memory_space<vmem>>, vector<128x128xf32>
      tpu.vector_store %arg9[%c0_20, %c0_21], %27 {strides = array<i32>} : memref<128x128xf32, #tpu.memory_space<vmem>>, vector<128x128xf32>,
      %29 = vector.extract_strided_slice %14 {offsets = [0, 128], sizes = [128, 256], strides = [1, 1]} : vector<128x384xf32> to vector<128x256xf32>
      %c0_22 = arith.constant 0 : index
      %c0_23 = arith.constant 0 : index
      %30 = vector.load %arg10[%c0_22, %c0_23] : memref<128x256xf32, #tpu.memory_space<vmem>>, vector<128x256xf32>
      tpu.vector_store %arg10[%c0_22, %c0_23], %29 {strides = array<i32>} : memref<128x256xf32, #tpu.memory_space<vmem>>, vector<128x256xf32>,
      %cst_24 = arith.constant 0.000000e+00 : f32
      %31 = vector.broadcast %cst_24 : f32 to vector<128x128xf32>
      %c0_25 = arith.constant 0 : index
      %c0_26 = arith.constant 0 : index
      %32 = vector.load %arg12[%c0_25, %c0_26] : memref<128x128xf32, #tpu.memory_space<vmem>>, vector<128x128xf32>
      tpu.vector_store %arg12[%c0_25, %c0_26], %31 {strides = array<i32>} : memref<128x128xf32, #tpu.memory_space<vmem>>, vector<128x128xf32>,
    } else {
    }
    %c0 = arith.constant 0 : index
    %c0_1 = arith.constant 0 : index
    %3 = vector.load %arg12[%c0, %c0_1] : memref<128x128xf32, #tpu.memory_space<vmem>>, vector<128x128xf32>
    %c0_2 = arith.constant 0 : index
    %c0_3 = arith.constant 0 : index
    %4 = vector.load %arg4[%c0_2, %c0_3] : memref<128x128xf32, #tpu.memory_space<vmem>>, vector<128x128xf32>
    %c0_4 = arith.constant 0 : index
    %c0_5 = arith.constant 0 : index
    %5 = vector.load %arg3[%c0_4, %c0_5] : memref<128x128xf32, #tpu.memory_space<vmem>>, vector<128x128xf32>
    %cst = arith.constant dense<0.000000e+00> : vector<128x128xf32>
    %6 = tpu.matmul %4, %5, %cst {dimension_numbers = #tpu.dot_dimension_numbers<[1], [0], [0], [1], [0, 0, 1, 1], [], []>} : vector<128x128xf32>, vector<128x128xf32>, vector<128x128xf32> -> vector<128x128xf32>
    %7 = arith.addf %3, %6 : vector<128x128xf32>
    %c0_6 = arith.constant 0 : index
    %c0_7 = arith.constant 0 : index
    %8 = vector.load %arg12[%c0_6, %c0_7] : memref<128x128xf32, #tpu.memory_space<vmem>>, vector<128x128xf32>
    tpu.vector_store %arg12[%c0_6, %c0_7], %7 {strides = array<i32>} : memref<128x128xf32, #tpu.memory_space<vmem>>, vector<128x128xf32>,
    %c1_i32 = arith.constant 1 : i32
    %9 = arith.cmpi eq, %arg1, %c1_i32 : i32
    %10 = arith.extui %9 : i1 to i32
    %c0_i32_8 = arith.constant 0 : i32
    %11 = arith.cmpi ne, %10, %c0_i32_8 : i32
    scf.if %11 {
      %c0_9 = arith.constant 0 : index
      %c0_10 = arith.constant 0 : index
      %12 = vector.load %arg12[%c0_9, %c0_10] : memref<128x128xf32, #tpu.memory_space<vmem>>, vector<128x128xf32>
      %c0_11 = arith.constant 0 : index
      %c0_12 = arith.constant 0 : index
      %13 = vector.load %arg7[%c0_11, %c0_12] : memref<128x512xf32, #tpu.memory_space<vmem>>, vector<128x512xf32>
      %cst_13 = arith.constant dense<0.000000e+00> : vector<128x512xf32>
      %14 = tpu.matmul %12, %13, %cst_13 {dimension_numbers = #tpu.dot_dimension_numbers<[1], [0], [0], [1], [0, 0, 1, 1], [], []>} : vector<128x128xf32>, vector<128x512xf32>, vector<128x512xf32> -> vector<128x512xf32>
      %c0_14 = arith.constant 0 : index
      %c0_15 = arith.constant 0 : index
      %15 = vector.load %arg8[%c0_14, %c0_15] : memref<1x512xf32, #tpu.memory_space<vmem>>, vector<1x512xf32>
      %16 = vector.broadcast %15 : vector<1x512xf32> to vector<128x512xf32>
      %17 = arith.addf %14, %16 : vector<128x512xf32>
      %c0_16 = arith.constant 0 : index
      %c0_17 = arith.constant 0 : index
      %18 = vector.load %arg11[%c0_16, %c0_17] : memref<128x512xf32, #tpu.memory_space<vmem>>, vector<128x512xf32>
      tpu.vector_store %arg11[%c0_16, %c0_17], %17 {strides = array<i32>} : memref<128x512xf32, #tpu.memory_space<vmem>>, vector<128x512xf32>,
    } else {
    }
    return
  }
  func.func @transform_0(%arg0: i32, %arg1: i32) -> (i32, i32) {
    %c0_i32 = arith.constant 0 : i32
    %c0_i32_0 = arith.constant 0 : i32
    return %arg0, %c0_i32 : i32, i32
  }
  func.func @transform_1(%arg0: i32, %arg1: i32) -> (i32, i32) {
    %c0_i32 = arith.constant 0 : i32
    %c0_i32_0 = arith.constant 0 : i32
    return %arg1, %c0_i32 : i32, i32
  }
  func.func @transform_2(%arg0: i32, %arg1: i32) -> (i32, i32) {
    %c0_i32 = arith.constant 0 : i32
    return %arg0, %arg1 : i32, i32
  }
  func.func @transform_3(%arg0: i32, %arg1: i32) -> (i32, i32) {
    %c0_i32 = arith.constant 0 : i32
    %c0_i32_0 = arith.constant 0 : i32
    %c0_i32_1 = arith.constant 0 : i32
    return %c0_i32, %c0_i32_0 : i32, i32
  }
  func.func @transform_4(%arg0: i32, %arg1: i32) -> (i32, i32) {
    %c0_i32 = arith.constant 0 : i32
    %c0_i32_0 = arith.constant 0 : i32
    %c0_i32_1 = arith.constant 0 : i32
    return %c0_i32, %c0_i32_0 : i32, i32
  }
  func.func @transform_5(%arg0: i32, %arg1: i32) -> (i32, i32) {
    %c0_i32 = arith.constant 0 : i32
    %c0_i32_0 = arith.constant 0 : i32
    %c0_i32_1 = arith.constant 0 : i32
    return %c0_i32, %c0_i32_0 : i32, i32
  }
  func.func @transform_6(%arg0: i32, %arg1: i32) -> (i32, i32) {
    %c0_i32 = arith.constant 0 : i32
    %c0_i32_0 = arith.constant 0 : i32
    %c0_i32_1 = arith.constant 0 : i32
    return %c0_i32, %c0_i32_0 : i32, i32
  }
  func.func @transform_7(%arg0: i32, %arg1: i32) -> (i32, i32) {
    %c0_i32 = arith.constant 0 : i32
    %c0_i32_0 = arith.constant 0 : i32
    return %arg0, %c0_i32 : i32, i32
  }
  func.func @transform_8(%arg0: i32, %arg1: i32) -> (i32, i32) {
    %c0_i32 = arith.constant 0 : i32
    %c0_i32_0 = arith.constant 0 : i32
    return %arg0, %c0_i32 : i32, i32
  }
  func.func @transform_9(%arg0: i32, %arg1: i32) -> (i32, i32) {
    %c0_i32 = arith.constant 0 : i32
    %c0_i32_0 = arith.constant 0 : i32
    return %arg0, %c0_i32 : i32, i32
  }
}

module attributes {stable_mosaic.version = 11 : i64} {
  func.func @_attn_head_kernel(%arg0: i32, %arg1: i32, %arg2: i32, %arg3: memref<128x128xf32, #tpu.memory_space<vmem>>, %arg4: memref<128x128xf32, #tpu.memory_space<vmem>>, %arg5: memref<128x128xf32, #tpu.memory_space<vmem>>, %arg6: memref<1x128x128xf32, #tpu.memory_space<vmem>>, %arg7: memref<128x128xf32, #tpu.memory_space<vmem>>, %arg8: memref<1x128x128xf32, #tpu.memory_space<vmem>>, %arg9: memref<1x128xf32, #tpu.memory_space<vmem>>, %arg10: memref<1x2x128xf32, #tpu.memory_space<vmem>>, %arg11: memref<128x128xf32, #tpu.memory_space<vmem>>, %arg12: memref<128x1xf32, #tpu.memory_space<vmem>>, %arg13: memref<128x1xf32, #tpu.memory_space<vmem>>, %arg14: memref<128x128xf32, #tpu.memory_space<vmem>>, %arg15: memref<128x128xf32, #tpu.memory_space<vmem>>, %arg16: memref<128x128xf32, #tpu.memory_space<vmem>>) attributes {dimension_semantics = [#tpu.dimension_semantics<parallel>, #tpu.dimension_semantics<arbitrary>, #tpu.dimension_semantics<arbitrary>], iteration_bounds = array<i64: 2, 2, 2>, scalar_prefetch = 0 : i64, scratch_operands = 5 : i64, tpu.core_type = #tpu.core_type<tc>, window_params = [{transform_indices = @transform_0, window_bounds = array<i64: 128, 128>}, {transform_indices = @transform_1, window_bounds = array<i64: 128, 128>}, {transform_indices = @transform_2, window_bounds = array<i64: 128, 128>}, {transform_indices = @transform_3, window_bounds = array<i64: 1, 128, 128>}, {transform_indices = @transform_4, window_bounds = array<i64: 128, 128>}, {transform_indices = @transform_5, window_bounds = array<i64: 1, 128, 128>}, {pipeline_mode = #tpu.pipeline_mode<synchronous>, transform_indices = @transform_6, window_bounds = array<i64: 1, 128>}, {transform_indices = @transform_7, window_bounds = array<i64: 1, 2, 128>}, {transform_indices = @transform_8, window_bounds = array<i64: 128, 128>}]} {
    %c0_i32 = arith.constant 0 : i32
    %0 = arith.cmpi eq, %arg2, %c0_i32 : i32
    %1 = arith.extui %0 : i1 to i32
    %c0_i32_0 = arith.constant 0 : i32
    %2 = arith.cmpi ne, %1, %c0_i32_0 : i32
    scf.if %2 {
      %cst_38 = arith.constant 0xFF800000 : f32
      %52 = vector.broadcast %cst_38 : f32 to vector<128x1xf32>
      %c0_39 = arith.constant 0 : index
      %c0_40 = arith.constant 0 : index
      %53 = vector.load %arg12[%c0_39, %c0_40] : memref<128x1xf32, #tpu.memory_space<vmem>>, vector<128x1xf32>
      tpu.vector_store %arg12[%c0_39, %c0_40], %52 {strides = array<i32>} : memref<128x1xf32, #tpu.memory_space<vmem>>, vector<128x1xf32>,
      %cst_41 = arith.constant 0.000000e+00 : f32
      %54 = vector.broadcast %cst_41 : f32 to vector<128x1xf32>
      %c0_42 = arith.constant 0 : index
      %c0_43 = arith.constant 0 : index
      %55 = vector.load %arg13[%c0_42, %c0_43] : memref<128x1xf32, #tpu.memory_space<vmem>>, vector<128x1xf32>
      tpu.vector_store %arg13[%c0_42, %c0_43], %54 {strides = array<i32>} : memref<128x1xf32, #tpu.memory_space<vmem>>, vector<128x1xf32>,
      %cst_44 = arith.constant 0.000000e+00 : f32
      %56 = vector.broadcast %cst_44 : f32 to vector<128x128xf32>
      %c0_45 = arith.constant 0 : index
      %c0_46 = arith.constant 0 : index
      %57 = vector.load %arg14[%c0_45, %c0_46] : memref<128x128xf32, #tpu.memory_space<vmem>>, vector<128x128xf32>
      tpu.vector_store %arg14[%c0_45, %c0_46], %56 {strides = array<i32>} : memref<128x128xf32, #tpu.memory_space<vmem>>, vector<128x128xf32>,
      %cst_47 = arith.constant 0.000000e+00 : f32
      %58 = vector.broadcast %cst_47 : f32 to vector<128x128xf32>
      %c0_48 = arith.constant 0 : index
      %c0_49 = arith.constant 0 : index
      %59 = vector.load %arg15[%c0_48, %c0_49] : memref<128x128xf32, #tpu.memory_space<vmem>>, vector<128x128xf32>
      tpu.vector_store %arg15[%c0_48, %c0_49], %58 {strides = array<i32>} : memref<128x128xf32, #tpu.memory_space<vmem>>, vector<128x128xf32>,
    } else {
    }
    %c0_i32_1 = arith.constant 0 : i32
    %3 = arith.cmpi eq, %arg1, %c0_i32_1 : i32
    %c0_i32_2 = arith.constant 0 : i32
    %4 = arith.cmpi eq, %arg2, %c0_i32_2 : i32
    %5 = arith.andi %3, %4 : i1
    %6 = arith.extui %5 : i1 to i32
    %c0_i32_3 = arith.constant 0 : i32
    %7 = arith.cmpi ne, %6, %c0_i32_3 : i32
    scf.if %7 {
      %c0_38 = arith.constant 0 : index
      %c0_39 = arith.constant 0 : index
      %52 = vector.load %arg7[%c0_38, %c0_39] : memref<128x128xf32, #tpu.memory_space<vmem>>, vector<128x128xf32>
      %c0_40 = arith.constant 0 : index
      %c0_41 = arith.constant 0 : index
      %53 = vector.load %arg16[%c0_40, %c0_41] : memref<128x128xf32, #tpu.memory_space<vmem>>, vector<128x128xf32>
      tpu.vector_store %arg16[%c0_40, %c0_41], %52 {strides = array<i32>} : memref<128x128xf32, #tpu.memory_space<vmem>>, vector<128x128xf32>,
    } else {
    }
    %c0 = arith.constant 0 : index
    %c0_4 = arith.constant 0 : index
    %c0_5 = arith.constant 0 : index
    %8 = vector.load %arg6[%c0, %c0_4, %c0_5] : memref<1x128x128xf32, #tpu.memory_space<vmem>>, vector<1x128x128xf32>
    %9 = vector.shape_cast %8 : vector<1x128x128xf32> to vector<128x128xf32>
    %c0_6 = arith.constant 0 : index
    %c0_7 = arith.constant 0 : index
    %10 = vector.load %arg5[%c0_6, %c0_7] : memref<128x128xf32, #tpu.memory_space<vmem>>, vector<128x128xf32>
    %c0_8 = arith.constant 0 : index
    %c0_9 = arith.constant 0 : index
    %11 = vector.load %arg3[%c0_8, %c0_9] : memref<128x128xf32, #tpu.memory_space<vmem>>, vector<128x128xf32>
    %c0_10 = arith.constant 0 : index
    %c0_11 = arith.constant 0 : index
    %12 = vector.load %arg4[%c0_10, %c0_11] : memref<128x128xf32, #tpu.memory_space<vmem>>, vector<128x128xf32>
    %cst = arith.constant dense<0.000000e+00> : vector<128x128xf32>
    %13 = tpu.matmul %11, %12, %cst {dimension_numbers = #tpu.dot_dimension_numbers<[1], [1], [0], [0], [0, 0, 1, 0], [], []>} : vector<128x128xf32>, vector<128x128xf32>, vector<128x128xf32> -> vector<128x128xf32>
    %cst_12 = arith.constant 0.000000e+00 : f32
    %14 = vector.broadcast %cst_12 : f32 to vector<128x128xf32>
    %15 = arith.cmpf ogt, %9, %14 : vector<128x128xf32>
    %cst_13 = arith.constant -9.000000e+15 : f32
    %16 = vector.broadcast %cst_13 : f32 to vector<128x128xf32>
    %17 = arith.select %15, %13, %16 : vector<128x128xi1>, vector<128x128xf32>
    %c0_14 = arith.constant 0 : index
    %c0_15 = arith.constant 0 : index
    %18 = vector.load %arg12[%c0_14, %c0_15] : memref<128x1xf32, #tpu.memory_space<vmem>>, vector<128x1xf32>
    %cst_16 = arith.constant dense<0xFF800000> : vector<128xf32>
    %19 = vector.multi_reduction <maximumf>, %17, %cst_16 [1] : vector<128x128xf32> to vector<128xf32>
    %20 = vector.shape_cast %19 : vector<128xf32> to vector<128x1xf32>
    %21 = arith.maximumf %18, %20 : vector<128x1xf32>
    %22 = arith.subf %18, %21 : vector<128x1xf32>
    %23 = math.exp %22 : vector<128x1xf32>
    %24 = vector.broadcast %21 : vector<128x1xf32> to vector<128x128xf32>
    %25 = arith.subf %17, %24 : vector<128x128xf32>
    %26 = math.exp %25 : vector<128x128xf32>
    %c0_17 = arith.constant 0 : index
    %c0_18 = arith.constant 0 : index
    %27 = vector.load %arg13[%c0_17, %c0_18] : memref<128x1xf32, #tpu.memory_space<vmem>>, vector<128x1xf32>
    %28 = arith.mulf %23, %27 : vector<128x1xf32>
    %cst_19 = arith.constant dense<0.000000e+00> : vector<128xf32>
    %29 = vector.multi_reduction <add>, %26, %cst_19 [1] : vector<128x128xf32> to vector<128xf32>
    %30 = vector.shape_cast %29 : vector<128xf32> to vector<128x1xf32>
    %31 = arith.addf %28, %30 : vector<128x1xf32>
    %c0_20 = arith.constant 0 : index
    %c0_21 = arith.constant 0 : index
    %32 = vector.load %arg13[%c0_20, %c0_21] : memref<128x1xf32, #tpu.memory_space<vmem>>, vector<128x1xf32>
    tpu.vector_store %arg13[%c0_20, %c0_21], %31 {strides = array<i32>} : memref<128x1xf32, #tpu.memory_space<vmem>>, vector<128x1xf32>,
    %c0_22 = arith.constant 0 : index
    %c0_23 = arith.constant 0 : index
    %33 = vector.load %arg14[%c0_22, %c0_23] : memref<128x128xf32, #tpu.memory_space<vmem>>, vector<128x128xf32>
    %34 = vector.broadcast %23 : vector<128x1xf32> to vector<128x128xf32>
    %35 = arith.mulf %34, %33 : vector<128x128xf32>
    %cst_24 = arith.constant dense<0.000000e+00> : vector<128x128xf32>
    %36 = tpu.matmul %26, %10, %cst_24 {dimension_numbers = #tpu.dot_dimension_numbers<[1], [0], [0], [1], [0, 0, 1, 1], [], []>} : vector<128x128xf32>, vector<128x128xf32>, vector<128x128xf32> -> vector<128x128xf32>
    %37 = arith.addf %35, %36 : vector<128x128xf32>
    %c0_25 = arith.constant 0 : index
    %c0_26 = arith.constant 0 : index
    %38 = vector.load %arg14[%c0_25, %c0_26] : memref<128x128xf32, #tpu.memory_space<vmem>>, vector<128x128xf32>
    tpu.vector_store %arg14[%c0_25, %c0_26], %37 {strides = array<i32>} : memref<128x128xf32, #tpu.memory_space<vmem>>, vector<128x128xf32>,
    %c0_27 = arith.constant 0 : index
    %c0_28 = arith.constant 0 : index
    %39 = vector.load %arg15[%c0_27, %c0_28] : memref<128x128xf32, #tpu.memory_space<vmem>>, vector<128x128xf32>
    %cst_29 = arith.constant dense<0.000000e+00> : vector<128x128xf32>
    %40 = tpu.matmul %9, %10, %cst_29 {dimension_numbers = #tpu.dot_dimension_numbers<[1], [0], [0], [1], [0, 0, 1, 1], [], []>} : vector<128x128xf32>, vector<128x128xf32>, vector<128x128xf32> -> vector<128x128xf32>
    %41 = arith.addf %39, %40 : vector<128x128xf32>
    %c0_30 = arith.constant 0 : index
    %c0_31 = arith.constant 0 : index
    %42 = vector.load %arg15[%c0_30, %c0_31] : memref<128x128xf32, #tpu.memory_space<vmem>>, vector<128x128xf32>
    tpu.vector_store %arg15[%c0_30, %c0_31], %41 {strides = array<i32>} : memref<128x128xf32, #tpu.memory_space<vmem>>, vector<128x128xf32>,
    %c0_32 = arith.constant 0 : index
    %c0_33 = arith.constant 0 : index
    %43 = vector.load %arg12[%c0_32, %c0_33] : memref<128x1xf32, #tpu.memory_space<vmem>>, vector<128x1xf32>
    tpu.vector_store %arg12[%c0_32, %c0_33], %21 {strides = array<i32>} : memref<128x1xf32, #tpu.memory_space<vmem>>, vector<128x1xf32>,
    %c1_i32 = arith.constant 1 : i32
    %44 = arith.cmpi eq, %arg2, %c1_i32 : i32
    %45 = arith.extui %44 : i1 to i32
    %c0_i32_34 = arith.constant 0 : i32
    %46 = arith.cmpi ne, %45, %c0_i32_34 : i32
    scf.if %46 {
      %c0_38 = arith.constant 0 : index
      %c0_39 = arith.constant 0 : index
      %c0_40 = arith.constant 0 : index
      %52 = vector.load %arg10[%c0_38, %c0_39, %c0_40] : memref<1x2x128xf32, #tpu.memory_space<vmem>>, vector<1x2x128xf32>
      %53 = vector.extract_strided_slice %52 {offsets = [0, 0, 0], sizes = [1, 1, 128], strides = [1, 1, 1]} : vector<1x2x128xf32> to vector<1x1x128xf32>
      %54 = vector.shape_cast %53 : vector<1x1x128xf32> to vector<1x128xf32>
      %55 = vector.extract_strided_slice %52 {offsets = [0, 1, 0], sizes = [1, 1, 128], strides = [1, 1, 1]} : vector<1x2x128xf32> to vector<1x1x128xf32>
      %56 = vector.shape_cast %55 : vector<1x1x128xf32> to vector<1x128xf32>
      %c0_41 = arith.constant 0 : index
      %c0_42 = arith.constant 0 : index
      %57 = vector.load %arg14[%c0_41, %c0_42] : memref<128x128xf32, #tpu.memory_space<vmem>>, vector<128x128xf32>
      %c0_43 = arith.constant 0 : index
      %c0_44 = arith.constant 0 : index
      %58 = vector.load %arg13[%c0_43, %c0_44] : memref<128x1xf32, #tpu.memory_space<vmem>>, vector<128x1xf32>
      %59 = tpu.reciprocal %58 {approx = true} : vector<128x1xf32> -> vector<128x1xf32>
      %60 = vector.broadcast %59 : vector<128x1xf32> to vector<128x128xf32>
      %61 = arith.mulf %57, %60 : vector<128x128xf32>
      %62 = vector.broadcast %54 : vector<1x128xf32> to vector<128x128xf32>
      %63 = arith.mulf %61, %62 : vector<128x128xf32>
      %c0_45 = arith.constant 0 : index
      %c0_46 = arith.constant 0 : index
      %64 = vector.load %arg15[%c0_45, %c0_46] : memref<128x128xf32, #tpu.memory_space<vmem>>, vector<128x128xf32>
      %65 = vector.broadcast %56 : vector<1x128xf32> to vector<128x128xf32>
      %66 = arith.mulf %64, %65 : vector<128x128xf32>
      %67 = arith.addf %63, %66 : vector<128x128xf32>
      %68 = arith.mulf %67, %67 : vector<128x128xf32>
      %cst_47 = arith.constant dense<0.000000e+00> : vector<128xf32>
      %69 = vector.multi_reduction <add>, %68, %cst_47 [1] : vector<128x128xf32> to vector<128xf32>
      %70 = vector.shape_cast %69 : vector<128xf32> to vector<128x1xf32>
      %cst_48 = arith.constant 1.000000e-24 : f32
      %71 = vector.broadcast %cst_48 : f32 to vector<128x1xf32>
      %72 = arith.maximumf %70, %71 : vector<128x1xf32>
      %73 = math.rsqrt %72 : vector<128x1xf32>
      %74 = vector.broadcast %73 : vector<128x1xf32> to vector<128x128xf32>
      %75 = arith.mulf %67, %74 : vector<128x128xf32>
      %c0_49 = arith.constant 0 : index
      %c0_50 = arith.constant 0 : index
      %76 = vector.load %arg16[%c0_49, %c0_50] : memref<128x128xf32, #tpu.memory_space<vmem>>, vector<128x128xf32>
      %cst_51 = arith.constant 0.000000e+00 : f32
      %77 = vector.broadcast %cst_51 : f32 to vector<128x128xf32>
      %78 = arith.maximumf %75, %77 : vector<128x128xf32>
      %c0_52 = arith.constant 0 : index
      %c0_53 = arith.constant 0 : index
      %c0_54 = arith.constant 0 : index
      %79 = vector.load %arg8[%c0_52, %c0_53, %c0_54] : memref<1x128x128xf32, #tpu.memory_space<vmem>>, vector<1x128x128xf32>
      %80 = vector.shape_cast %79 : vector<1x128x128xf32> to vector<128x128xf32>
      %cst_55 = arith.constant dense<0.000000e+00> : vector<128x128xf32>
      %81 = tpu.matmul %78, %80, %cst_55 {dimension_numbers = #tpu.dot_dimension_numbers<[1], [0], [0], [1], [0, 0, 1, 1], [], []>} : vector<128x128xf32>, vector<128x128xf32>, vector<128x128xf32> -> vector<128x128xf32>
      %82 = arith.addf %76, %81 : vector<128x128xf32>
      %c0_56 = arith.constant 0 : index
      %c0_57 = arith.constant 0 : index
      %83 = vector.load %arg16[%c0_56, %c0_57] : memref<128x128xf32, #tpu.memory_space<vmem>>, vector<128x128xf32>
      tpu.vector_store %arg16[%c0_56, %c0_57], %82 {strides = array<i32>} : memref<128x128xf32, #tpu.memory_space<vmem>>, vector<128x128xf32>,
    } else {
    }
    %c1_i32_35 = arith.constant 1 : i32
    %47 = arith.cmpi eq, %arg1, %c1_i32_35 : i32
    %c1_i32_36 = arith.constant 1 : i32
    %48 = arith.cmpi eq, %arg2, %c1_i32_36 : i32
    %49 = arith.andi %47, %48 : i1
    %50 = arith.extui %49 : i1 to i32
    %c0_i32_37 = arith.constant 0 : i32
    %51 = arith.cmpi ne, %50, %c0_i32_37 : i32
    scf.if %51 {
      %c0_38 = arith.constant 0 : index
      %c0_39 = arith.constant 0 : index
      %52 = vector.load %arg16[%c0_38, %c0_39] : memref<128x128xf32, #tpu.memory_space<vmem>>, vector<128x128xf32>
      %c0_40 = arith.constant 0 : index
      %c0_41 = arith.constant 0 : index
      %53 = vector.load %arg9[%c0_40, %c0_41] : memref<1x128xf32, #tpu.memory_space<vmem>>, vector<1x128xf32>
      %54 = vector.broadcast %53 : vector<1x128xf32> to vector<128x128xf32>
      %55 = arith.addf %52, %54 : vector<128x128xf32>
      %cst_42 = arith.constant dense<0xFF800000> : vector<128xf32>
      %56 = vector.multi_reduction <maximumf>, %55, %cst_42 [1] : vector<128x128xf32> to vector<128xf32>
      %57 = vector.shape_cast %56 : vector<128xf32> to vector<128x1xf32>
      %58 = vector.broadcast %57 : vector<128x1xf32> to vector<128x128xf32>
      %59 = arith.subf %55, %58 : vector<128x128xf32>
      %60 = math.exp %59 : vector<128x128xf32>
      %cst_43 = arith.constant dense<0.000000e+00> : vector<128xf32>
      %61 = vector.multi_reduction <add>, %60, %cst_43 [1] : vector<128x128xf32> to vector<128xf32>
      %62 = vector.shape_cast %61 : vector<128xf32> to vector<128x1xf32>
      %63 = math.log %62 : vector<128x1xf32>
      %64 = arith.addf %63, %57 : vector<128x1xf32>
      %65 = vector.broadcast %64 : vector<128x1xf32> to vector<128x128xf32>
      %66 = arith.subf %55, %65 : vector<128x128xf32>
      %c0_44 = arith.constant 0 : index
      %c0_45 = arith.constant 0 : index
      %67 = vector.load %arg11[%c0_44, %c0_45] : memref<128x128xf32, #tpu.memory_space<vmem>>, vector<128x128xf32>
      tpu.vector_store %arg11[%c0_44, %c0_45], %66 {strides = array<i32>} : memref<128x128xf32, #tpu.memory_space<vmem>>, vector<128x128xf32>,
    } else {
    }
    return
  }
  func.func @transform_0(%arg0: i32, %arg1: i32, %arg2: i32) -> (i32, i32) {
    %c2_i32 = arith.constant 2 : i32
    %0 = arith.muli %c2_i32, %arg1 : i32
    %c0_i32 = arith.constant 0 : i32
    return %arg0, %0 : i32, i32
  }
  func.func @transform_1(%arg0: i32, %arg1: i32, %arg2: i32) -> (i32, i32) {
    %c2_i32 = arith.constant 2 : i32
    %0 = arith.muli %c2_i32, %arg1 : i32
    %c1_i32 = arith.constant 1 : i32
    %1 = arith.addi %0, %c1_i32 : i32
    %c0_i32 = arith.constant 0 : i32
    return %arg2, %1 : i32, i32
  }
  func.func @transform_2(%arg0: i32, %arg1: i32, %arg2: i32) -> (i32, i32) {
    %c0_i32 = arith.constant 0 : i32
    return %arg2, %arg1 : i32, i32
  }
  func.func @transform_3(%arg0: i32, %arg1: i32, %arg2: i32) -> (i32, i32, i32) {
    %c0_i32 = arith.constant 0 : i32
    return %arg1, %arg0, %arg2 : i32, i32, i32
  }
  func.func @transform_4(%arg0: i32, %arg1: i32, %arg2: i32) -> (i32, i32) {
    %c0_i32 = arith.constant 0 : i32
    %c0_i32_0 = arith.constant 0 : i32
    return %arg0, %c0_i32 : i32, i32
  }
  func.func @transform_5(%arg0: i32, %arg1: i32, %arg2: i32) -> (i32, i32, i32) {
    %c0_i32 = arith.constant 0 : i32
    %c0_i32_0 = arith.constant 0 : i32
    %c0_i32_1 = arith.constant 0 : i32
    return %arg1, %c0_i32, %c0_i32_0 : i32, i32, i32
  }
  func.func @transform_6(%arg0: i32, %arg1: i32, %arg2: i32) -> (i32, i32) {
    %c0_i32 = arith.constant 0 : i32
    %c0_i32_0 = arith.constant 0 : i32
    %c0_i32_1 = arith.constant 0 : i32
    return %c0_i32, %c0_i32_0 : i32, i32
  }
  func.func @transform_7(%arg0: i32, %arg1: i32, %arg2: i32) -> (i32, i32, i32) {
    %c0_i32 = arith.constant 0 : i32
    %c0_i32_0 = arith.constant 0 : i32
    %c0_i32_1 = arith.constant 0 : i32
    return %arg1, %c0_i32, %c0_i32_0 : i32, i32, i32
  }
  func.func @transform_8(%arg0: i32, %arg1: i32, %arg2: i32) -> (i32, i32) {
    %c0_i32 = arith.constant 0 : i32
    %c0_i32_0 = arith.constant 0 : i32
    return %arg0, %c0_i32 : i32, i32
  }
}

</mosaic_0001>

<llo_original>
// kernel: ggat_forward.2
$region0: #{ggat_forward.2}
  #allocation0 [shape = 'u32[]', space=smem, size = 0x4, offset = 0x4, fixed_abs, tag = 'smem constant byte address 0x4 - core index']
  #allocation1 [shape = 'u32[144,128]{1,0:T(1,128)}', space=vmem, size = 0x12000, scoped, tag = 'internal scratch']
  #allocation2 [shape = 'f32[128,128]{1,0:T(8,128)}', space=vmem, size = 0x10000, scoped, tag = 'scratch operand']
  %s0 = inlined_call_operand.vmem [shape: f32[256,128], index: 0, kind: input, shape index: {}, may-alias: {0,1}]
  %s1 = inlined_call_operand.vmem [shape: f32[256,128], index: 1, kind: input, shape index: {}, may-alias: {0,1}]
  %s2 = inlined_call_operand.vmem [shape: f32[256,256], index: 2, kind: input, shape index: {}]
  %s3 = inlined_call_operand.vmem [shape: f32[128,384], index: 3, kind: input, shape index: {}]
  %s4 = inlined_call_operand.vmem [shape: f32[128,128], index: 4, kind: input, shape index: {}]
  %s5 = inlined_call_operand.vmem [shape: f32[128,512], index: 5, kind: input, shape index: {}]
  %s6 = inlined_call_operand.vmem [shape: f32[1,512], index: 6, kind: input, shape index: {}]
  %s7 = inlined_call_operand.vmem [shape: f32[256,128], index: 7, kind: output, shape index: {0}]
  %s8 = inlined_call_operand.vmem [shape: f32[256,256], index: 8, kind: output, shape index: {1}]
  %s9 = inlined_call_operand.vmem [shape: f32[256,512], index: 9, kind: output, shape index: {2}]
  %10 = xla_tuple %s7, %s8, %s9
  %s11 = sld [smem:[#allocation0]]
  $region123: #{ggat_forward.2} parent=0
    _
  %s13 = ssub.s32 1, %s11
  %s14 = scalar_select 0, %s13, %s11
  $region1: #{ggat_forward.2} parent=0
    #allocation3 [shape = 'u8[131072]{0}', space=vmem, size = 0x20000, scoped, tag = 'input window, operand 2']
    loop: start=0, step=1, limit=6
    $region2: #{ggat_forward.2} parent=1 // loop_pre_header
      _
    $region3: #{ggat_forward.2} parent=1 // loop_header
      %s16 = sphi 0, %s20
      %p17 = scmp.ge.s32.totalorder %s16, 6
      %s23 = sphi 0, %s35
      %s24 = sphi 0, %s31
      %s25 = sphi 0, %s23
      %s26 = sphi 0, %s24
      %s27 = sphi 0, %s25
      %s28 = sphi 0, %s26
      %s38 = sphi 0, %s40
      %s41 = sphi 0, %s38
      %s42 = sphi 0, %s41
      %s58 = sphi 0, %s42
      %s64 = sphi 0, %s66
      %s67 = sphi 0, %s64
      %s68 = sphi 0, %s67
      %s84 = sphi 0, %s68
      %s92 = sphi 0, %s94
      %s95 = sphi 0, %s92
      %s96 = sphi 0, %s95
      %s112 = sphi 0, %s96
      %s116 = sphi 0, %s116
      %s118 = sphi 0, %s116
      %s119 = sphi 0, %s118
      %s133 = sphi 0, %s119
      %s137 = sphi 0, %s137
      %s139 = sphi 0, %s137
      %s140 = sphi 0, %s139
      %s154 = sphi 0, %s140
      %s158 = sphi 0, %s158
      %s160 = sphi 0, %s158
      %s161 = sphi 0, %s160
      %s175 = sphi 0, %s161
      %s179 = sphi 0, %s179
      %s181 = sphi 0, %s179
      %s182 = sphi 0, %s181
      %s196 = sphi 0, %s182
      %s202 = sphi 0, %s204
      %s205 = sphi 0, %s202
      %s206 = sphi 0, %s205
      %s222 = sphi 0, %s206
      %s228 = sphi 0, %s230
      %s231 = sphi 0, %s228
      %s232 = sphi 0, %s231
      %s248 = sphi 0, %s232
      %s254 = sphi 0, %s256
      %s257 = sphi 0, %s254
      %s258 = sphi 0, %s257
      %s274 = sphi 0, %s258
    $region4: #{ggat_forward.2} parent=1 // loop_header_branch
      %19 = sbr.rel (%p17) target = $region8
    $region5: #{ggat_forward.2} parent=1 // loop_body
      %s21 = ssub.s32 %s16, 1
      %s22 = ssub.s32 %s16, 2
      %s29 = sadd.s32 1, %s24
      %p30 = scmp.ge.s32.totalorder %s29, 2
      %s31 = scalar_select %p30, 0, %s29
      %s32 = sadd.s32 1, %s23
      %s33 = scalar_select %p30, %s32, %s23
      %p34 = scmp.ge.s32.totalorder %s33, 2
      %s35 = scalar_select %p34, 0, %s33
      %s36 = ssub.s32 %s23, %s35
      %p37 = scmp.eq.s32.totalorder %s36, 0
      %s39 = sadd.s32 %s38, 1
      %s40 = scalar_select %p37, %s38, %s39
      %p43 = pneg %p37
      %p44 = scmp.eq.s32.totalorder %s16, 3
      %p45 = por %p43, %p44
      %p46 = scmp.ne.s32.totalorder %s38, %s41
      %p47 = scmp.eq.s32.totalorder %s16, 0
      %p48 = por %p46, %p47
      %p49 = scmp.ne.s32.totalorder %s38, %s41
      %p50 = scmp.eq.s32.totalorder %s21, 3
      %p51 = por %p49, %p50
      %p52 = scmp.ne.s32.totalorder %s41, %s42
      %p53 = scmp.eq.s32.totalorder %s21, 0
      %p54 = por %p52, %p53
      %p55 = scmp.ne.s32.totalorder %s41, %s42
      %p56 = scmp.eq.s32.totalorder %s22, 3
      %p57 = por %p55, %p56
      %p59 = scmp.ne.s32.totalorder %s42, %s58
      %p60 = scmp.eq.s32.totalorder %s22, 0
      %p61 = por %p59, %p60
      %s62 = ssub.s32 %s24, %s31
      %p63 = scmp.eq.s32.totalorder %s62, 0
      %s65 = sadd.s32 %s64, 1
      %s66 = scalar_select %p63, %s64, %s65
      %p69 = pneg %p63
      %p70 = scmp.eq.s32.totalorder %s16, 3
      %p71 = por %p69, %p70
      %p72 = scmp.ne.s32.totalorder %s64, %s67
      %p73 = scmp.eq.s32.totalorder %s16, 0
      %p74 = por %p72, %p73
      %p75 = scmp.ne.s32.totalorder %s64, %s67
      %p76 = scmp.eq.s32.totalorder %s21, 3
      %p77 = por %p75, %p76
      %p78 = scmp.ne.s32.totalorder %s67, %s68
      %p79 = scmp.eq.s32.totalorder %s21, 0
      %p80 = por %p78, %p79
      %p81 = scmp.ne.s32.totalorder %s67, %s68
      %p82 = scmp.eq.s32.totalorder %s22, 3
      %p83 = por %p81, %p82
      %p85 = scmp.ne.s32.totalorder %s68, %s84
      %p86 = scmp.eq.s32.totalorder %s22, 0
      %p87 = por %p85, %p86
      %s88 = ssub.s32 %s23, %s35
      %s89 = ssub.s32 %s24, %s31
      %s90 = sor.u32 %s88, %s89
      %p91 = scmp.eq.s32.totalorder %s90, 0
      %s93 = sadd.s32 %s92, 1
      %s94 = scalar_select %p91, %s92, %s93
      %p97 = pneg %p91
      %p98 = scmp.eq.s32.totalorder %s16, 3
      %p99 = por %p97, %p98
      %p100 = scmp.ne.s32.totalorder %s92, %s95
      %p101 = scmp.eq.s32.totalorder %s16, 0
      %p102 = por %p100, %p101
      %p103 = scmp.ne.s32.totalorder %s92, %s95
      %p104 = scmp.eq.s32.totalorder %s21, 3
      %p105 = por %p103, %p104
      %p106 = scmp.ne.s32.totalorder %s95, %s96
      %p107 = scmp.eq.s32.totalorder %s21, 0
      %p108 = por %p106, %p107
      %p109 = scmp.ne.s32.totalorder %s95, %s96
      %p110 = scmp.eq.s32.totalorder %s22, 3
      %p111 = por %p109, %p110
      %p113 = scmp.ne.s32.totalorder %s96, %s112
      %p114 = scmp.eq.s32.totalorder %s22, 0
      %p115 = por %p113, %p114
      %s117 = sadd.s32 %s116, 1
      %p120 = scmp.eq.s32.totalorder %s16, 3
      %p121 = scmp.ne.s32.totalorder %s116, %s118
      %p122 = scmp.eq.s32.totalorder %s16, 0
      %p123 = por %p121, %p122
      %p124 = scmp.ne.s32.totalorder %s116, %s118
      %p125 = scmp.eq.s32.totalorder %s21, 3
      %p126 = por %p124, %p125
      %p127 = scmp.ne.s32.totalorder %s118, %s119
      %p128 = scmp.eq.s32.totalorder %s21, 0
      %p129 = por %p127, %p128
      %p130 = scmp.ne.s32.totalorder %s118, %s119
      %p131 = scmp.eq.s32.totalorder %s22, 3
      %p132 = por %p130, %p131
      %p134 = scmp.ne.s32.totalorder %s119, %s133
      %p135 = scmp.eq.s32.totalorder %s22, 0
      %p136 = por %p134, %p135
      %s138 = sadd.s32 %s137, 1
      %p141 = scmp.eq.s32.totalorder %s16, 3
      %p142 = scmp.ne.s32.totalorder %s137, %s139
      %p143 = scmp.eq.s32.totalorder %s16, 0
      %p144 = por %p142, %p143
      %p145 = scmp.ne.s32.totalorder %s137, %s139
      %p146 = scmp.eq.s32.totalorder %s21, 3
      %p147 = por %p145, %p146
      %p148 = scmp.ne.s32.totalorder %s139, %s140
      %p149 = scmp.eq.s32.totalorder %s21, 0
      %p150 = por %p148, %p149
      %p151 = scmp.ne.s32.totalorder %s139, %s140
      %p152 = scmp.eq.s32.totalorder %s22, 3
      %p153 = por %p151, %p152
      %p155 = scmp.ne.s32.totalorder %s140, %s154
      %p156 = scmp.eq.s32.totalorder %s22, 0
      %p157 = por %p155, %p156
      %s159 = sadd.s32 %s158, 1
      %p162 = scmp.eq.s32.totalorder %s16, 3
      %p163 = scmp.ne.s32.totalorder %s158, %s160
      %p164 = scmp.eq.s32.totalorder %s16, 0
      %p165 = por %p163, %p164
      %p166 = scmp.ne.s32.totalorder %s158, %s160
      %p167 = scmp.eq.s32.totalorder %s21, 3
      %p168 = por %p166, %p167
      %p169 = scmp.ne.s32.totalorder %s160, %s161
      %p170 = scmp.eq.s32.totalorder %s21, 0
      %p171 = por %p169, %p170
      %p172 = scmp.ne.s32.totalorder %s160, %s161
      %p173 = scmp.eq.s32.totalorder %s22, 3
      %p174 = por %p172, %p173
      %p176 = scmp.ne.s32.totalorder %s161, %s175
      %p177 = scmp.eq.s32.totalorder %s22, 0
      %p178 = por %p176, %p177
      %s180 = sadd.s32 %s179, 1
      %p183 = scmp.eq.s32.totalorder %s16, 3
      %p184 = scmp.ne.s32.totalorder %s179, %s181
      %p185 = scmp.eq.s32.totalorder %s16, 0
      %p186 = por %p184, %p185
      %p187 = scmp.ne.s32.totalorder %s179, %s181
      %p188 = scmp.eq.s32.totalorder %s21, 3
      %p189 = por %p187, %p188
      %p190 = scmp.ne.s32.totalorder %s181, %s182
      %p191 = scmp.eq.s32.totalorder %s21, 0
      %p192 = por %p190, %p191
      %p193 = scmp.ne.s32.totalorder %s181, %s182
      %p194 = scmp.eq.s32.totalorder %s22, 3
      %p195 = por %p193, %p194
      %p197 = scmp.ne.s32.totalorder %s182, %s196
      %p198 = scmp.eq.s32.totalorder %s22, 0
      %p199 = por %p197, %p198
      %s200 = ssub.s32 %s23, %s35
      %p201 = scmp.eq.s32.totalorder %s200, 0
      %s203 = sadd.s32 %s202, 1
      %s204 = scalar_select %p201, %s202, %s203
      %p207 = pneg %p201
      %p208 = scmp.eq.s32.totalorder %s16, 3
      %p209 = por %p207, %p208
      %p210 = scmp.ne.s32.totalorder %s202, %s205
      %p211 = scmp.eq.s32.totalorder %s16, 0
      %p212 = por %p210, %p211
      %p213 = scmp.ne.s32.totalorder %s202, %s205
      %p214 = scmp.eq.s32.totalorder %s21, 3
      %p215 = por %p213, %p214
      %p216 = scmp.ne.s32.totalorder %s205, %s206
      %p217 = scmp.eq.s32.totalorder %s21, 0
      %p218 = por %p216, %p217
      %p219 = scmp.ne.s32.totalorder %s205, %s206
      %p220 = scmp.eq.s32.totalorder %s22, 3
      %p221 = por %p219, %p220
      %p223 = scmp.ne.s32.totalorder %s206, %s222
      %p224 = scmp.eq.s32.totalorder %s22, 0
      %p225 = por %p223, %p224
      %s226 = ssub.s32 %s23, %s35
      %p227 = scmp.eq.s32.totalorder %s226, 0
      %s229 = sadd.s32 %s228, 1
      %s230 = scalar_select %p227, %s228, %s229
      %p233 = pneg %p227
      %p234 = scmp.eq.s32.totalorder %s16, 3
      %p235 = por %p233, %p234
      %p236 = scmp.ne.s32.totalorder %s228, %s231
      %p237 = scmp.eq.s32.totalorder %s16, 0
      %p238 = por %p236, %p237
      %p239 = scmp.ne.s32.totalorder %s228, %s231
      %p240 = scmp.eq.s32.totalorder %s21, 3
      %p241 = por %p239, %p240
      %p242 = scmp.ne.s32.totalorder %s231, %s232
      %p243 = scmp.eq.s32.totalorder %s21, 0
      %p244 = por %p242, %p243
      %p245 = scmp.ne.s32.totalorder %s231, %s232
      %p246 = scmp.eq.s32.totalorder %s22, 3
      %p247 = por %p245, %p246
      %p249 = scmp.ne.s32.totalorder %s232, %s248
      %p250 = scmp.eq.s32.totalorder %s22, 0
      %p251 = por %p249, %p250
      %s252 = ssub.s32 %s23, %s35
      %p253 = scmp.eq.s32.totalorder %s252, 0
      %s255 = sadd.s32 %s254, 1
      %s256 = scalar_select %p253, %s254, %s255
      %p259 = pneg %p253
      %p260 = scmp.eq.s32.totalorder %s16, 3
      %p261 = por %p259, %p260
      %p262 = scmp.ne.s32.totalorder %s254, %s257
      %p263 = scmp.eq.s32.totalorder %s16, 0
      %p264 = por %p262, %p263
      %p265 = scmp.ne.s32.totalorder %s254, %s257
      %p266 = scmp.eq.s32.totalorder %s21, 3
      %p267 = por %p265, %p266
      %p268 = scmp.ne.s32.totalorder %s257, %s258
      %p269 = scmp.eq.s32.totalorder %s21, 0
      %p270 = por %p268, %p269
      %p271 = scmp.ne.s32.totalorder %s257, %s258
      %p272 = scmp.eq.s32.totalorder %s22, 3
      %p273 = por %p271, %p272
      %p275 = scmp.ne.s32.totalorder %s258, %s274
      %p276 = scmp.eq.s32.totalorder %s22, 0
      %p277 = por %p275, %p276
      %p278 = scmp.le.s32.totalorder 1, %s16
      %p279 = scmp.lt.s32.totalorder %s16, 5
      %p280 = pnand %p278, %p279
      %p281 = pneg %p280
      // Predicated region
      $region9: #{ggat_forward.2} parent=5 // pred_check
        _
      $region10: #{ggat_forward.2} parent=5 // pred_check_branch
        %283 = sbr.rel (%p280) target = $region12
      $region11: #{ggat_forward.2} parent=5 // pred_region
        %s284 = ssub.s32 %s16, 1
        // Predicated region
        $region13: #{ggat_forward.2} parent=11 // pred_check
          %p285 = pneg %p129
        $region14: #{ggat_forward.2} parent=11 // pred_check_branch
          %287 = sbr.rel (%p285) target = $region16
        $region15: #{ggat_forward.2} parent=11 // pred_region
          _
        $region16: #{ggat_forward.2} parent=11 // pred_fallthru
          _
        // Predicated region
        $region17: #{ggat_forward.2} parent=11 // pred_check
          %p288 = pneg %p150
        $region18: #{ggat_forward.2} parent=11 // pred_check_branch
          %290 = sbr.rel (%p288) target = $region20
        $region19: #{ggat_forward.2} parent=11 // pred_region
          _
        $region20: #{ggat_forward.2} parent=11 // pred_fallthru
          _
        // Predicated region
        $region21: #{ggat_forward.2} parent=11 // pred_check
          %p291 = pneg %p171
        $region22: #{ggat_forward.2} parent=11 // pred_check_branch
          %293 = sbr.rel (%p291) target = $region24
        $region23: #{ggat_forward.2} parent=11 // pred_region
          _
        $region24: #{ggat_forward.2} parent=11 // pred_fallthru
          _
        // Predicated region
        $region25: #{ggat_forward.2} parent=11 // pred_check
          %p294 = pneg %p192
        $region26: #{ggat_forward.2} parent=11 // pred_check_branch
          %296 = sbr.rel (%p294) target = $region28
        $region27: #{ggat_forward.2} parent=11 // pred_region
          _
        $region28: #{ggat_forward.2} parent=11 // pred_fallthru
          _
      $region12: #{ggat_forward.2} parent=5 // pred_fallthru
        _
      %p297 = scmp.lt.s32.totalorder %s16, 4
      // Predicated region
      $region29: #{ggat_forward.2} parent=5 // pred_check
        %p298 = pneg %p297
      $region30: #{ggat_forward.2} parent=5 // pred_check_branch
        %300 = sbr.rel (%p298) target = $region32
      $region31: #{ggat_forward.2} parent=5 // pred_region
        // Predicated region
        $region33: #{ggat_forward.2} parent=31 // pred_check
          %p301 = pneg %p48
        $region34: #{ggat_forward.2} parent=31 // pred_check_branch
          %303 = sbr.rel (%p301) target = $region36
        $region35: #{ggat_forward.2} parent=31 // pred_region
          %s304 = smul.u32 16, %s23
          %p305 = scmp.lt.s32.totalorder %s304, 31
          %s306 = scalar_select %p305, %s304, 31
          %s307 = smul.addr %s306, 8
          %s308 = scalar_lea.vmem %s0, %s307
          %s309 = smul.u32 16, %s23
        $region36: #{ggat_forward.2} parent=31 // pred_fallthru
          _
        // Predicated region
        $region37: #{ggat_forward.2} parent=31 // pred_check
          %p310 = pneg %p74
        $region38: #{ggat_forward.2} parent=31 // pred_check_branch
          %312 = sbr.rel (%p310) target = $region40
        $region39: #{ggat_forward.2} parent=31 // pred_region
          %s313 = smul.u32 16, %s24
          %p314 = scmp.lt.s32.totalorder %s313, 31
          %s315 = scalar_select %p314, %s313, 31
          %s316 = smul.addr %s315, 8
          %s317 = scalar_lea.vmem %s1, %s316
          %s318 = smul.u32 16, %s24
        $region40: #{ggat_forward.2} parent=31 // pred_fallthru
          _
        // Predicated region
        $region41: #{ggat_forward.2} parent=31 // pred_check
          %p319 = pneg %p102
        $region42: #{ggat_forward.2} parent=31 // pred_check_branch
          %321 = sbr.rel (%p319) target = $region44
        $region43: #{ggat_forward.2} parent=31 // pred_region
          %s322 = sand.u32 %s92, 1
          %s323 = sand.u32 %s92, 1
          %s324 = smul.addr %s323, 128
          %s325 = scalar_lea.vmem [#allocation3], %s324
          %s326 = smul.u32 16, %s23
          %s327 = smul.addr %s326, 2
          %s328 = sadd.s32 %s24, %s327
          %s329 = smul.addr %s328, 8
          %s330 = scalar_lea.vmem %s2, %s329
          // Predicated region
          $region45: #{ggat_forward.2} parent=43 // pred_check
            _
          $region46: #{ggat_forward.2} parent=43 // pred_check_branch
            %332 = sbr.rel (0) target = $region48
          $region47: #{ggat_forward.2} parent=43 // pred_region
            // Predicated region
            $region49: #{ggat_forward.2} parent=47 // pred_check
              _
            $region50: #{ggat_forward.2} parent=47 // pred_check_branch
              %334 = sbr.rel (0) target = $region52
            $region51: #{ggat_forward.2} parent=47 // pred_region
              // Predicated region
              $region64: #{ggat_forward.2} parent=51 // pred_check
                _
              $region65: #{ggat_forward.2} parent=51 // pred_check_branch
                %380 = sbr.rel (0) target = $region67
              $region66: #{ggat_forward.2} parent=51 // pred_region
                loop: start=0, step=1, limit=1
                $region68: #{ggat_forward.2} parent=66 // loop_pre_header
                  _
                $region69: #{ggat_forward.2} parent=66 // loop_header
                  %s382 = sphi 0, %s386
                  %p383 = scmp.ge.s32.totalorder %s382, 1
                  %s387 = sphi %s330, %s330
                  %s388 = sphi %s325, %s325
                $region70: #{ggat_forward.2} parent=66 // loop_header_branch
                  %385 = sbr.rel (%p383) target = $region74
                $region71: #{ggat_forward.2} parent=66 // loop_body
                  %v389 = vld [vmem:[%s387] sm:$0xff]
                  %390 = vst [vmem:[%s388] sm:$0xff] %v389
                  %v391 = vld [vmem:[%s387 + $0x10] sm:$0xff]
                  %392 = vst [vmem:[%s388 + $0x8] sm:$0xff] %v391
                  %v393 = vld [vmem:[%s387 + $0x20] sm:$0xff]
                  %394 = vst [vmem:[%s388 + $0x10] sm:$0xff] %v393
                  %v395 = vld [vmem:[%s387 + $0x30] sm:$0xff]
                  %396 = vst [vmem:[%s388 + $0x18] sm:$0xff] %v395
                  %v397 = vld [vmem:[%s387 + $0x40] sm:$0xff]
                  %398 = vst [vmem:[%s388 + $0x20] sm:$0xff] %v397
                  %v399 = vld [vmem:[%s387 + $0x50] sm:$0xff]
                  %400 = vst [vmem:[%s388 + $0x28] sm:$0xff] %v399
                  %v401 = vld [vmem:[%s387 + $0x60] sm:$0xff]
                  %402 = vst [vmem:[%s388 + $0x30] sm:$0xff] %v401
                  %v403 = vld [vmem:[%s387 + $0x70] sm:$0xff]
                  %404 = vst [vmem:[%s388 + $0x38] sm:$0xff] %v403
                  %v405 = vld [vmem:[%s387 + $0x80] sm:$0xff]
                  %406 = vst [vmem:[%s388 + $0x40] sm:$0xff] %v405
                  %v407 = vld [vmem:[%s387 + $0x90] sm:$0xff]
                  %408 = vst [vmem:[%s388 + $0x48] sm:$0xff] %v407
                  %v409 = vld [vmem:[%s387 + $0xa0] sm:$0xff]
                  %410 = vst [vmem:[%s388 + $0x50] sm:$0xff] %v409
                  %v411 = vld [vmem:[%s387 + $0xb0] sm:$0xff]
                  %412 = vst [vmem:[%s388 + $0x58] sm:$0xff] %v411
                  %v413 = vld [vmem:[%s387 + $0xc0] sm:$0xff]
                  %414 = vst [vmem:[%s388 + $0x60] sm:$0xff] %v413
                  %v415 = vld [vmem:[%s387 + $0xd0] sm:$0xff]
                  %416 = vst [vmem:[%s388 + $0x68] sm:$0xff] %v415
                  %v417 = vld [vmem:[%s387 + $0xe0] sm:$0xff]
                  %418 = vst [vmem:[%s388 + $0x70] sm:$0xff] %v417
                  %v419 = vld [vmem:[%s387 + $0xf0] sm:$0xff]
                  %420 = vst [vmem:[%s388 + $0x78] sm:$0xff] %v419
                $region72: #{ggat_forward.2} parent=66 // loop_footer
                  %s386 = sadd.s32 1, %s382
                $region73: #{ggat_forward.2} parent=66 // loop_footer_branch
                  %381 = sbr.rel target = $region69
                $region74: #{ggat_forward.2} parent=66 // loop_exit
                  _
              $region67: #{ggat_forward.2} parent=51 // pred_fallthru
                _
              // Predicated region
              $region75: #{ggat_forward.2} parent=51 // pred_check
                _
              $region76: #{ggat_forward.2} parent=51 // pred_check_branch
                %422 = sbr.rel target = $region78
              $region77: #{ggat_forward.2} parent=51 // pred_region
                _
              $region78: #{ggat_forward.2} parent=51 // pred_fallthru
                _
            $region52: #{ggat_forward.2} parent=47 // pred_fallthru
              _
            // Predicated region
            $region53: #{ggat_forward.2} parent=47 // pred_check
              _
            $region54: #{ggat_forward.2} parent=47 // pred_check_branch
              %336 = sbr.rel target = $region56
            $region55: #{ggat_forward.2} parent=47 // pred_region
              %s338 = ssub.s32 256, 1
              loop: start=0, step=1, limit=1
              $region57: #{ggat_forward.2} parent=55 // loop_pre_header
                _
              $region58: #{ggat_forward.2} parent=55 // loop_header
                %s340 = sphi 0, %s344
                %p341 = scmp.ge.s32.totalorder %s340, 1
                %s345 = sphi %s330, %s330
                %s346 = sphi %s325, %s325
              $region59: #{ggat_forward.2} parent=55 // loop_header_branch
                %343 = sbr.rel (%p341) target = $region63
              $region60: #{ggat_forward.2} parent=55 // loop_body
                %v347 = vld [vmem:[%s345] sm:%s338]
                %348 = vst [vmem:[%s346] sm:%s338] %v347
                %v349 = vld [vmem:[%s345 + $0x10] sm:%s338]
                %350 = vst [vmem:[%s346 + $0x8] sm:%s338] %v349
                %v351 = vld [vmem:[%s345 + $0x20] sm:%s338]
                %352 = vst [vmem:[%s346 + $0x10] sm:%s338] %v351
                %v353 = vld [vmem:[%s345 + $0x30] sm:%s338]
                %354 = vst [vmem:[%s346 + $0x18] sm:%s338] %v353
                %v355 = vld [vmem:[%s345 + $0x40] sm:%s338]
                %356 = vst [vmem:[%s346 + $0x20] sm:%s338] %v355
                %v357 = vld [vmem:[%s345 + $0x50] sm:%s338]
                %358 = vst [vmem:[%s346 + $0x28] sm:%s338] %v357
                %v359 = vld [vmem:[%s345 + $0x60] sm:%s338]
                %360 = vst [vmem:[%s346 + $0x30] sm:%s338] %v359
                %v361 = vld [vmem:[%s345 + $0x70] sm:%s338]
                %362 = vst [vmem:[%s346 + $0x38] sm:%s338] %v361
                %v363 = vld [vmem:[%s345 + $0x80] sm:%s338]
                %364 = vst [vmem:[%s346 + $0x40] sm:%s338] %v363
                %v365 = vld [vmem:[%s345 + $0x90] sm:%s338]
                %366 = vst [vmem:[%s346 + $0x48] sm:%s338] %v365
                %v367 = vld [vmem:[%s345 + $0xa0] sm:%s338]
                %368 = vst [vmem:[%s346 + $0x50] sm:%s338] %v367
                %v369 = vld [vmem:[%s345 + $0xb0] sm:%s338]
                %370 = vst [vmem:[%s346 + $0x58] sm:%s338] %v369
                %v371 = vld [vmem:[%s345 + $0xc0] sm:%s338]
                %372 = vst [vmem:[%s346 + $0x60] sm:%s338] %v371
                %v373 = vld [vmem:[%s345 + $0xd0] sm:%s338]
                %374 = vst [vmem:[%s346 + $0x68] sm:%s338] %v373
                %v375 = vld [vmem:[%s345 + $0xe0] sm:%s338]
                %376 = vst [vmem:[%s346 + $0x70] sm:%s338] %v375
                %v377 = vld [vmem:[%s345 + $0xf0] sm:%s338]
                %378 = vst [vmem:[%s346 + $0x78] sm:%s338] %v377
              $region61: #{ggat_forward.2} parent=55 // loop_footer
                %s344 = sadd.s32 1, %s340
              $region62: #{ggat_forward.2} parent=55 // loop_footer_branch
                %339 = sbr.rel target = $region58
              $region63: #{ggat_forward.2} parent=55 // loop_exit
                _
            $region56: #{ggat_forward.2} parent=47 // pred_fallthru
              _
          $region48: #{ggat_forward.2} parent=43 // pred_fallthru
            _
          %423 = vnop
        $region44: #{ggat_forward.2} parent=31 // pred_fallthru
          _
      $region32: #{ggat_forward.2} parent=5 // pred_fallthru
        _
      %p424 = scmp.le.s32.totalorder 1, %s16
      %p425 = scmp.lt.s32.totalorder %s16, 5
      %p426 = pnand %p424, %p425
      %p427 = pneg %p426
      // Predicated region
      $region79: #{ggat_forward.2} parent=5 // pred_check
        _
      $region80: #{ggat_forward.2} parent=5 // pred_check_branch
        %429 = sbr.rel (%p426) target = $region82
      $region81: #{ggat_forward.2} parent=5 // pred_region
        %s430 = ssub.s32 %s16, 1
        %s431 = sand.u32 %s95, 1
        %s432 = sand.u32 %s95, 1
        %s433 = smul.addr %s432, 128
        %s434 = scalar_lea.vmem [#allocation3], %s433
        // Predicated region
        $region83: #{ggat_forward.2} parent=81 // pred_check
          %p435 = pneg %p108
        $region84: #{ggat_forward.2} parent=81 // pred_check_branch
          %437 = sbr.rel (%p435) target = $region86
        $region85: #{ggat_forward.2} parent=81 // pred_region
          _
        $region86: #{ggat_forward.2} parent=81 // pred_fallthru
          _
        %s438 = smul.u32 16, %s25
        %p439 = scmp.lt.s32.totalorder %s438, 31
        %s440 = scalar_select %p439, %s438, 31
        %s441 = smul.addr %s440, 8
        %s442 = scalar_lea.vmem %s0, %s441
        %p443 = pneg %p54
        %p444 = pneg %p51
        %s445 = smul.u32 16, %s26
        %p446 = scmp.lt.s32.totalorder %s445, 31
        %s447 = scalar_select %p446, %s445, 31
        %s448 = smul.addr %s447, 8
        %s449 = scalar_lea.vmem %s1, %s448
        %p450 = pneg %p80
        %p451 = pneg %p77
        %s452 = sand.u32 %s95, 1
        %s453 = sand.u32 %s95, 1
        %s454 = smul.addr %s453, 128
        %s455 = scalar_lea.vmem [#allocation3], %s454
        %p456 = pneg %p108
        %p457 = pneg %p105
        %p458 = pneg %p129
        %p459 = pneg %p126
        %p460 = pneg %p150
        %p461 = pneg %p147
        %p462 = pneg %p171
        %p463 = pneg %p168
        %p464 = pneg %p192
        %p465 = pneg %p189
        %p466 = pneg %p218
        %p467 = pneg %p215
        %s468 = smul.u32 16, %s25
        %p469 = scmp.lt.s32.totalorder %s468, 31
        %s470 = scalar_select %p469, %s468, 31
        %s471 = smul.addr %s470, 8
        %s472 = scalar_lea.vmem %s7, %s471
        %p473 = pneg %p244
        %p474 = pneg %p241
        %s475 = smul.u32 16, %s25
        %p476 = scmp.lt.s32.totalorder %s475, 31
        %s477 = scalar_select %p476, %s475, 31
        %s478 = smul.addr %s477, 2
        %s479 = smul.addr %s478, 8
        %s480 = scalar_lea.vmem %s8, %s479
        %p481 = pneg %p270
        %p482 = pneg %p267
        %s483 = smul.u32 16, %s25
        %p484 = scmp.lt.s32.totalorder %s483, 31
        %s485 = scalar_select %p484, %s483, 31
        %s486 = smul.addr %s485, 4
        %s487 = smul.addr %s486, 8
        %s488 = scalar_lea.vmem %s9, %s487
        %s489 = smul.u32 16, %s25
        %p490 = scmp.lt.s32.totalorder %s489, 31
        %s491 = scalar_select %p490, %s489, 31
        %s492 = smul.addr %s491, 8
        %s493 = scalar_lea.vmem %s0, %s492
        %s494 = smul.u32 16, %s25
        %s495 = smul.u32 16, %s26
        %p496 = scmp.lt.s32.totalorder %s495, 31
        %s497 = scalar_select %p496, %s495, 31
        %s498 = smul.addr %s497, 8
        %s499 = scalar_lea.vmem %s1, %s498
        %s500 = smul.u32 16, %s26
        %s501 = smul.u32 16, %s25
        %s502 = smul.u32 16, %s25
        %p503 = scmp.lt.s32.totalorder %s502, 31
        %s504 = scalar_select %p503, %s502, 31
        %s505 = smul.addr %s504, 8
        %s506 = scalar_lea.vmem %s7, %s505
        %s507 = smul.u32 16, %s25
        %s508 = smul.u32 16, %s25
        %p509 = scmp.lt.s32.totalorder %s508, 31
        %s510 = scalar_select %p509, %s508, 31
        %s511 = smul.addr %s510, 2
        %s512 = smul.addr %s511, 8
        %s513 = scalar_lea.vmem %s8, %s512
        %s514 = smul.u32 16, %s25
        %s515 = smul.u32 16, %s25
        %p516 = scmp.lt.s32.totalorder %s515, 31
        %s517 = scalar_select %p516, %s515, 31
        %s518 = smul.addr %s517, 4
        %s519 = smul.addr %s518, 8
        %s520 = scalar_lea.vmem %s9, %s519
        %s521 = smul.u32 16, %s25
        %p522 = scmp.eq.s32.totalorder %s26, 0
        // Predicated region
        $region87: #{ggat_forward.2} parent=81 // pred_check
          %p523 = pneg %p522
        $region88: #{ggat_forward.2} parent=81 // pred_check_branch
          %525 = sbr.rel (%p523) target = $region90
        $region89: #{ggat_forward.2} parent=81 // pred_region
          %v526 = vld [vmem:[%s493] sm:$0xff]
          %v527 = vld [vmem:[%s493 + $0x8] sm:$0xff]
          %v528 = vld [vmem:[%s493 + $0x10] sm:$0xff]
          %v529 = vld [vmem:[%s493 + $0x18] sm:$0xff]
          %v530 = vld [vmem:[%s493 + $0x20] sm:$0xff]
          %v531 = vld [vmem:[%s493 + $0x28] sm:$0xff]
          %v532 = vld [vmem:[%s493 + $0x30] sm:$0xff]
          %v533 = vld [vmem:[%s493 + $0x38] sm:$0xff]
          %v534 = vld [vmem:[%s493 + $0x40] sm:$0xff]
          %v535 = vld [vmem:[%s493 + $0x48] sm:$0xff]
          %v536 = vld [vmem:[%s493 + $0x50] sm:$0xff]
          %v537 = vld [vmem:[%s493 + $0x58] sm:$0xff]
          %v538 = vld [vmem:[%s493 + $0x60] sm:$0xff]
          %v539 = vld [vmem:[%s493 + $0x68] sm:$0xff]
          %v540 = vld [vmem:[%s493 + $0x70] sm:$0xff]
          %v541 = vld [vmem:[%s493 + $0x78] sm:$0xff]
          %v542 = vld [vmem:[%s3] sm:$0xff]
          %v543 = vld [vmem:[%s3 + $0x8] sm:$0xff]
          %v544 = vld [vmem:[%s3 + $0x10] sm:$0xff]
          %v545 = vld [vmem:[%s3 + $0x18] sm:$0xff]
          %v546 = vld [vmem:[%s3 + $0x20] sm:$0xff]
          %v547 = vld [vmem:[%s3 + $0x28] sm:$0xff]
          %v548 = vld [vmem:[%s3 + $0x30] sm:$0xff]
          %v549 = vld [vmem:[%s3 + $0x38] sm:$0xff]
          %v550 = vld [vmem:[%s3 + $0x40] sm:$0xff]
          %v551 = vld [vmem:[%s3 + $0x48] sm:$0xff]
          %v552 = vld [vmem:[%s3 + $0x50] sm:$0xff]
          %v553 = vld [vmem:[%s3 + $0x58] sm:$0xff]
          %v554 = vld [vmem:[%s3 + $0x60] sm:$0xff]
          %v555 = vld [vmem:[%s3 + $0x68] sm:$0xff]
          %v556 = vld [vmem:[%s3 + $0x70] sm:$0xff]
          %v557 = vld [vmem:[%s3 + $0x78] sm:$0xff]
          %v558 = vld [vmem:[%s3 + $0x80] sm:$0xff]
          %v559 = vld [vmem:[%s3 + $0x88] sm:$0xff]
          %v560 = vld [vmem:[%s3 + $0x90] sm:$0xff]
          %v561 = vld [vmem:[%s3 + $0x98] sm:$0xff]
          %v562 = vld [vmem:[%s3 + $0xa0] sm:$0xff]
          %v563 = vld [vmem:[%s3 + $0xa8] sm:$0xff]
          %v564 = vld [vmem:[%s3 + $0xb0] sm:$0xff]
          %v565 = vld [vmem:[%s3 + $0xb8] sm:$0xff]
          %v566 = vld [vmem:[%s3 + $0xc0] sm:$0xff]
          %v567 = vld [vmem:[%s3 + $0xc8] sm:$0xff]
          %v568 = vld [vmem:[%s3 + $0xd0] sm:$0xff]
          %v569 = vld [vmem:[%s3 + $0xd8] sm:$0xff]
          %v570 = vld [vmem:[%s3 + $0xe0] sm:$0xff]
          %v571 = vld [vmem:[%s3 + $0xe8] sm:$0xff]
          %v572 = vld [vmem:[%s3 + $0xf0] sm:$0xff]
          %v573 = vld [vmem:[%s3 + $0xf8] sm:$0xff]
          %v574 = vld [vmem:[%s3 + $0x100] sm:$0xff]
          %v575 = vld [vmem:[%s3 + $0x108] sm:$0xff]
          %v576 = vld [vmem:[%s3 + $0x110] sm:$0xff]
          %v577 = vld [vmem:[%s3 + $0x118] sm:$0xff]
          %v578 = vld [vmem:[%s3 + $0x120] sm:$0xff]
          %v579 = vld [vmem:[%s3 + $0x128] sm:$0xff]
          %v580 = vld [vmem:[%s3 + $0x130] sm:$0xff]
          %v581 = vld [vmem:[%s3 + $0x138] sm:$0xff]
          %v582 = vld [vmem:[%s3 + $0x140] sm:$0xff]
          %v583 = vld [vmem:[%s3 + $0x148] sm:$0xff]
          %v584 = vld [vmem:[%s3 + $0x150] sm:$0xff]
          %v585 = vld [vmem:[%s3 + $0x158] sm:$0xff]
          %v586 = vld [vmem:[%s3 + $0x160] sm:$0xff]
          %v587 = vld [vmem:[%s3 + $0x168] sm:$0xff]
          %v588 = vld [vmem:[%s3 + $0x170] sm:$0xff]
          %v589 = vld [vmem:[%s3 + $0x178] sm:$0xff]
          %590 = vmatprep.subr.mxu0 %v588
          %591 = vmatpush1.msra.mxu0 %v587
          %592 = vmatprep.subr.mxu0 %v585
          %593 = vmatpush1.msra.mxu0 %v584
          %594 = vmatprep.subr.mxu0 %v582
          %595 = vmatpush1.msra.mxu0 %v581
          %596 = vmatprep.subr.mxu0 %v579
          %597 = vmatpush1.msra.mxu0 %v578
          %598 = vmatprep.subr.mxu0 %v576
          %599 = vmatpush1.msra.mxu0 %v575
          %600 = vmatprep.subr.mxu0 %v573
          %601 = vmatpush1.msra.mxu0 %v572
          %602 = vmatprep.subr.mxu0 %v570
          %603 = vmatpush1.msra.mxu0 %v569
          %604 = vmatprep.subr.mxu0 %v567
          %605 = vmatpush1.msra.mxu0 %v566
          %606 = vmatprep.subr.mxu0 %v564
          %607 = vmatpush1.msra.mxu0 %v563
          %608 = vmatprep.subr.mxu0 %v561
          %609 = vmatpush1.msra.mxu0 %v560
          %610 = vmatprep.subr.mxu0 %v558
          %611 = vmatpush1.msra.mxu0 %v557
          %612 = vmatprep.subr.mxu0 %v555
          %613 = vmatpush1.msra.mxu0 %v554
          %614 = vmatprep.subr.mxu0 %v552
          %615 = vmatpush1.msra.mxu0 %v551
          %616 = vmatprep.subr.mxu0 %v549
          %617 = vmatpush1.msra.mxu0 %v548
          %618 = vmatprep.subr.mxu0 %v546
          %619 = vmatpush1.msra.mxu0 %v545
          %620 = vmatprep.subr.mxu0 %v543
          %621 = vmatpush1.msra.mxu0 %v542
          %622 = vmatprep.subr.mxu0 0.0
          %623 = vmatpush2.msra.mxu0 0.0
          %624 = vmatprep.subr.mxu0 0.0
          %625 = vmatpush2.msra.mxu0 0.0
          %626 = vmatprep.subr.mxu0 0.0
          %627 = vmatpush2.msra.mxu0 0.0
          %628 = vmatprep.subr.mxu0 0.0
          %629 = vmatpush2.msra.mxu0 0.0
          %630 = vmatprep.subr.mxu0 0.0
          %631 = vmatpush2.msra.mxu0 0.0
          %632 = vmatprep.subr.mxu0 0.0
          %633 = vmatpush2.msra.mxu0 0.0
          %634 = vmatprep.subr.mxu0 0.0
          %635 = vmatpush2.msra.mxu0 0.0
          %636 = vmatprep.subr.mxu0 0.0
          %637 = vmatpush2.msra.mxu0 0.0
          %638 = vmatprep.subr.mxu0 0.0
          %639 = vmatpush2.msra.mxu0 0.0
          %640 = vmatprep.subr.mxu0 0.0
          %641 = vmatpush2.msra.mxu0 0.0
          %642 = vmatprep.subr.mxu0 0.0
          %643 = vmatpush2.msra.mxu0 0.0
          %644 = vmatprep.subr.mxu0 0.0
          %645 = vmatpush2.msra.mxu0 0.0
          %646 = vmatprep.subr.mxu0 0.0
          %647 = vmatpush2.msra.mxu0 0.0
          %648 = vmatprep.subr.mxu0 0.0
          %649 = vmatpush2.msra.mxu0 0.0
          %650 = vmatprep.subr.mxu0 0.0
          %651 = vmatpush2.msra.mxu0 0.0
          %652 = vmatprep.subr.mxu0 0.0
          %653 = vmatpush2.msra.mxu0 0.0
          %654 = vmatprep.mubr.f32.mxu0 0.0
          %655 = vmatmul.mubr.f32.gmra.mxu0 %v526
          %v656 = vpop.f32.mrf.mxu0
          %v657 = vadd.f32 0.0, %v656
          %v658 = vpop.f32.mrf.mxu0
          %v659 = vadd.f32 0.0, %v658
          %660 = vmatprep.mubr.f32.mxu0 0.0
          %661 = vmatmul.mubr.f32.gmra.mxu0 %v527
          %v662 = vpop.f32.mrf.mxu0
          %v663 = vadd.f32 0.0, %v662
          %v664 = vpop.f32.mrf.mxu0
          %v665 = vadd.f32 0.0, %v664
          %666 = vmatprep.mubr.f32.mxu0 0.0
          %667 = vmatmul.mubr.f32.gmra.mxu0 %v528
          %v668 = vpop.f32.mrf.mxu0
          %v669 = vadd.f32 0.0, %v668
          %v670 = vpop.f32.mrf.mxu0
          %v671 = vadd.f32 0.0, %v670
          %672 = vmatprep.mubr.f32.mxu0 0.0
          %673 = vmatmul.mubr.f32.gmra.mxu0 %v529
          %v674 = vpop.f32.mrf.mxu0
          %v675 = vadd.f32 0.0, %v674
          %v676 = vpop.f32.mrf.mxu0
          %v677 = vadd.f32 0.0, %v676
          %678 = vmatprep.mubr.f32.mxu0 0.0
          %679 = vmatmul.mubr.f32.gmra.mxu0 %v530
          %v680 = vpop.f32.mrf.mxu0
          %v681 = vadd.f32 0.0, %v680
          %v682 = vpop.f32.mrf.mxu0
          %v683 = vadd.f32 0.0, %v682
          %684 = vmatprep.mubr.f32.mxu0 0.0
          %685 = vmatmul.mubr.f32.gmra.mxu0 %v531
          %v686 = vpop.f32.mrf.mxu0
          %v687 = vadd.f32 0.0, %v686
          %v688 = vpop.f32.mrf.mxu0
          %v689 = vadd.f32 0.0, %v688
          %690 = vmatprep.mubr.f32.mxu0 0.0
          %691 = vmatmul.mubr.f32.gmra.mxu0 %v532
          %v692 = vpop.f32.mrf.mxu0
          %v693 = vadd.f32 0.0, %v692
          %v694 = vpop.f32.mrf.mxu0
          %v695 = vadd.f32 0.0, %v694
          %696 = vmatprep.mubr.f32.mxu0 0.0
          %697 = vmatmul.mubr.f32.gmra.mxu0 %v533
          %v698 = vpop.f32.mrf.mxu0
          %v699 = vadd.f32 0.0, %v698
          %v700 = vpop.f32.mrf.mxu0
          %v701 = vadd.f32 0.0, %v700
          %702 = vmatprep.mubr.f32.mxu0 0.0
          %703 = vmatmul.mubr.f32.gmra.mxu0 %v534
          %v704 = vpop.f32.mrf.mxu0
          %v705 = vadd.f32 0.0, %v704
          %v706 = vpop.f32.mrf.mxu0
          %v707 = vadd.f32 0.0, %v706
          %708 = vmatprep.mubr.f32.mxu0 0.0
          %709 = vmatmul.mubr.f32.gmra.mxu0 %v535
          %v710 = vpop.f32.mrf.mxu0
          %v711 = vadd.f32 0.0, %v710
          %v712 = vpop.f32.mrf.mxu0
          %v713 = vadd.f32 0.0, %v712
          %714 = vmatprep.mubr.f32.mxu0 0.0
          %715 = vmatmul.mubr.f32.gmra.mxu0 %v536
          %v716 = vpop.f32.mrf.mxu0
          %v717 = vadd.f32 0.0, %v716
          %v718 = vpop.f32.mrf.mxu0
          %v719 = vadd.f32 0.0, %v718
          %720 = vmatprep.mubr.f32.mxu0 0.0
          %721 = vmatmul.mubr.f32.gmra.mxu0 %v537
          %v722 = vpop.f32.mrf.mxu0
          %v723 = vadd.f32 0.0, %v722
          %v724 = vpop.f32.mrf.mxu0
          %v725 = vadd.f32 0.0, %v724
          %726 = vmatprep.mubr.f32.mxu0 0.0
          %727 = vmatmul.mubr.f32.gmra.mxu0 %v538
          %v728 = vpop.f32.mrf.mxu0
          %v729 = vadd.f32 0.0, %v728
          %v730 = vpop.f32.mrf.mxu0
          %v731 = vadd.f32 0.0, %v730
          %732 = vmatprep.mubr.f32.mxu0 0.0
          %733 = vmatmul.mubr.f32.gmra.mxu0 %v539
          %v734 = vpop.f32.mrf.mxu0
          %v735 = vadd.f32 0.0, %v734
          %v736 = vpop.f32.mrf.mxu0
          %v737 = vadd.f32 0.0, %v736
          %738 = vmatprep.mubr.f32.mxu0 0.0
          %739 = vmatmul.mubr.f32.gmra.mxu0 %v540
          %v740 = vpop.f32.mrf.mxu0
          %v741 = vadd.f32 0.0, %v740
          %v742 = vpop.f32.mrf.mxu0
          %v743 = vadd.f32 0.0, %v742
          %744 = vmatprep.mubr.f32.mxu0 0.0
          %745 = vmatmul.mubr.f32.gmra.mxu0 %v541
          %v746 = vpop.f32.mrf.mxu0
          %v747 = vadd.f32 0.0, %v746
          %v748 = vpop.f32.mrf.mxu0
          %v749 = vadd.f32 0.0, %v748
          %750 = vdwg.mxu0
          %751 = vmatprep.subr.mxu0 0.0
          %752 = vmatpush1.msra.mxu0 %v589
          %753 = vmatprep.subr.mxu0 0.0
          %754 = vmatpush1.msra.mxu0 %v586
          %755 = vmatprep.subr.mxu0 0.0
          %756 = vmatpush1.msra.mxu0 %v583
          %757 = vmatprep.subr.mxu0 0.0
          %758 = vmatpush1.msra.mxu0 %v580
          %759 = vmatprep.subr.mxu0 0.0
          %760 = vmatpush1.msra.mxu0 %v577
          %761 = vmatprep.subr.mxu0 0.0
          %762 = vmatpush1.msra.mxu0 %v574
          %763 = vmatprep.subr.mxu0 0.0
          %764 = vmatpush1.msra.mxu0 %v571
          %765 = vmatprep.subr.mxu0 0.0
          %766 = vmatpush1.msra.mxu0 %v568
          %767 = vmatprep.subr.mxu0 0.0
          %768 = vmatpush1.msra.mxu0 %v565
          %769 = vmatprep.subr.mxu0 0.0
          %770 = vmatpush1.msra.mxu0 %v562
          %771 = vmatprep.subr.mxu0 0.0
          %772 = vmatpush1.msra.mxu0 %v559
          %773 = vmatprep.subr.mxu0 0.0
          %774 = vmatpush1.msra.mxu0 %v556
          %775 = vmatprep.subr.mxu0 0.0
          %776 = vmatpush1.msra.mxu0 %v553
          %777 = vmatprep.subr.mxu0 0.0
          %778 = vmatpush1.msra.mxu0 %v550
          %779 = vmatprep.subr.mxu0 0.0
          %780 = vmatpush1.msra.mxu0 %v547
          %781 = vmatprep.subr.mxu0 0.0
          %782 = vmatpush1.msra.mxu0 %v544
          %783 = vmatprep.subr.mxu0 0.0
          %784 = vmatpush2.msra.mxu0 0.0
          %785 = vmatprep.subr.mxu0 0.0
          %786 = vmatpush2.msra.mxu0 0.0
          %787 = vmatprep.subr.mxu0 0.0
          %788 = vmatpush2.msra.mxu0 0.0
          %789 = vmatprep.subr.mxu0 0.0
          %790 = vmatpush2.msra.mxu0 0.0
          %791 = vmatprep.subr.mxu0 0.0
          %792 = vmatpush2.msra.mxu0 0.0
          %793 = vmatprep.subr.mxu0 0.0
          %794 = vmatpush2.msra.mxu0 0.0
          %795 = vmatprep.subr.mxu0 0.0
          %796 = vmatpush2.msra.mxu0 0.0
          %797 = vmatprep.subr.mxu0 0.0
          %798 = vmatpush2.msra.mxu0 0.0
          %799 = vmatprep.subr.mxu0 0.0
          %800 = vmatpush2.msra.mxu0 0.0
          %801 = vmatprep.subr.mxu0 0.0
          %802 = vmatpush2.msra.mxu0 0.0
          %803 = vmatprep.subr.mxu0 0.0
          %804 = vmatpush2.msra.mxu0 0.0
          %805 = vmatprep.subr.mxu0 0.0
          %806 = vmatpush2.msra.mxu0 0.0
          %807 = vmatprep.subr.mxu0 0.0
          %808 = vmatpush2.msra.mxu0 0.0
          %809 = vmatprep.subr.mxu0 0.0
          %810 = vmatpush2.msra.mxu0 0.0
          %811 = vmatprep.subr.mxu0 0.0
          %812 = vmatpush2.msra.mxu0 0.0
          %813 = vmatprep.subr.mxu0 0.0
          %814 = vmatpush2.msra.mxu0 0.0
          %815 = vmatprep.mubr.f32.mxu0 0.0
          %816 = vmatmul.mubr.f32.gmra.mxu0 %v526
          %v817 = vpop.f32.mrf.mxu0
          %v818 = vadd.f32 0.0, %v817
          %v819 = vpop.f32.mrf.mxu0
          %820 = vmatprep.mubr.f32.mxu0 0.0
          %821 = vmatmul.mubr.f32.gmra.mxu0 %v527
          %v822 = vpop.f32.mrf.mxu0
          %v823 = vadd.f32 0.0, %v822
          %v824 = vpop.f32.mrf.mxu0
          %825 = vmatprep.mubr.f32.mxu0 0.0
          %826 = vmatmul.mubr.f32.gmra.mxu0 %v528
          %v827 = vpop.f32.mrf.mxu0
          %v828 = vadd.f32 0.0, %v827
          %v829 = vpop.f32.mrf.mxu0
          %830 = vmatprep.mubr.f32.mxu0 0.0
          %831 = vmatmul.mubr.f32.gmra.mxu0 %v529
          %v832 = vpop.f32.mrf.mxu0
          %v833 = vadd.f32 0.0, %v832
          %v834 = vpop.f32.mrf.mxu0
          %835 = vmatprep.mubr.f32.mxu0 0.0
          %836 = vmatmul.mubr.f32.gmra.mxu0 %v530
          %v837 = vpop.f32.mrf.mxu0
          %v838 = vadd.f32 0.0, %v837
          %v839 = vpop.f32.mrf.mxu0
          %840 = vmatprep.mubr.f32.mxu0 0.0
          %841 = vmatmul.mubr.f32.gmra.mxu0 %v531
          %v842 = vpop.f32.mrf.mxu0
          %v843 = vadd.f32 0.0, %v842
          %v844 = vpop.f32.mrf.mxu0
          %845 = vmatprep.mubr.f32.mxu0 0.0
          %846 = vmatmul.mubr.f32.gmra.mxu0 %v532
          %v847 = vpop.f32.mrf.mxu0
          %v848 = vadd.f32 0.0, %v847
          %v849 = vpop.f32.mrf.mxu0
          %850 = vmatprep.mubr.f32.mxu0 0.0
          %851 = vmatmul.mubr.f32.gmra.mxu0 %v533
          %v852 = vpop.f32.mrf.mxu0
          %v853 = vadd.f32 0.0, %v852
          %v854 = vpop.f32.mrf.mxu0
          %855 = vmatprep.mubr.f32.mxu0 0.0
          %856 = vmatmul.mubr.f32.gmra.mxu0 %v534
          %v857 = vpop.f32.mrf.mxu0
          %v858 = vadd.f32 0.0, %v857
          %v859 = vpop.f32.mrf.mxu0
          %860 = vmatprep.mubr.f32.mxu0 0.0
          %861 = vmatmul.mubr.f32.gmra.mxu0 %v535
          %v862 = vpop.f32.mrf.mxu0
          %v863 = vadd.f32 0.0, %v862
          %v864 = vpop.f32.mrf.mxu0
          %865 = vmatprep.mubr.f32.mxu0 0.0
          %866 = vmatmul.mubr.f32.gmra.mxu0 %v536
          %v867 = vpop.f32.mrf.mxu0
          %v868 = vadd.f32 0.0, %v867
          %v869 = vpop.f32.mrf.mxu0
          %870 = vmatprep.mubr.f32.mxu0 0.0
          %871 = vmatmul.mubr.f32.gmra.mxu0 %v537
          %v872 = vpop.f32.mrf.mxu0
          %v873 = vadd.f32 0.0, %v872
          %v874 = vpop.f32.mrf.mxu0
          %875 = vmatprep.mubr.f32.mxu0 0.0
          %876 = vmatmul.mubr.f32.gmra.mxu0 %v538
          %v877 = vpop.f32.mrf.mxu0
          %v878 = vadd.f32 0.0, %v877
          %v879 = vpop.f32.mrf.mxu0
          %880 = vmatprep.mubr.f32.mxu0 0.0
          %881 = vmatmul.mubr.f32.gmra.mxu0 %v539
          %v882 = vpop.f32.mrf.mxu0
          %v883 = vadd.f32 0.0, %v882
          %v884 = vpop.f32.mrf.mxu0
          %885 = vmatprep.mubr.f32.mxu0 0.0
          %886 = vmatmul.mubr.f32.gmra.mxu0 %v540
          %v887 = vpop.f32.mrf.mxu0
          %v888 = vadd.f32 0.0, %v887
          %v889 = vpop.f32.mrf.mxu0
          %890 = vmatprep.mubr.f32.mxu0 0.0
          %891 = vmatmul.mubr.f32.gmra.mxu0 %v541
          %v892 = vpop.f32.mrf.mxu0
          %v893 = vadd.f32 0.0, %v892
          %v894 = vpop.f32.mrf.mxu0
          %895 = vdwg.mxu0
          %v896 = vmul.f32 %v657, %v657
          %v897 = vmul.f32 %v663, %v663
          %v898 = vmul.f32 %v669, %v669
          %v899 = vmul.f32 %v675, %v675
          %v900 = vmul.f32 %v681, %v681
          %v901 = vmul.f32 %v687, %v687
          %v902 = vmul.f32 %v693, %v693
          %v903 = vmul.f32 %v699, %v699
          %v904 = vmul.f32 %v705, %v705
          %v905 = vmul.f32 %v711, %v711
          %v906 = vmul.f32 %v717, %v717
          %v907 = vmul.f32 %v723, %v723
          %v908 = vmul.f32 %v729, %v729
          %v909 = vmul.f32 %v735, %v735
          %v910 = vmul.f32 %v741, %v741
          %v911 = vmul.f32 %v747, %v747
          %912 = vadd.xlane.f32.xlu0 %v896
          %v913 = vpop.xlane.xlu0 %912
          %914 = vadd.xlane.f32.xlu0 %v897
          %v915 = vpop.xlane.xlu0 %914
          %916 = vadd.xlane.f32.xlu0 %v898
          %v917 = vpop.xlane.xlu0 %916
          %918 = vadd.xlane.f32.xlu0 %v899
          %v919 = vpop.xlane.xlu0 %918
          %920 = vadd.xlane.f32.xlu0 %v900
          %v921 = vpop.xlane.xlu0 %920
          %922 = vadd.xlane.f32.xlu0 %v901
          %v923 = vpop.xlane.xlu0 %922
          %924 = vadd.xlane.f32.xlu0 %v902
          %v925 = vpop.xlane.xlu0 %924
          %926 = vadd.xlane.f32.xlu0 %v903
          %v927 = vpop.xlane.xlu0 %926
          %928 = vadd.xlane.f32.xlu0 %v904
          %v929 = vpop.xlane.xlu0 %928
          %930 = vadd.xlane.f32.xlu0 %v905
          %v931 = vpop.xlane.xlu0 %930
          %932 = vadd.xlane.f32.xlu0 %v906
          %v933 = vpop.xlane.xlu0 %932
          %934 = vadd.xlane.f32.xlu0 %v907
          %v935 = vpop.xlane.xlu0 %934
          %936 = vadd.xlane.f32.xlu0 %v908
          %v937 = vpop.xlane.xlu0 %936
          %938 = vadd.xlane.f32.xlu0 %v909
          %v939 = vpop.xlane.xlu0 %938
          %940 = vadd.xlane.f32.xlu0 %v910
          %v941 = vpop.xlane.xlu0 %940
          %942 = vadd.xlane.f32.xlu0 %v911
          %v943 = vpop.xlane.xlu0 %942
          %v944 = vmax.f32 %v913, 1e-24
          %v945 = vmax.f32 %v915, 1e-24
          %v946 = vmax.f32 %v917, 1e-24
          %v947 = vmax.f32 %v919, 1e-24
          %v948 = vmax.f32 %v921, 1e-24
          %v949 = vmax.f32 %v923, 1e-24
          %v950 = vmax.f32 %v925, 1e-24
          %v951 = vmax.f32 %v927, 1e-24
          %v952 = vmax.f32 %v929, 1e-24
          %v953 = vmax.f32 %v931, 1e-24
          %v954 = vmax.f32 %v933, 1e-24
          %v955 = vmax.f32 %v935, 1e-24
          %v956 = vmax.f32 %v937, 1e-24
          %v957 = vmax.f32 %v939, 1e-24
          %v958 = vmax.f32 %v941, 1e-24
          %v959 = vmax.f32 %v943, 1e-24
          %v960 = vrsqrt.pop %v944
          %v961 = vrsqrt.pop %v945
          %v962 = vrsqrt.pop %v946
          %v963 = vrsqrt.pop %v947
          %v964 = vrsqrt.pop %v948
          %v965 = vrsqrt.pop %v949
          %v966 = vrsqrt.pop %v950
          %v967 = vrsqrt.pop %v951
          %v968 = vrsqrt.pop %v952
          %v969 = vrsqrt.pop %v953
          %v970 = vrsqrt.pop %v954
          %v971 = vrsqrt.pop %v955
          %v972 = vrsqrt.pop %v956
          %v973 = vrsqrt.pop %v957
          %v974 = vrsqrt.pop %v958
          %v975 = vrsqrt.pop %v959
          %v976 = vmul.f32 %v657, %v960
          %v977 = vmul.f32 %v663, %v961
          %v978 = vmul.f32 %v669, %v962
          %v979 = vmul.f32 %v675, %v963
          %v980 = vmul.f32 %v681, %v964
          %v981 = vmul.f32 %v687, %v965
          %v982 = vmul.f32 %v693, %v966
          %v983 = vmul.f32 %v699, %v967
          %v984 = vmul.f32 %v705, %v968
          %v985 = vmul.f32 %v711, %v969
          %v986 = vmul.f32 %v717, %v970
          %v987 = vmul.f32 %v723, %v971
          %v988 = vmul.f32 %v729, %v972
          %v989 = vmul.f32 %v735, %v973
          %v990 = vmul.f32 %v741, %v974
          %v991 = vmul.f32 %v747, %v975
          %v992 = vmax.f32 %v976, 0.0
          %v993 = vmax.f32 %v977, 0.0
          %v994 = vmax.f32 %v978, 0.0
          %v995 = vmax.f32 %v979, 0.0
          %v996 = vmax.f32 %v980, 0.0
          %v997 = vmax.f32 %v981, 0.0
          %v998 = vmax.f32 %v982, 0.0
          %v999 = vmax.f32 %v983, 0.0
          %v1000 = vmax.f32 %v984, 0.0
          %v1001 = vmax.f32 %v985, 0.0
          %v1002 = vmax.f32 %v986, 0.0
          %v1003 = vmax.f32 %v987, 0.0
          %v1004 = vmax.f32 %v988, 0.0
          %v1005 = vmax.f32 %v989, 0.0
          %v1006 = vmax.f32 %v990, 0.0
          %v1007 = vmax.f32 %v991, 0.0
          %v1008 = vld [vmem:[%s4] sm:$0xff]
          %v1009 = vld [vmem:[%s4 + $0x8] sm:$0xff]
          %v1010 = vld [vmem:[%s4 + $0x10] sm:$0xff]
          %v1011 = vld [vmem:[%s4 + $0x18] sm:$0xff]
          %v1012 = vld [vmem:[%s4 + $0x20] sm:$0xff]
          %v1013 = vld [vmem:[%s4 + $0x28] sm:$0xff]
          %v1014 = vld [vmem:[%s4 + $0x30] sm:$0xff]
          %v1015 = vld [vmem:[%s4 + $0x38] sm:$0xff]
          %v1016 = vld [vmem:[%s4 + $0x40] sm:$0xff]
          %v1017 = vld [vmem:[%s4 + $0x48] sm:$0xff]
          %v1018 = vld [vmem:[%s4 + $0x50] sm:$0xff]
          %v1019 = vld [vmem:[%s4 + $0x58] sm:$0xff]
          %v1020 = vld [vmem:[%s4 + $0x60] sm:$0xff]
          %v1021 = vld [vmem:[%s4 + $0x68] sm:$0xff]
          %v1022 = vld [vmem:[%s4 + $0x70] sm:$0xff]
          %v1023 = vld [vmem:[%s4 + $0x78] sm:$0xff]
          %1024 = vmatprep.subr.mxu0 0.0
          %1025 = vmatpush1.msra.mxu0 %v1023
          %1026 = vmatprep.subr.mxu0 0.0
          %1027 = vmatpush1.msra.mxu0 %v1022
          %1028 = vmatprep.subr.mxu0 0.0
          %1029 = vmatpush1.msra.mxu0 %v1021
          %1030 = vmatprep.subr.mxu0 0.0
          %1031 = vmatpush1.msra.mxu0 %v1020
          %1032 = vmatprep.subr.mxu0 0.0
          %1033 = vmatpush1.msra.mxu0 %v1019
          %1034 = vmatprep.subr.mxu0 0.0
          %1035 = vmatpush1.msra.mxu0 %v1018
          %1036 = vmatprep.subr.mxu0 0.0
          %1037 = vmatpush1.msra.mxu0 %v1017
          %1038 = vmatprep.subr.mxu0 0.0
          %1039 = vmatpush1.msra.mxu0 %v1016
          %1040 = vmatprep.subr.mxu0 0.0
          %1041 = vmatpush1.msra.mxu0 %v1015
          %1042 = vmatprep.subr.mxu0 0.0
          %1043 = vmatpush1.msra.mxu0 %v1014
          %1044 = vmatprep.subr.mxu0 0.0
          %1045 = vmatpush1.msra.mxu0 %v1013
          %1046 = vmatprep.subr.mxu0 0.0
          %1047 = vmatpush1.msra.mxu0 %v1012
          %1048 = vmatprep.subr.mxu0 0.0
          %1049 = vmatpush1.msra.mxu0 %v1011
          %1050 = vmatprep.subr.mxu0 0.0
          %1051 = vmatpush1.msra.mxu0 %v1010
          %1052 = vmatprep.subr.mxu0 0.0
          %1053 = vmatpush1.msra.mxu0 %v1009
          %1054 = vmatprep.subr.mxu0 0.0
          %1055 = vmatpush1.msra.mxu0 %v1008
          %1056 = vmatprep.subr.mxu0 0.0
          %1057 = vmatpush2.msra.mxu0 0.0
          %1058 = vmatprep.subr.mxu0 0.0
          %1059 = vmatpush2.msra.mxu0 0.0
          %1060 = vmatprep.subr.mxu0 0.0
          %1061 = vmatpush2.msra.mxu0 0.0
          %1062 = vmatprep.subr.mxu0 0.0
          %1063 = vmatpush2.msra.mxu0 0.0
          %1064 = vmatprep.subr.mxu0 0.0
          %1065 = vmatpush2.msra.mxu0 0.0
          %1066 = vmatprep.subr.mxu0 0.0
          %1067 = vmatpush2.msra.mxu0 0.0
          %1068 = vmatprep.subr.mxu0 0.0
          %1069 = vmatpush2.msra.mxu0 0.0
          %1070 = vmatprep.subr.mxu0 0.0
          %1071 = vmatpush2.msra.mxu0 0.0
          %1072 = vmatprep.subr.mxu0 0.0
          %1073 = vmatpush2.msra.mxu0 0.0
          %1074 = vmatprep.subr.mxu0 0.0
          %1075 = vmatpush2.msra.mxu0 0.0
          %1076 = vmatprep.subr.mxu0 0.0
          %1077 = vmatpush2.msra.mxu0 0.0
          %1078 = vmatprep.subr.mxu0 0.0
          %1079 = vmatpush2.msra.mxu0 0.0
          %1080 = vmatprep.subr.mxu0 0.0
          %1081 = vmatpush2.msra.mxu0 0.0
          %1082 = vmatprep.subr.mxu0 0.0
          %1083 = vmatpush2.msra.mxu0 0.0
          %1084 = vmatprep.subr.mxu0 0.0
          %1085 = vmatpush2.msra.mxu0 0.0
          %1086 = vmatprep.subr.mxu0 0.0
          %1087 = vmatpush2.msra.mxu0 0.0
          %1088 = vmatprep.mubr.f32.mxu0 0.0
          %1089 = vmatmul.mubr.f32.gmra.mxu0 %v992
          %v1090 = vpop.f32.mrf.mxu0
          %v1091 = vadd.f32 0.0, %v1090
          %v1092 = vpop.f32.mrf.mxu0
          %1093 = vmatprep.mubr.f32.mxu0 0.0
          %1094 = vmatmul.mubr.f32.gmra.mxu0 %v993
          %v1095 = vpop.f32.mrf.mxu0
          %v1096 = vadd.f32 0.0, %v1095
          %v1097 = vpop.f32.mrf.mxu0
          %1098 = vmatprep.mubr.f32.mxu0 0.0
          %1099 = vmatmul.mubr.f32.gmra.mxu0 %v994
          %v1100 = vpop.f32.mrf.mxu0
          %v1101 = vadd.f32 0.0, %v1100
          %v1102 = vpop.f32.mrf.mxu0
          %1103 = vmatprep.mubr.f32.mxu0 0.0
          %1104 = vmatmul.mubr.f32.gmra.mxu0 %v995
          %v1105 = vpop.f32.mrf.mxu0
          %v1106 = vadd.f32 0.0, %v1105
          %v1107 = vpop.f32.mrf.mxu0
          %1108 = vmatprep.mubr.f32.mxu0 0.0
          %1109 = vmatmul.mubr.f32.gmra.mxu0 %v996
          %v1110 = vpop.f32.mrf.mxu0
          %v1111 = vadd.f32 0.0, %v1110
          %v1112 = vpop.f32.mrf.mxu0
          %1113 = vmatprep.mubr.f32.mxu0 0.0
          %1114 = vmatmul.mubr.f32.gmra.mxu0 %v997
          %v1115 = vpop.f32.mrf.mxu0
          %v1116 = vadd.f32 0.0, %v1115
          %v1117 = vpop.f32.mrf.mxu0
          %1118 = vmatprep.mubr.f32.mxu0 0.0
          %1119 = vmatmul.mubr.f32.gmra.mxu0 %v998
          %v1120 = vpop.f32.mrf.mxu0
          %v1121 = vadd.f32 0.0, %v1120
          %v1122 = vpop.f32.mrf.mxu0
          %1123 = vmatprep.mubr.f32.mxu0 0.0
          %1124 = vmatmul.mubr.f32.gmra.mxu0 %v999
          %v1125 = vpop.f32.mrf.mxu0
          %v1126 = vadd.f32 0.0, %v1125
          %v1127 = vpop.f32.mrf.mxu0
          %1128 = vmatprep.mubr.f32.mxu0 0.0
          %1129 = vmatmul.mubr.f32.gmra.mxu0 %v1000
          %v1130 = vpop.f32.mrf.mxu0
          %v1131 = vadd.f32 0.0, %v1130
          %v1132 = vpop.f32.mrf.mxu0
          %1133 = vmatprep.mubr.f32.mxu0 0.0
          %1134 = vmatmul.mubr.f32.gmra.mxu0 %v1001
          %v1135 = vpop.f32.mrf.mxu0
          %v1136 = vadd.f32 0.0, %v1135
          %v1137 = vpop.f32.mrf.mxu0
          %1138 = vmatprep.mubr.f32.mxu0 0.0
          %1139 = vmatmul.mubr.f32.gmra.mxu0 %v1002
          %v1140 = vpop.f32.mrf.mxu0
          %v1141 = vadd.f32 0.0, %v1140
          %v1142 = vpop.f32.mrf.mxu0
          %1143 = vmatprep.mubr.f32.mxu0 0.0
          %1144 = vmatmul.mubr.f32.gmra.mxu0 %v1003
          %v1145 = vpop.f32.mrf.mxu0
          %v1146 = vadd.f32 0.0, %v1145
          %v1147 = vpop.f32.mrf.mxu0
          %1148 = vmatprep.mubr.f32.mxu0 0.0
          %1149 = vmatmul.mubr.f32.gmra.mxu0 %v1004
          %v1150 = vpop.f32.mrf.mxu0
          %v1151 = vadd.f32 0.0, %v1150
          %v1152 = vpop.f32.mrf.mxu0
          %1153 = vmatprep.mubr.f32.mxu0 0.0
          %1154 = vmatmul.mubr.f32.gmra.mxu0 %v1005
          %v1155 = vpop.f32.mrf.mxu0
          %v1156 = vadd.f32 0.0, %v1155
          %v1157 = vpop.f32.mrf.mxu0
          %1158 = vmatprep.mubr.f32.mxu0 0.0
          %1159 = vmatmul.mubr.f32.gmra.mxu0 %v1006
          %v1160 = vpop.f32.mrf.mxu0
          %v1161 = vadd.f32 0.0, %v1160
          %v1162 = vpop.f32.mrf.mxu0
          %1163 = vmatprep.mubr.f32.mxu0 0.0
          %1164 = vmatmul.mubr.f32.gmra.mxu0 %v1007
          %v1165 = vpop.f32.mrf.mxu0
          %v1166 = vadd.f32 0.0, %v1165
          %v1167 = vpop.f32.mrf.mxu0
          %1168 = vdwg.mxu0
          %1169 = vst [vmem:[%s506] sm:$0xff] %v1091
          %1170 = vst [vmem:[%s506 + $0x8] sm:$0xff] %v1096
          %1171 = vst [vmem:[%s506 + $0x10] sm:$0xff] %v1101
          %1172 = vst [vmem:[%s506 + $0x18] sm:$0xff] %v1106
          %1173 = vst [vmem:[%s506 + $0x20] sm:$0xff] %v1111
          %1174 = vst [vmem:[%s506 + $0x28] sm:$0xff] %v1116
          %1175 = vst [vmem:[%s506 + $0x30] sm:$0xff] %v1121
          %1176 = vst [vmem:[%s506 + $0x38] sm:$0xff] %v1126
          %1177 = vst [vmem:[%s506 + $0x40] sm:$0xff] %v1131
          %1178 = vst [vmem:[%s506 + $0x48] sm:$0xff] %v1136
          %1179 = vst [vmem:[%s506 + $0x50] sm:$0xff] %v1141
          %1180 = vst [vmem:[%s506 + $0x58] sm:$0xff] %v1146
          %1181 = vst [vmem:[%s506 + $0x60] sm:$0xff] %v1151
          %1182 = vst [vmem:[%s506 + $0x68] sm:$0xff] %v1156
          %1183 = vst [vmem:[%s506 + $0x70] sm:$0xff] %v1161
          %1184 = vst [vmem:[%s506 + $0x78] sm:$0xff] %v1166
          %1185 = vst [vmem:[%s513] sm:$0xff] %v659
          %1186 = vst [vmem:[%s513 + $0x8] sm:$0xff] %v818
          %1187 = vst [vmem:[%s513 + $0x10] sm:$0xff] %v665
          %1188 = vst [vmem:[%s513 + $0x18] sm:$0xff] %v823
          %1189 = vst [vmem:[%s513 + $0x20] sm:$0xff] %v671
          %1190 = vst [vmem:[%s513 + $0x28] sm:$0xff] %v828
          %1191 = vst [vmem:[%s513 + $0x30] sm:$0xff] %v677
          %1192 = vst [vmem:[%s513 + $0x38] sm:$0xff] %v833
          %1193 = vst [vmem:[%s513 + $0x40] sm:$0xff] %v683
          %1194 = vst [vmem:[%s513 + $0x48] sm:$0xff] %v838
          %1195 = vst [vmem:[%s513 + $0x50] sm:$0xff] %v689
          %1196 = vst [vmem:[%s513 + $0x58] sm:$0xff] %v843
          %1197 = vst [vmem:[%s513 + $0x60] sm:$0xff] %v695
          %1198 = vst [vmem:[%s513 + $0x68] sm:$0xff] %v848
          %1199 = vst [vmem:[%s513 + $0x70] sm:$0xff] %v701
          %1200 = vst [vmem:[%s513 + $0x78] sm:$0xff] %v853
          %1201 = vst [vmem:[%s513 + $0x80] sm:$0xff] %v707
          %1202 = vst [vmem:[%s513 + $0x88] sm:$0xff] %v858
          %1203 = vst [vmem:[%s513 + $0x90] sm:$0xff] %v713
          %1204 = vst [vmem:[%s513 + $0x98] sm:$0xff] %v863
          %1205 = vst [vmem:[%s513 + $0xa0] sm:$0xff] %v719
          %1206 = vst [vmem:[%s513 + $0xa8] sm:$0xff] %v868
          %1207 = vst [vmem:[%s513 + $0xb0] sm:$0xff] %v725
          %1208 = vst [vmem:[%s513 + $0xb8] sm:$0xff] %v873
          %1209 = vst [vmem:[%s513 + $0xc0] sm:$0xff] %v731
          %1210 = vst [vmem:[%s513 + $0xc8] sm:$0xff] %v878
          %1211 = vst [vmem:[%s513 + $0xd0] sm:$0xff] %v737
          %1212 = vst [vmem:[%s513 + $0xd8] sm:$0xff] %v883
          %1213 = vst [vmem:[%s513 + $0xe0] sm:$0xff] %v743
          %1214 = vst [vmem:[%s513 + $0xe8] sm:$0xff] %v888
          %1215 = vst [vmem:[%s513 + $0xf0] sm:$0xff] %v749
          %1216 = vst [vmem:[%s513 + $0xf8] sm:$0xff] %v893
          %1217 = vst [vmem:[#allocation2] sm:$0xff] 0.0
          %1218 = vst [vmem:[#allocation2 + $0x8] sm:$0xff] 0.0
          %1219 = vst [vmem:[#allocation2 + $0x10] sm:$0xff] 0.0
          %1220 = vst [vmem:[#allocation2 + $0x18] sm:$0xff] 0.0
          %1221 = vst [vmem:[#allocation2 + $0x20] sm:$0xff] 0.0
          %1222 = vst [vmem:[#allocation2 + $0x28] sm:$0xff] 0.0
          %1223 = vst [vmem:[#allocation2 + $0x30] sm:$0xff] 0.0
          %1224 = vst [vmem:[#allocation2 + $0x38] sm:$0xff] 0.0
          %1225 = vst [vmem:[#allocation2 + $0x40] sm:$0xff] 0.0
          %1226 = vst [vmem:[#allocation2 + $0x48] sm:$0xff] 0.0
          %1227 = vst [vmem:[#allocation2 + $0x50] sm:$0xff] 0.0
          %1228 = vst [vmem:[#allocation2 + $0x58] sm:$0xff] 0.0
          %1229 = vst [vmem:[#allocation2 + $0x60] sm:$0xff] 0.0
          %1230 = vst [vmem:[#allocation2 + $0x68] sm:$0xff] 0.0
          %1231 = vst [vmem:[#allocation2 + $0x70] sm:$0xff] 0.0
          %1232 = vst [vmem:[#allocation2 + $0x78] sm:$0xff] 0.0
        $region90: #{ggat_forward.2} parent=81 // pred_fallthru
          _
        %v1233 = vld [vmem:[#allocation2] sm:$0xff]
        %v1234 = vld [vmem:[#allocation2 + $0x8] sm:$0xff]
        %v1235 = vld [vmem:[#allocation2 + $0x10] sm:$0xff]
        %v1236 = vld [vmem:[#allocation2 + $0x18] sm:$0xff]
        %v1237 = vld [vmem:[#allocation2 + $0x20] sm:$0xff]
        %v1238 = vld [vmem:[#allocation2 + $0x28] sm:$0xff]
        %v1239 = vld [vmem:[#allocation2 + $0x30] sm:$0xff]
        %v1240 = vld [vmem:[#allocation2 + $0x38] sm:$0xff]
        %v1241 = vld [vmem:[#allocation2 + $0x40] sm:$0xff]
        %v1242 = vld [vmem:[#allocation2 + $0x48] sm:$0xff]
        %v1243 = vld [vmem:[#allocation2 + $0x50] sm:$0xff]
        %v1244 = vld [vmem:[#allocation2 + $0x58] sm:$0xff]
        %v1245 = vld [vmem:[#allocation2 + $0x60] sm:$0xff]
        %v1246 = vld [vmem:[#allocation2 + $0x68] sm:$0xff]
        %v1247 = vld [vmem:[#allocation2 + $0x70] sm:$0xff]
        %v1248 = vld [vmem:[#allocation2 + $0x78] sm:$0xff]
        %v1249 = vld [vmem:[%s434] sm:$0xff]
        %v1250 = vld [vmem:[%s434 + $0x8] sm:$0xff]
        %v1251 = vld [vmem:[%s434 + $0x10] sm:$0xff]
        %v1252 = vld [vmem:[%s434 + $0x18] sm:$0xff]
        %v1253 = vld [vmem:[%s434 + $0x20] sm:$0xff]
        %v1254 = vld [vmem:[%s434 + $0x28] sm:$0xff]
        %v1255 = vld [vmem:[%s434 + $0x30] sm:$0xff]
        %v1256 = vld [vmem:[%s434 + $0x38] sm:$0xff]
        %v1257 = vld [vmem:[%s434 + $0x40] sm:$0xff]
        %v1258 = vld [vmem:[%s434 + $0x48] sm:$0xff]
        %v1259 = vld [vmem:[%s434 + $0x50] sm:$0xff]
        %v1260 = vld [vmem:[%s434 + $0x58] sm:$0xff]
        %v1261 = vld [vmem:[%s434 + $0x60] sm:$0xff]
        %v1262 = vld [vmem:[%s434 + $0x68] sm:$0xff]
        %v1263 = vld [vmem:[%s434 + $0x70] sm:$0xff]
        %v1264 = vld [vmem:[%s434 + $0x78] sm:$0xff]
        %v1265 = vld [vmem:[%s499] sm:$0xff]
        %v1266 = vld [vmem:[%s499 + $0x8] sm:$0xff]
        %v1267 = vld [vmem:[%s499 + $0x10] sm:$0xff]
        %v1268 = vld [vmem:[%s499 + $0x18] sm:$0xff]
        %v1269 = vld [vmem:[%s499 + $0x20] sm:$0xff]
        %v1270 = vld [vmem:[%s499 + $0x28] sm:$0xff]
        %v1271 = vld [vmem:[%s499 + $0x30] sm:$0xff]
        %v1272 = vld [vmem:[%s499 + $0x38] sm:$0xff]
        %v1273 = vld [vmem:[%s499 + $0x40] sm:$0xff]
        %v1274 = vld [vmem:[%s499 + $0x48] sm:$0xff]
        %v1275 = vld [vmem:[%s499 + $0x50] sm:$0xff]
        %v1276 = vld [vmem:[%s499 + $0x58] sm:$0xff]
        %v1277 = vld [vmem:[%s499 + $0x60] sm:$0xff]
        %v1278 = vld [vmem:[%s499 + $0x68] sm:$0xff]
        %v1279 = vld [vmem:[%s499 + $0x70] sm:$0xff]
        %v1280 = vld [vmem:[%s499 + $0x78] sm:$0xff]
        %1281 = vmatprep.subr.mxu0 0.0
        %1282 = vmatpush1.msra.mxu0 %v1280
        %1283 = vmatprep.subr.mxu0 0.0
        %1284 = vmatpush1.msra.mxu0 %v1279
        %1285 = vmatprep.subr.mxu0 0.0
        %1286 = vmatpush1.msra.mxu0 %v1278
        %1287 = vmatprep.subr.mxu0 0.0
        %1288 = vmatpush1.msra.mxu0 %v1277
        %1289 = vmatprep.subr.mxu0 0.0
        %1290 = vmatpush1.msra.mxu0 %v1276
        %1291 = vmatprep.subr.mxu0 0.0
        %1292 = vmatpush1.msra.mxu0 %v1275
        %1293 = vmatprep.subr.mxu0 0.0
        %1294 = vmatpush1.msra.mxu0 %v1274
        %1295 = vmatprep.subr.mxu0 0.0
        %1296 = vmatpush1.msra.mxu0 %v1273
        %1297 = vmatprep.subr.mxu0 0.0
        %1298 = vmatpush1.msra.mxu0 %v1272
        %1299 = vmatprep.subr.mxu0 0.0
        %1300 = vmatpush1.msra.mxu0 %v1271
        %1301 = vmatprep.subr.mxu0 0.0
        %1302 = vmatpush1.msra.mxu0 %v1270
        %1303 = vmatprep.subr.mxu0 0.0
        %1304 = vmatpush1.msra.mxu0 %v1269
        %1305 = vmatprep.subr.mxu0 0.0
        %1306 = vmatpush1.msra.mxu0 %v1268
        %1307 = vmatprep.subr.mxu0 0.0
        %1308 = vmatpush1.msra.mxu0 %v1267
        %1309 = vmatprep.subr.mxu0 0.0
        %1310 = vmatpush1.msra.mxu0 %v1266
        %1311 = vmatprep.subr.mxu0 0.0
        %1312 = vmatpush1.msra.mxu0 %v1265
        %1313 = vmatprep.subr.mxu0 0.0
        %1314 = vmatpush2.msra.mxu0 0.0
        %1315 = vmatprep.subr.mxu0 0.0
        %1316 = vmatpush2.msra.mxu0 0.0
        %1317 = vmatprep.subr.mxu0 0.0
        %1318 = vmatpush2.msra.mxu0 0.0
        %1319 = vmatprep.subr.mxu0 0.0
        %1320 = vmatpush2.msra.mxu0 0.0
        %1321 = vmatprep.subr.mxu0 0.0
        %1322 = vmatpush2.msra.mxu0 0.0
        %1323 = vmatprep.subr.mxu0 0.0
        %1324 = vmatpush2.msra.mxu0 0.0
        %1325 = vmatprep.subr.mxu0 0.0
        %1326 = vmatpush2.msra.mxu0 0.0
        %1327 = vmatprep.subr.mxu0 0.0
        %1328 = vmatpush2.msra.mxu0 0.0
        %1329 = vmatprep.subr.mxu0 0.0
        %1330 = vmatpush2.msra.mxu0 0.0
        %1331 = vmatprep.subr.mxu0 0.0
        %1332 = vmatpush2.msra.mxu0 0.0
        %1333 = vmatprep.subr.mxu0 0.0
        %1334 = vmatpush2.msra.mxu0 0.0
        %1335 = vmatprep.subr.mxu0 0.0
        %1336 = vmatpush2.msra.mxu0 0.0
        %1337 = vmatprep.subr.mxu0 0.0
        %1338 = vmatpush2.msra.mxu0 0.0
        %1339 = vmatprep.subr.mxu0 0.0
        %1340 = vmatpush2.msra.mxu0 0.0
        %1341 = vmatprep.subr.mxu0 0.0
        %1342 = vmatpush2.msra.mxu0 0.0
        %1343 = vmatprep.subr.mxu0 0.0
        %1344 = vmatpush2.msra.mxu0 0.0
        %1345 = vmatprep.mubr.f32.mxu0 0.0
        %1346 = vmatmul.mubr.f32.gmra.mxu0 %v1249
        %v1347 = vpop.f32.mrf.mxu0
        %v1348 = vadd.f32 0.0, %v1347
        %v1349 = vpop.f32.mrf.mxu0
        %1350 = vmatprep.mubr.f32.mxu0 0.0
        %1351 = vmatmul.mubr.f32.gmra.mxu0 %v1250
        %v1352 = vpop.f32.mrf.mxu0
        %v1353 = vadd.f32 0.0, %v1352
        %v1354 = vpop.f32.mrf.mxu0
        %1355 = vmatprep.mubr.f32.mxu0 0.0
        %1356 = vmatmul.mubr.f32.gmra.mxu0 %v1251
        %v1357 = vpop.f32.mrf.mxu0
        %v1358 = vadd.f32 0.0, %v1357
        %v1359 = vpop.f32.mrf.mxu0
        %1360 = vmatprep.mubr.f32.mxu0 0.0
        %1361 = vmatmul.mubr.f32.gmra.mxu0 %v1252
        %v1362 = vpop.f32.mrf.mxu0
        %v1363 = vadd.f32 0.0, %v1362
        %v1364 = vpop.f32.mrf.mxu0
        %1365 = vmatprep.mubr.f32.mxu0 0.0
        %1366 = vmatmul.mubr.f32.gmra.mxu0 %v1253
        %v1367 = vpop.f32.mrf.mxu0
        %v1368 = vadd.f32 0.0, %v1367
        %v1369 = vpop.f32.mrf.mxu0
        %1370 = vmatprep.mubr.f32.mxu0 0.0
        %1371 = vmatmul.mubr.f32.gmra.mxu0 %v1254
        %v1372 = vpop.f32.mrf.mxu0
        %v1373 = vadd.f32 0.0, %v1372
        %v1374 = vpop.f32.mrf.mxu0
        %1375 = vmatprep.mubr.f32.mxu0 0.0
        %1376 = vmatmul.mubr.f32.gmra.mxu0 %v1255
        %v1377 = vpop.f32.mrf.mxu0
        %v1378 = vadd.f32 0.0, %v1377
        %v1379 = vpop.f32.mrf.mxu0
        %1380 = vmatprep.mubr.f32.mxu0 0.0
        %1381 = vmatmul.mubr.f32.gmra.mxu0 %v1256
        %v1382 = vpop.f32.mrf.mxu0
        %v1383 = vadd.f32 0.0, %v1382
        %v1384 = vpop.f32.mrf.mxu0
        %1385 = vmatprep.mubr.f32.mxu0 0.0
        %1386 = vmatmul.mubr.f32.gmra.mxu0 %v1257
        %v1387 = vpop.f32.mrf.mxu0
        %v1388 = vadd.f32 0.0, %v1387
        %v1389 = vpop.f32.mrf.mxu0
        %1390 = vmatprep.mubr.f32.mxu0 0.0
        %1391 = vmatmul.mubr.f32.gmra.mxu0 %v1258
        %v1392 = vpop.f32.mrf.mxu0
        %v1393 = vadd.f32 0.0, %v1392
        %v1394 = vpop.f32.mrf.mxu0
        %1395 = vmatprep.mubr.f32.mxu0 0.0
        %1396 = vmatmul.mubr.f32.gmra.mxu0 %v1259
        %v1397 = vpop.f32.mrf.mxu0
        %v1398 = vadd.f32 0.0, %v1397
        %v1399 = vpop.f32.mrf.mxu0
        %1400 = vmatprep.mubr.f32.mxu0 0.0
        %1401 = vmatmul.mubr.f32.gmra.mxu0 %v1260
        %v1402 = vpop.f32.mrf.mxu0
        %v1403 = vadd.f32 0.0, %v1402
        %v1404 = vpop.f32.mrf.mxu0
        %1405 = vmatprep.mubr.f32.mxu0 0.0
        %1406 = vmatmul.mubr.f32.gmra.mxu0 %v1261
        %v1407 = vpop.f32.mrf.mxu0
        %v1408 = vadd.f32 0.0, %v1407
        %v1409 = vpop.f32.mrf.mxu0
        %1410 = vmatprep.mubr.f32.mxu0 0.0
        %1411 = vmatmul.mubr.f32.gmra.mxu0 %v1262
        %v1412 = vpop.f32.mrf.mxu0
        %v1413 = vadd.f32 0.0, %v1412
        %v1414 = vpop.f32.mrf.mxu0
        %1415 = vmatprep.mubr.f32.mxu0 0.0
        %1416 = vmatmul.mubr.f32.gmra.mxu0 %v1263
        %v1417 = vpop.f32.mrf.mxu0
        %v1418 = vadd.f32 0.0, %v1417
        %v1419 = vpop.f32.mrf.mxu0
        %1420 = vmatprep.mubr.f32.mxu0 0.0
        %1421 = vmatmul.mubr.f32.gmra.mxu0 %v1264
        %v1422 = vpop.f32.mrf.mxu0
        %v1423 = vadd.f32 0.0, %v1422
        %v1424 = vpop.f32.mrf.mxu0
        %1425 = vdwg.mxu0
        %v1426 = vadd.f32 %v1233, %v1348
        %v1427 = vadd.f32 %v1234, %v1353
        %v1428 = vadd.f32 %v1235, %v1358
        %v1429 = vadd.f32 %v1236, %v1363
        %v1430 = vadd.f32 %v1237, %v1368
        %v1431 = vadd.f32 %v1238, %v1373
        %v1432 = vadd.f32 %v1239, %v1378
        %v1433 = vadd.f32 %v1240, %v1383
        %v1434 = vadd.f32 %v1241, %v1388
        %v1435 = vadd.f32 %v1242, %v1393
        %v1436 = vadd.f32 %v1243, %v1398
        %v1437 = vadd.f32 %v1244, %v1403
        %v1438 = vadd.f32 %v1245, %v1408
        %v1439 = vadd.f32 %v1246, %v1413
        %v1440 = vadd.f32 %v1247, %v1418
        %v1441 = vadd.f32 %v1248, %v1423
        %1442 = vst [vmem:[#allocation2] sm:$0xff] %v1426
        %1443 = vst [vmem:[#allocation2 + $0x8] sm:$0xff] %v1427
        %1444 = vst [vmem:[#allocation2 + $0x10] sm:$0xff] %v1428
        %1445 = vst [vmem:[#allocation2 + $0x18] sm:$0xff] %v1429
        %1446 = vst [vmem:[#allocation2 + $0x20] sm:$0xff] %v1430
        %1447 = vst [vmem:[#allocation2 + $0x28] sm:$0xff] %v1431
        %1448 = vst [vmem:[#allocation2 + $0x30] sm:$0xff] %v1432
        %1449 = vst [vmem:[#allocation2 + $0x38] sm:$0xff] %v1433
        %1450 = vst [vmem:[#allocation2 + $0x40] sm:$0xff] %v1434
        %1451 = vst [vmem:[#allocation2 + $0x48] sm:$0xff] %v1435
        %1452 = vst [vmem:[#allocation2 + $0x50] sm:$0xff] %v1436
        %1453 = vst [vmem:[#allocation2 + $0x58] sm:$0xff] %v1437
        %1454 = vst [vmem:[#allocation2 + $0x60] sm:$0xff] %v1438
        %1455 = vst [vmem:[#allocation2 + $0x68] sm:$0xff] %v1439
        %1456 = vst [vmem:[#allocation2 + $0x70] sm:$0xff] %v1440
        %1457 = vst [vmem:[#allocation2 + $0x78] sm:$0xff] %v1441
        %p1458 = scmp.eq.s32.totalorder %s26, 1
        // Predicated region
        $region91: #{ggat_forward.2} parent=81 // pred_check
          %p1459 = pneg %p1458
        $region92: #{ggat_forward.2} parent=81 // pred_check_branch
          %1461 = sbr.rel (%p1459) target = $region94
        $region93: #{ggat_forward.2} parent=81 // pred_region
          %v1462 = vld [vmem:[#allocation2] sm:$0xff]
          %v1463 = vld [vmem:[#allocation2 + $0x8] sm:$0xff]
          %v1464 = vld [vmem:[#allocation2 + $0x10] sm:$0xff]
          %v1465 = vld [vmem:[#allocation2 + $0x18] sm:$0xff]
          %v1466 = vld [vmem:[#allocation2 + $0x20] sm:$0xff]
          %v1467 = vld [vmem:[#allocation2 + $0x28] sm:$0xff]
          %v1468 = vld [vmem:[#allocation2 + $0x30] sm:$0xff]
          %v1469 = vld [vmem:[#allocation2 + $0x38] sm:$0xff]
          %v1470 = vld [vmem:[#allocation2 + $0x40] sm:$0xff]
          %v1471 = vld [vmem:[#allocation2 + $0x48] sm:$0xff]
          %v1472 = vld [vmem:[#allocation2 + $0x50] sm:$0xff]
          %v1473 = vld [vmem:[#allocation2 + $0x58] sm:$0xff]
          %v1474 = vld [vmem:[#allocation2 + $0x60] sm:$0xff]
          %v1475 = vld [vmem:[#allocation2 + $0x68] sm:$0xff]
          %v1476 = vld [vmem:[#allocation2 + $0x70] sm:$0xff]
          %v1477 = vld [vmem:[#allocation2 + $0x78] sm:$0xff]
          %v1478 = vld [vmem:[%s5] sm:$0xff]
          %v1479 = vld [vmem:[%s5 + $0x8] sm:$0xff]
          %v1480 = vld [vmem:[%s5 + $0x10] sm:$0xff]
          %v1481 = vld [vmem:[%s5 + $0x18] sm:$0xff]
          %v1482 = vld [vmem:[%s5 + $0x20] sm:$0xff]
          %v1483 = vld [vmem:[%s5 + $0x28] sm:$0xff]
          %v1484 = vld [vmem:[%s5 + $0x30] sm:$0xff]
          %v1485 = vld [vmem:[%s5 + $0x38] sm:$0xff]
          %v1486 = vld [vmem:[%s5 + $0x40] sm:$0xff]
          %v1487 = vld [vmem:[%s5 + $0x48] sm:$0xff]
          %v1488 = vld [vmem:[%s5 + $0x50] sm:$0xff]
          %v1489 = vld [vmem:[%s5 + $0x58] sm:$0xff]
          %v1490 = vld [vmem:[%s5 + $0x60] sm:$0xff]
          %v1491 = vld [vmem:[%s5 + $0x68] sm:$0xff]
          %v1492 = vld [vmem:[%s5 + $0x70] sm:$0xff]
          %v1493 = vld [vmem:[%s5 + $0x78] sm:$0xff]
          %v1494 = vld [vmem:[%s5 + $0x80] sm:$0xff]
          %v1495 = vld [vmem:[%s5 + $0x88] sm:$0xff]
          %v1496 = vld [vmem:[%s5 + $0x90] sm:$0xff]
          %v1497 = vld [vmem:[%s5 + $0x98] sm:$0xff]
          %v1498 = vld [vmem:[%s5 + $0xa0] sm:$0xff]
          %v1499 = vld [vmem:[%s5 + $0xa8] sm:$0xff]
          %v1500 = vld [vmem:[%s5 + $0xb0] sm:$0xff]
          %v1501 = vld [vmem:[%s5 + $0xb8] sm:$0xff]
          %v1502 = vld [vmem:[%s5 + $0xc0] sm:$0xff]
          %v1503 = vld [vmem:[%s5 + $0xc8] sm:$0xff]
          %v1504 = vld [vmem:[%s5 + $0xd0] sm:$0xff]
          %v1505 = vld [vmem:[%s5 + $0xd8] sm:$0xff]
          %v1506 = vld [vmem:[%s5 + $0xe0] sm:$0xff]
          %v1507 = vld [vmem:[%s5 + $0xe8] sm:$0xff]
          %v1508 = vld [vmem:[%s5 + $0xf0] sm:$0xff]
          %v1509 = vld [vmem:[%s5 + $0xf8] sm:$0xff]
          %v1510 = vld [vmem:[%s5 + $0x100] sm:$0xff]
          %v1511 = vld [vmem:[%s5 + $0x108] sm:$0xff]
          %v1512 = vld [vmem:[%s5 + $0x110] sm:$0xff]
          %v1513 = vld [vmem:[%s5 + $0x118] sm:$0xff]
          %v1514 = vld [vmem:[%s5 + $0x120] sm:$0xff]
          %v1515 = vld [vmem:[%s5 + $0x128] sm:$0xff]
          %v1516 = vld [vmem:[%s5 + $0x130] sm:$0xff]
          %v1517 = vld [vmem:[%s5 + $0x138] sm:$0xff]
          %v1518 = vld [vmem:[%s5 + $0x140] sm:$0xff]
          %v1519 = vld [vmem:[%s5 + $0x148] sm:$0xff]
          %v1520 = vld [vmem:[%s5 + $0x150] sm:$0xff]
          %v1521 = vld [vmem:[%s5 + $0x158] sm:$0xff]
          %v1522 = vld [vmem:[%s5 + $0x160] sm:$0xff]
          %v1523 = vld [vmem:[%s5 + $0x168] sm:$0xff]
          %v1524 = vld [vmem:[%s5 + $0x170] sm:$0xff]
          %v1525 = vld [vmem:[%s5 + $0x178] sm:$0xff]
          %v1526 = vld [vmem:[%s5 + $0x180] sm:$0xff]
          %v1527 = vld [vmem:[%s5 + $0x188] sm:$0xff]
          %v1528 = vld [vmem:[%s5 + $0x190] sm:$0xff]
          %v1529 = vld [vmem:[%s5 + $0x198] sm:$0xff]
          %v1530 = vld [vmem:[%s5 + $0x1a0] sm:$0xff]
          %v1531 = vld [vmem:[%s5 + $0x1a8] sm:$0xff]
          %v1532 = vld [vmem:[%s5 + $0x1b0] sm:$0xff]
          %v1533 = vld [vmem:[%s5 + $0x1b8] sm:$0xff]
          %v1534 = vld [vmem:[%s5 + $0x1c0] sm:$0xff]
          %v1535 = vld [vmem:[%s5 + $0x1c8] sm:$0xff]
          %v1536 = vld [vmem:[%s5 + $0x1d0] sm:$0xff]
          %v1537 = vld [vmem:[%s5 + $0x1d8] sm:$0xff]
          %v1538 = vld [vmem:[%s5 + $0x1e0] sm:$0xff]
          %v1539 = vld [vmem:[%s5 + $0x1e8] sm:$0xff]
          %v1540 = vld [vmem:[%s5 + $0x1f0] sm:$0xff]
          %v1541 = vld [vmem:[%s5 + $0x1f8] sm:$0xff]
          %v1542 = vld [vmem:[%s6] sm:$0xf]
          %v1544 = vlaneseq
          %v1545 = vshrl.u32 %v1544, 7
          %v1546 = vsub.s32 0, %v1545
          %v1547 = vrot.slane %v1542, %v1546
          %v1548 = vlaneseq
          %v1549 = vshrl.u32 %v1548, 7
          %v1550 = vsub.s32 1, %v1549
          %v1551 = vrot.slane %v1542, %v1550
          %v1552 = vlaneseq
          %v1553 = vshrl.u32 %v1552, 7
          %v1554 = vsub.s32 2, %v1553
          %v1555 = vrot.slane %v1542, %v1554
          %v1556 = vlaneseq
          %v1557 = vshrl.u32 %v1556, 7
          %v1558 = vsub.s32 3, %v1557
          %v1559 = vrot.slane %v1542, %v1558
          %1564 = vmatprep.subr.mxu0 %v1539
          %1565 = vmatpush1.msra.mxu0 %v1538
          %1566 = vmatprep.subr.mxu0 %v1535
          %1567 = vmatpush1.msra.mxu0 %v1534
          %1568 = vmatprep.subr.mxu0 %v1531
          %1569 = vmatpush1.msra.mxu0 %v1530
          %1570 = vmatprep.subr.mxu0 %v1527
          %1571 = vmatpush1.msra.mxu0 %v1526
          %1572 = vmatprep.subr.mxu0 %v1523
          %1573 = vmatpush1.msra.mxu0 %v1522
          %1574 = vmatprep.subr.mxu0 %v1519
          %1575 = vmatpush1.msra.mxu0 %v1518
          %1576 = vmatprep.subr.mxu0 %v1515
          %1577 = vmatpush1.msra.mxu0 %v1514
          %1578 = vmatprep.subr.mxu0 %v1511
          %1579 = vmatpush1.msra.mxu0 %v1510
          %1580 = vmatprep.subr.mxu0 %v1507
          %1581 = vmatpush1.msra.mxu0 %v1506
          %1582 = vmatprep.subr.mxu0 %v1503
          %1583 = vmatpush1.msra.mxu0 %v1502
          %1584 = vmatprep.subr.mxu0 %v1499
          %1585 = vmatpush1.msra.mxu0 %v1498
          %1586 = vmatprep.subr.mxu0 %v1495
          %1587 = vmatpush1.msra.mxu0 %v1494
          %1588 = vmatprep.subr.mxu0 %v1491
          %1589 = vmatpush1.msra.mxu0 %v1490
          %1590 = vmatprep.subr.mxu0 %v1487
          %1591 = vmatpush1.msra.mxu0 %v1486
          %1592 = vmatprep.subr.mxu0 %v1483
          %1593 = vmatpush1.msra.mxu0 %v1482
          %1594 = vmatprep.subr.mxu0 %v1479
          %1595 = vmatpush1.msra.mxu0 %v1478
          %1596 = vmatprep.subr.mxu0 0.0
          %1597 = vmatpush2.msra.mxu0 0.0
          %1598 = vmatprep.subr.mxu0 0.0
          %1599 = vmatpush2.msra.mxu0 0.0
          %1600 = vmatprep.subr.mxu0 0.0
          %1601 = vmatpush2.msra.mxu0 0.0
          %1602 = vmatprep.subr.mxu0 0.0
          %1603 = vmatpush2.msra.mxu0 0.0
          %1604 = vmatprep.subr.mxu0 0.0
          %1605 = vmatpush2.msra.mxu0 0.0
          %1606 = vmatprep.subr.mxu0 0.0
          %1607 = vmatpush2.msra.mxu0 0.0
          %1608 = vmatprep.subr.mxu0 0.0
          %1609 = vmatpush2.msra.mxu0 0.0
          %1610 = vmatprep.subr.mxu0 0.0
          %1611 = vmatpush2.msra.mxu0 0.0
          %1612 = vmatprep.subr.mxu0 0.0
          %1613 = vmatpush2.msra.mxu0 0.0
          %1614 = vmatprep.subr.mxu0 0.0
          %1615 = vmatpush2.msra.mxu0 0.0
          %1616 = vmatprep.subr.mxu0 0.0
          %1617 = vmatpush2.msra.mxu0 0.0
          %1618 = vmatprep.subr.mxu0 0.0
          %1619 = vmatpush2.msra.mxu0 0.0
          %1620 = vmatprep.subr.mxu0 0.0
          %1621 = vmatpush2.msra.mxu0 0.0
          %1622 = vmatprep.subr.mxu0 0.0
          %1623 = vmatpush2.msra.mxu0 0.0
          %1624 = vmatprep.subr.mxu0 0.0
          %1625 = vmatpush2.msra.mxu0 0.0
          %1626 = vmatprep.subr.mxu0 0.0
          %1627 = vmatpush2.msra.mxu0 0.0
          %1628 = vmatprep.mubr.f32.mxu0 0.0
          %1629 = vmatmul.mubr.f32.gmra.mxu0 %v1462
          %v1630 = vpop.f32.mrf.mxu0
          %v1631 = vadd.f32 %v1547, %v1630
          %v1632 = vpop.f32.mrf.mxu0
          %v1633 = vadd.f32 %v1551, %v1632
          %1634 = vmatprep.mubr.f32.mxu0 0.0
          %1635 = vmatmul.mubr.f32.gmra.mxu0 %v1463
          %v1636 = vpop.f32.mrf.mxu0
          %v1637 = vadd.f32 %v1547, %v1636
          %v1638 = vpop.f32.mrf.mxu0
          %v1639 = vadd.f32 %v1551, %v1638
          %1640 = vmatprep.mubr.f32.mxu0 0.0
          %1641 = vmatmul.mubr.f32.gmra.mxu0 %v1464
          %v1642 = vpop.f32.mrf.mxu0
          %v1643 = vadd.f32 %v1547, %v1642
          %v1644 = vpop.f32.mrf.mxu0
          %v1645 = vadd.f32 %v1551, %v1644
          %1646 = vmatprep.mubr.f32.mxu0 0.0
          %1647 = vmatmul.mubr.f32.gmra.mxu0 %v1465
          %v1648 = vpop.f32.mrf.mxu0
          %v1649 = vadd.f32 %v1547, %v1648
          %v1650 = vpop.f32.mrf.mxu0
          %v1651 = vadd.f32 %v1551, %v1650
          %1652 = vmatprep.mubr.f32.mxu0 0.0
          %1653 = vmatmul.mubr.f32.gmra.mxu0 %v1466
          %v1654 = vpop.f32.mrf.mxu0
          %v1655 = vadd.f32 %v1547, %v1654
          %v1656 = vpop.f32.mrf.mxu0
          %v1657 = vadd.f32 %v1551, %v1656
          %1658 = vmatprep.mubr.f32.mxu0 0.0
          %1659 = vmatmul.mubr.f32.gmra.mxu0 %v1467
          %v1660 = vpop.f32.mrf.mxu0
          %v1661 = vadd.f32 %v1547, %v1660
          %v1662 = vpop.f32.mrf.mxu0
          %v1663 = vadd.f32 %v1551, %v1662
          %1664 = vmatprep.mubr.f32.mxu0 0.0
          %1665 = vmatmul.mubr.f32.gmra.mxu0 %v1468
          %v1666 = vpop.f32.mrf.mxu0
          %v1667 = vadd.f32 %v1547, %v1666
          %v1668 = vpop.f32.mrf.mxu0
          %v1669 = vadd.f32 %v1551, %v1668
          %1670 = vmatprep.mubr.f32.mxu0 0.0
          %1671 = vmatmul.mubr.f32.gmra.mxu0 %v1469
          %v1672 = vpop.f32.mrf.mxu0
          %v1673 = vadd.f32 %v1547, %v1672
          %v1674 = vpop.f32.mrf.mxu0
          %v1675 = vadd.f32 %v1551, %v1674
          %1676 = vmatprep.mubr.f32.mxu0 0.0
          %1677 = vmatmul.mubr.f32.gmra.mxu0 %v1470
          %v1678 = vpop.f32.mrf.mxu0
          %v1679 = vadd.f32 %v1547, %v1678
          %v1680 = vpop.f32.mrf.mxu0
          %v1681 = vadd.f32 %v1551, %v1680
          %1682 = vmatprep.mubr.f32.mxu0 0.0
          %1683 = vmatmul.mubr.f32.gmra.mxu0 %v1471
          %v1684 = vpop.f32.mrf.mxu0
          %v1685 = vadd.f32 %v1547, %v1684
          %v1686 = vpop.f32.mrf.mxu0
          %v1687 = vadd.f32 %v1551, %v1686
          %1688 = vmatprep.mubr.f32.mxu0 0.0
          %1689 = vmatmul.mubr.f32.gmra.mxu0 %v1472
          %v1690 = vpop.f32.mrf.mxu0
          %v1691 = vadd.f32 %v1547, %v1690
          %v1692 = vpop.f32.mrf.mxu0
          %v1693 = vadd.f32 %v1551, %v1692
          %1694 = vmatprep.mubr.f32.mxu0 0.0
          %1695 = vmatmul.mubr.f32.gmra.mxu0 %v1473
          %v1696 = vpop.f32.mrf.mxu0
          %v1697 = vadd.f32 %v1547, %v1696
          %v1698 = vpop.f32.mrf.mxu0
          %v1699 = vadd.f32 %v1551, %v1698
          %1700 = vmatprep.mubr.f32.mxu0 0.0
          %1701 = vmatmul.mubr.f32.gmra.mxu0 %v1474
          %v1702 = vpop.f32.mrf.mxu0
          %v1703 = vadd.f32 %v1547, %v1702
          %v1704 = vpop.f32.mrf.mxu0
          %v1705 = vadd.f32 %v1551, %v1704
          %1706 = vmatprep.mubr.f32.mxu0 0.0
          %1707 = vmatmul.mubr.f32.gmra.mxu0 %v1475
          %v1708 = vpop.f32.mrf.mxu0
          %v1709 = vadd.f32 %v1547, %v1708
          %v1710 = vpop.f32.mrf.mxu0
          %v1711 = vadd.f32 %v1551, %v1710
          %1712 = vmatprep.mubr.f32.mxu0 0.0
          %1713 = vmatmul.mubr.f32.gmra.mxu0 %v1476
          %v1714 = vpop.f32.mrf.mxu0
          %v1715 = vadd.f32 %v1547, %v1714
          %v1716 = vpop.f32.mrf.mxu0
          %v1717 = vadd.f32 %v1551, %v1716
          %1718 = vmatprep.mubr.f32.mxu0 0.0
          %1719 = vmatmul.mubr.f32.gmra.mxu0 %v1477
          %v1720 = vpop.f32.mrf.mxu0
          %v1721 = vadd.f32 %v1547, %v1720
          %v1722 = vpop.f32.mrf.mxu0
          %v1723 = vadd.f32 %v1551, %v1722
          %1724 = vdwg.mxu0
          %1725 = vmatprep.subr.mxu0 %v1541
          %1726 = vmatpush1.msra.mxu0 %v1540
          %1727 = vmatprep.subr.mxu0 %v1537
          %1728 = vmatpush1.msra.mxu0 %v1536
          %1729 = vmatprep.subr.mxu0 %v1533
          %1730 = vmatpush1.msra.mxu0 %v1532
          %1731 = vmatprep.subr.mxu0 %v1529
          %1732 = vmatpush1.msra.mxu0 %v1528
          %1733 = vmatprep.subr.mxu0 %v1525
          %1734 = vmatpush1.msra.mxu0 %v1524
          %1735 = vmatprep.subr.mxu0 %v1521
          %1736 = vmatpush1.msra.mxu0 %v1520
          %1737 = vmatprep.subr.mxu0 %v1517
          %1738 = vmatpush1.msra.mxu0 %v1516
          %1739 = vmatprep.subr.mxu0 %v1513
          %1740 = vmatpush1.msra.mxu0 %v1512
          %1741 = vmatprep.subr.mxu0 %v1509
          %1742 = vmatpush1.msra.mxu0 %v1508
          %1743 = vmatprep.subr.mxu0 %v1505
          %1744 = vmatpush1.msra.mxu0 %v1504
          %1745 = vmatprep.subr.mxu0 %v1501
          %1746 = vmatpush1.msra.mxu0 %v1500
          %1747 = vmatprep.subr.mxu0 %v1497
          %1748 = vmatpush1.msra.mxu0 %v1496
          %1749 = vmatprep.subr.mxu0 %v1493
          %1750 = vmatpush1.msra.mxu0 %v1492
          %1751 = vmatprep.subr.mxu0 %v1489
          %1752 = vmatpush1.msra.mxu0 %v1488
          %1753 = vmatprep.subr.mxu0 %v1485
          %1754 = vmatpush1.msra.mxu0 %v1484
          %1755 = vmatprep.subr.mxu0 %v1481
          %1756 = vmatpush1.msra.mxu0 %v1480
          %1757 = vmatprep.subr.mxu0 0.0
          %1758 = vmatpush2.msra.mxu0 0.0
          %1759 = vmatprep.subr.mxu0 0.0
          %1760 = vmatpush2.msra.mxu0 0.0
          %1761 = vmatprep.subr.mxu0 0.0
          %1762 = vmatpush2.msra.mxu0 0.0
          %1763 = vmatprep.subr.mxu0 0.0
          %1764 = vmatpush2.msra.mxu0 0.0
          %1765 = vmatprep.subr.mxu0 0.0
          %1766 = vmatpush2.msra.mxu0 0.0
          %1767 = vmatprep.subr.mxu0 0.0
          %1768 = vmatpush2.msra.mxu0 0.0
          %1769 = vmatprep.subr.mxu0 0.0
          %1770 = vmatpush2.msra.mxu0 0.0
          %1771 = vmatprep.subr.mxu0 0.0
          %1772 = vmatpush2.msra.mxu0 0.0
          %1773 = vmatprep.subr.mxu0 0.0
          %1774 = vmatpush2.msra.mxu0 0.0
          %1775 = vmatprep.subr.mxu0 0.0
          %1776 = vmatpush2.msra.mxu0 0.0
          %1777 = vmatprep.subr.mxu0 0.0
          %1778 = vmatpush2.msra.mxu0 0.0
          %1779 = vmatprep.subr.mxu0 0.0
          %1780 = vmatpush2.msra.mxu0 0.0
          %1781 = vmatprep.subr.mxu0 0.0
          %1782 = vmatpush2.msra.mxu0 0.0
          %1783 = vmatprep.subr.mxu0 0.0
          %1784 = vmatpush2.msra.mxu0 0.0
          %1785 = vmatprep.subr.mxu0 0.0
          %1786 = vmatpush2.msra.mxu0 0.0
          %1787 = vmatprep.subr.mxu0 0.0
          %1788 = vmatpush2.msra.mxu0 0.0
          %1789 = vmatprep.mubr.f32.mxu0 0.0
          %1790 = vmatmul.mubr.f32.gmra.mxu0 %v1462
          %v1791 = vpop.f32.mrf.mxu0
          %v1792 = vadd.f32 %v1555, %v1791
          %v1793 = vpop.f32.mrf.mxu0
          %v1794 = vadd.f32 %v1559, %v1793
          %1795 = vmatprep.mubr.f32.mxu0 0.0
          %1796 = vmatmul.mubr.f32.gmra.mxu0 %v1463
          %v1797 = vpop.f32.mrf.mxu0
          %v1798 = vadd.f32 %v1555, %v1797
          %v1799 = vpop.f32.mrf.mxu0
          %v1800 = vadd.f32 %v1559, %v1799
          %1801 = vmatprep.mubr.f32.mxu0 0.0
          %1802 = vmatmul.mubr.f32.gmra.mxu0 %v1464
          %v1803 = vpop.f32.mrf.mxu0
          %v1804 = vadd.f32 %v1555, %v1803
          %v1805 = vpop.f32.mrf.mxu0
          %v1806 = vadd.f32 %v1559, %v1805
          %1807 = vmatprep.mubr.f32.mxu0 0.0
          %1808 = vmatmul.mubr.f32.gmra.mxu0 %v1465
          %v1809 = vpop.f32.mrf.mxu0
          %v1810 = vadd.f32 %v1555, %v1809
          %v1811 = vpop.f32.mrf.mxu0
          %v1812 = vadd.f32 %v1559, %v1811
          %1813 = vmatprep.mubr.f32.mxu0 0.0
          %1814 = vmatmul.mubr.f32.gmra.mxu0 %v1466
          %v1815 = vpop.f32.mrf.mxu0
          %v1816 = vadd.f32 %v1555, %v1815
          %v1817 = vpop.f32.mrf.mxu0
          %v1818 = vadd.f32 %v1559, %v1817
          %1819 = vmatprep.mubr.f32.mxu0 0.0
          %1820 = vmatmul.mubr.f32.gmra.mxu0 %v1467
          %v1821 = vpop.f32.mrf.mxu0
          %v1822 = vadd.f32 %v1555, %v1821
          %v1823 = vpop.f32.mrf.mxu0
          %v1824 = vadd.f32 %v1559, %v1823
          %1825 = vmatprep.mubr.f32.mxu0 0.0
          %1826 = vmatmul.mubr.f32.gmra.mxu0 %v1468
          %v1827 = vpop.f32.mrf.mxu0
          %v1828 = vadd.f32 %v1555, %v1827
          %v1829 = vpop.f32.mrf.mxu0
          %v1830 = vadd.f32 %v1559, %v1829
          %1831 = vmatprep.mubr.f32.mxu0 0.0
          %1832 = vmatmul.mubr.f32.gmra.mxu0 %v1469
          %v1833 = vpop.f32.mrf.mxu0
          %v1834 = vadd.f32 %v1555, %v1833
          %v1835 = vpop.f32.mrf.mxu0
          %v1836 = vadd.f32 %v1559, %v1835
          %1837 = vmatprep.mubr.f32.mxu0 0.0
          %1838 = vmatmul.mubr.f32.gmra.mxu0 %v1470
          %v1839 = vpop.f32.mrf.mxu0
          %v1840 = vadd.f32 %v1555, %v1839
          %v1841 = vpop.f32.mrf.mxu0
          %v1842 = vadd.f32 %v1559, %v1841
          %1843 = vmatprep.mubr.f32.mxu0 0.0
          %1844 = vmatmul.mubr.f32.gmra.mxu0 %v1471
          %v1845 = vpop.f32.mrf.mxu0
          %v1846 = vadd.f32 %v1555, %v1845
          %v1847 = vpop.f32.mrf.mxu0
          %v1848 = vadd.f32 %v1559, %v1847
          %1849 = vmatprep.mubr.f32.mxu0 0.0
          %1850 = vmatmul.mubr.f32.gmra.mxu0 %v1472
          %v1851 = vpop.f32.mrf.mxu0
          %v1852 = vadd.f32 %v1555, %v1851
          %v1853 = vpop.f32.mrf.mxu0
          %v1854 = vadd.f32 %v1559, %v1853
          %1855 = vmatprep.mubr.f32.mxu0 0.0
          %1856 = vmatmul.mubr.f32.gmra.mxu0 %v1473
          %v1857 = vpop.f32.mrf.mxu0
          %v1858 = vadd.f32 %v1555, %v1857
          %v1859 = vpop.f32.mrf.mxu0
          %v1860 = vadd.f32 %v1559, %v1859
          %1861 = vmatprep.mubr.f32.mxu0 0.0
          %1862 = vmatmul.mubr.f32.gmra.mxu0 %v1474
          %v1863 = vpop.f32.mrf.mxu0
          %v1864 = vadd.f32 %v1555, %v1863
          %v1865 = vpop.f32.mrf.mxu0
          %v1866 = vadd.f32 %v1559, %v1865
          %1867 = vmatprep.mubr.f32.mxu0 0.0
          %1868 = vmatmul.mubr.f32.gmra.mxu0 %v1475
          %v1869 = vpop.f32.mrf.mxu0
          %v1870 = vadd.f32 %v1555, %v1869
          %v1871 = vpop.f32.mrf.mxu0
          %v1872 = vadd.f32 %v1559, %v1871
          %1873 = vmatprep.mubr.f32.mxu0 0.0
          %1874 = vmatmul.mubr.f32.gmra.mxu0 %v1476
          %v1875 = vpop.f32.mrf.mxu0
          %v1876 = vadd.f32 %v1555, %v1875
          %v1877 = vpop.f32.mrf.mxu0
          %v1878 = vadd.f32 %v1559, %v1877
          %1879 = vmatprep.mubr.f32.mxu0 0.0
          %1880 = vmatmul.mubr.f32.gmra.mxu0 %v1477
          %v1881 = vpop.f32.mrf.mxu0
          %v1882 = vadd.f32 %v1555, %v1881
          %v1883 = vpop.f32.mrf.mxu0
          %v1884 = vadd.f32 %v1559, %v1883
          %1885 = vdwg.mxu0
          %1886 = vst [vmem:[%s520] sm:$0xff] %v1631
          %1887 = vst [vmem:[%s520 + $0x8] sm:$0xff] %v1633
          %1888 = vst [vmem:[%s520 + $0x10] sm:$0xff] %v1792
          %1889 = vst [vmem:[%s520 + $0x18] sm:$0xff] %v1794
          %1890 = vst [vmem:[%s520 + $0x20] sm:$0xff] %v1637
          %1891 = vst [vmem:[%s520 + $0x28] sm:$0xff] %v1639
          %1892 = vst [vmem:[%s520 + $0x30] sm:$0xff] %v1798
          %1893 = vst [vmem:[%s520 + $0x38] sm:$0xff] %v1800
          %1894 = vst [vmem:[%s520 + $0x40] sm:$0xff] %v1643
          %1895 = vst [vmem:[%s520 + $0x48] sm:$0xff] %v1645
          %1896 = vst [vmem:[%s520 + $0x50] sm:$0xff] %v1804
          %1897 = vst [vmem:[%s520 + $0x58] sm:$0xff] %v1806
          %1898 = vst [vmem:[%s520 + $0x60] sm:$0xff] %v1649
          %1899 = vst [vmem:[%s520 + $0x68] sm:$0xff] %v1651
          %1900 = vst [vmem:[%s520 + $0x70] sm:$0xff] %v1810
          %1901 = vst [vmem:[%s520 + $0x78] sm:$0xff] %v1812
          %1902 = vst [vmem:[%s520 + $0x80] sm:$0xff] %v1655
          %1903 = vst [vmem:[%s520 + $0x88] sm:$0xff] %v1657
          %1904 = vst [vmem:[%s520 + $0x90] sm:$0xff] %v1816
          %1905 = vst [vmem:[%s520 + $0x98] sm:$0xff] %v1818
          %1906 = vst [vmem:[%s520 + $0xa0] sm:$0xff] %v1661
          %1907 = vst [vmem:[%s520 + $0xa8] sm:$0xff] %v1663
          %1908 = vst [vmem:[%s520 + $0xb0] sm:$0xff] %v1822
          %1909 = vst [vmem:[%s520 + $0xb8] sm:$0xff] %v1824
          %1910 = vst [vmem:[%s520 + $0xc0] sm:$0xff] %v1667
          %1911 = vst [vmem:[%s520 + $0xc8] sm:$0xff] %v1669
          %1912 = vst [vmem:[%s520 + $0xd0] sm:$0xff] %v1828
          %1913 = vst [vmem:[%s520 + $0xd8] sm:$0xff] %v1830
          %1914 = vst [vmem:[%s520 + $0xe0] sm:$0xff] %v1673
          %1915 = vst [vmem:[%s520 + $0xe8] sm:$0xff] %v1675
          %1916 = vst [vmem:[%s520 + $0xf0] sm:$0xff] %v1834
          %1917 = vst [vmem:[%s520 + $0xf8] sm:$0xff] %v1836
          %1918 = vst [vmem:[%s520 + $0x100] sm:$0xff] %v1679
          %1919 = vst [vmem:[%s520 + $0x108] sm:$0xff] %v1681
          %1920 = vst [vmem:[%s520 + $0x110] sm:$0xff] %v1840
          %1921 = vst [vmem:[%s520 + $0x118] sm:$0xff] %v1842
          %1922 = vst [vmem:[%s520 + $0x120] sm:$0xff] %v1685
          %1923 = vst [vmem:[%s520 + $0x128] sm:$0xff] %v1687
          %1924 = vst [vmem:[%s520 + $0x130] sm:$0xff] %v1846
          %1925 = vst [vmem:[%s520 + $0x138] sm:$0xff] %v1848
          %1926 = vst [vmem:[%s520 + $0x140] sm:$0xff] %v1691
          %1927 = vst [vmem:[%s520 + $0x148] sm:$0xff] %v1693
          %1928 = vst [vmem:[%s520 + $0x150] sm:$0xff] %v1852
          %1929 = vst [vmem:[%s520 + $0x158] sm:$0xff] %v1854
          %1930 = vst [vmem:[%s520 + $0x160] sm:$0xff] %v1697
          %1931 = vst [vmem:[%s520 + $0x168] sm:$0xff] %v1699
          %1932 = vst [vmem:[%s520 + $0x170] sm:$0xff] %v1858
          %1933 = vst [vmem:[%s520 + $0x178] sm:$0xff] %v1860
          %1934 = vst [vmem:[%s520 + $0x180] sm:$0xff] %v1703
          %1935 = vst [vmem:[%s520 + $0x188] sm:$0xff] %v1705
          %1936 = vst [vmem:[%s520 + $0x190] sm:$0xff] %v1864
          %1937 = vst [vmem:[%s520 + $0x198] sm:$0xff] %v1866
          %1938 = vst [vmem:[%s520 + $0x1a0] sm:$0xff] %v1709
          %1939 = vst [vmem:[%s520 + $0x1a8] sm:$0xff] %v1711
          %1940 = vst [vmem:[%s520 + $0x1b0] sm:$0xff] %v1870
          %1941 = vst [vmem:[%s520 + $0x1b8] sm:$0xff] %v1872
          %1942 = vst [vmem:[%s520 + $0x1c0] sm:$0xff] %v1715
          %1943 = vst [vmem:[%s520 + $0x1c8] sm:$0xff] %v1717
          %1944 = vst [vmem:[%s520 + $0x1d0] sm:$0xff] %v1876
          %1945 = vst [vmem:[%s520 + $0x1d8] sm:$0xff] %v1878
          %1946 = vst [vmem:[%s520 + $0x1e0] sm:$0xff] %v1721
          %1947 = vst [vmem:[%s520 + $0x1e8] sm:$0xff] %v1723
          %1948 = vst [vmem:[%s520 + $0x1f0] sm:$0xff] %v1882
          %1949 = vst [vmem:[%s520 + $0x1f8] sm:$0xff] %v1884
        $region94: #{ggat_forward.2} parent=81 // pred_fallthru
          _
        %s1950 = smul.u32 16, %s25
        %p1951 = scmp.lt.s32.totalorder %s1950, 31
        %s1952 = scalar_select %p1951, %s1950, 31
        %s1953 = smul.addr %s1952, 8
        %s1954 = scalar_lea.vmem %s7, %s1953
        %s1955 = smul.u32 16, %s25
        %p1956 = scmp.lt.s32.totalorder %s1955, 31
        %s1957 = scalar_select %p1956, %s1955, 31
        %s1958 = smul.addr %s1957, 2
        %s1959 = smul.addr %s1958, 8
        %s1960 = scalar_lea.vmem %s8, %s1959
        %s1961 = smul.u32 16, %s25
        %p1962 = scmp.lt.s32.totalorder %s1961, 31
        %s1963 = scalar_select %p1962, %s1961, 31
        %s1964 = smul.addr %s1963, 4
        %s1965 = smul.addr %s1964, 8
        %s1966 = scalar_lea.vmem %s9, %s1965
        // Predicated region
        $region95: #{ggat_forward.2} parent=81 // pred_check
          %p1967 = pneg %p215
        $region96: #{ggat_forward.2} parent=81 // pred_check_branch
          %1969 = sbr.rel (%p1967) target = $region98
        $region97: #{ggat_forward.2} parent=81 // pred_region
          %s1970 = smul.u32 16, %s25
        $region98: #{ggat_forward.2} parent=81 // pred_fallthru
          _
        // Predicated region
        $region99: #{ggat_forward.2} parent=81 // pred_check
          %p1971 = pneg %p241
        $region100: #{ggat_forward.2} parent=81 // pred_check_branch
          %1973 = sbr.rel (%p1971) target = $region102
        $region101: #{ggat_forward.2} parent=81 // pred_region
          %s1974 = smul.u32 16, %s25
        $region102: #{ggat_forward.2} parent=81 // pred_fallthru
          _
        // Predicated region
        $region103: #{ggat_forward.2} parent=81 // pred_check
          %p1975 = pneg %p267
        $region104: #{ggat_forward.2} parent=81 // pred_check_branch
          %1977 = sbr.rel (%p1975) target = $region106
        $region105: #{ggat_forward.2} parent=81 // pred_region
          %s1978 = smul.u32 16, %s25
        $region106: #{ggat_forward.2} parent=81 // pred_fallthru
          _
      $region82: #{ggat_forward.2} parent=5 // pred_fallthru
        _
      %p1979 = scmp.le.s32.totalorder 2, %s16
      // Predicated region
      $region107: #{ggat_forward.2} parent=5 // pred_check
        %p1980 = pneg %p1979
      $region108: #{ggat_forward.2} parent=5 // pred_check_branch
        %1982 = sbr.rel (%p1980) target = $region110
      $region109: #{ggat_forward.2} parent=5 // pred_region
        %s1983 = ssub.s32 %s16, 2
        // Predicated region
        $region111: #{ggat_forward.2} parent=109 // pred_check
          %p1984 = pneg %p221
        $region112: #{ggat_forward.2} parent=109 // pred_check_branch
          %1986 = sbr.rel (%p1984) target = $region114
        $region113: #{ggat_forward.2} parent=109 // pred_region
          %s1987 = smul.u32 16, %s27
          %p1988 = scmp.lt.s32.totalorder %s1987, 31
          %s1989 = scalar_select %p1988, %s1987, 31
          %s1990 = smul.addr %s1989, 8
          %s1991 = scalar_lea.vmem %s7, %s1990
        $region114: #{ggat_forward.2} parent=109 // pred_fallthru
          _
        // Predicated region
        $region115: #{ggat_forward.2} parent=109 // pred_check
          %p1992 = pneg %p247
        $region116: #{ggat_forward.2} parent=109 // pred_check_branch
          %1994 = sbr.rel (%p1992) target = $region118
        $region117: #{ggat_forward.2} parent=109 // pred_region
          %s1995 = smul.u32 16, %s27
          %p1996 = scmp.lt.s32.totalorder %s1995, 31
          %s1997 = scalar_select %p1996, %s1995, 31
          %s1998 = smul.addr %s1997, 2
          %s1999 = smul.addr %s1998, 8
          %s2000 = scalar_lea.vmem %s8, %s1999
        $region118: #{ggat_forward.2} parent=109 // pred_fallthru
          _
        // Predicated region
        $region119: #{ggat_forward.2} parent=109 // pred_check
          %p2001 = pneg %p273
        $region120: #{ggat_forward.2} parent=109 // pred_check_branch
          %2003 = sbr.rel (%p2001) target = $region122
        $region121: #{ggat_forward.2} parent=109 // pred_region
          %s2004 = smul.u32 16, %s27
          %p2005 = scmp.lt.s32.totalorder %s2004, 31
          %s2006 = scalar_select %p2005, %s2004, 31
          %s2007 = smul.addr %s2006, 4
          %s2008 = smul.addr %s2007, 8
          %s2009 = scalar_lea.vmem %s9, %s2008
        $region122: #{ggat_forward.2} parent=109 // pred_fallthru
          _
      $region110: #{ggat_forward.2} parent=5 // pred_fallthru
        _
    $region6: #{ggat_forward.2} parent=1 // loop_footer
      %s20 = sadd.s32 1, %s16
    $region7: #{ggat_forward.2} parent=1 // loop_footer_branch
      %15 = sbr.rel target = $region3
    $region8: #{ggat_forward.2} parent=1 // loop_exit
      _

// kernel: ggat_forward.3
$region0: #{ggat_forward.3}
  #allocation0 [shape = 'u32[]', space=smem, size = 0x4, offset = 0x4, fixed_abs, tag = 'smem constant byte address 0x4 - core index']
  #allocation1 [shape = 'u32[144,128]{1,0:T(1,128)}', space=vmem, size = 0x12000, scoped, tag = 'internal scratch']
  #allocation2 [shape = 'f32[128,1]{1,0:T(8,128)}', space=vmem, size = 0x10000, scoped, tag = 'scratch operand']
  #allocation3 [shape = 'f32[128,1]{1,0:T(8,128)}', space=vmem, size = 0x10000, scoped, tag = 'scratch operand']
  #allocation4 [shape = 'f32[128,128]{1,0:T(8,128)}', space=vmem, size = 0x10000, scoped, tag = 'scratch operand']
  #allocation5 [shape = 'f32[128,128]{1,0:T(8,128)}', space=vmem, size = 0x10000, scoped, tag = 'scratch operand']
  #allocation6 [shape = 'f32[128,128]{1,0:T(8,128)}', space=vmem, size = 0x10000, scoped, tag = 'scratch operand']
  %s0 = inlined_call_operand.vmem [shape: f32[256,512], index: 0, kind: input, shape index: {}, may-alias: {0,1}]
  %s1 = inlined_call_operand.vmem [shape: f32[256,512], index: 1, kind: input, shape index: {}, may-alias: {0,1}]
  %s2 = inlined_call_operand.vmem [shape: f32[256,256], index: 2, kind: input, shape index: {}]
  %s3 = inlined_call_operand.vmem [shape: f32[2,256,256], index: 3, kind: input, shape index: {}]
  %s4 = inlined_call_operand.vmem [shape: f32[256,128], index: 4, kind: input, shape index: {}]
  %s5 = inlined_call_operand.vmem [shape: f32[2,128,128], index: 5, kind: input, shape index: {}]
  %s6 = inlined_call_operand.vmem [shape: f32[1,128], index: 6, kind: input, shape index: {}]
  %s7 = inlined_call_operand.vmem [shape: f32[2,2,128], index: 7, kind: input, shape index: {}]
  %s8 = inlined_call_operand.vmem [shape: f32[256,128], index: 8, kind: output, shape index: {}]
  %s9 = sld [smem:[#allocation0]]
  $region233: #{ggat_forward.3} parent=0
    _
  %s11 = ssub.s32 1, %s9
  %s12 = scalar_select 0, %s11, %s9
  $region1: #{ggat_forward.3} parent=0
    #allocation7 [shape = 'u8[131072]{0}', space=vmem, size = 0x20000, scoped, tag = 'input window, operand 0']
    #allocation8 [shape = 'u8[131072]{0}', space=vmem, size = 0x20000, scoped, tag = 'input window, operand 1']
    #allocation9 [shape = 'u8[131072]{0}', space=vmem, size = 0x20000, scoped, tag = 'input window, operand 2']
    #allocation10 [shape = 'u8[131072]{0}', space=vmem, size = 0x20000, scoped, tag = 'input window, operand 3']
    loop: start=0, step=1, limit=10
    $region2: #{ggat_forward.3} parent=1 // loop_pre_header
      _
    $region3: #{ggat_forward.3} parent=1 // loop_header
      %s14 = sphi 0, %s18
      %p15 = scmp.ge.s32.totalorder %s14, 10
      %s21 = sphi 0, %s40
      %s22 = sphi 0, %s36
      %s23 = sphi 0, %s32
      %s24 = sphi 0, %s21
      %s25 = sphi 0, %s22
      %s26 = sphi 0, %s23
      %s27 = sphi 0, %s24
      %s28 = sphi 0, %s25
      %s29 = sphi 0, %s26
      %s47 = sphi 0, %s49
      %s50 = sphi 0, %s47
      %s51 = sphi 0, %s50
      %s67 = sphi 0, %s51
      %s79 = sphi 0, %s81
      %s82 = sphi 0, %s79
      %s83 = sphi 0, %s82
      %s99 = sphi 0, %s83
      %s107 = sphi 0, %s109
      %s110 = sphi 0, %s107
      %s111 = sphi 0, %s110
      %s127 = sphi 0, %s111
      %s137 = sphi 0, %s139
      %s140 = sphi 0, %s137
      %s141 = sphi 0, %s140
      %s157 = sphi 0, %s141
      %s163 = sphi 0, %s165
      %s166 = sphi 0, %s163
      %s167 = sphi 0, %s166
      %s183 = sphi 0, %s167
      %s189 = sphi 0, %s191
      %s192 = sphi 0, %s189
      %s193 = sphi 0, %s192
      %s209 = sphi 0, %s193
      %s213 = sphi 0, %s213
      %s215 = sphi 0, %s213
      %s216 = sphi 0, %s215
      %s230 = sphi 0, %s216
      %s236 = sphi 0, %s238
      %s239 = sphi 0, %s236
      %s240 = sphi 0, %s239
      %s256 = sphi 0, %s240
      %s262 = sphi 0, %s264
      %s265 = sphi 0, %s262
      %s266 = sphi 0, %s265
      %s282 = sphi 0, %s266
    $region4: #{ggat_forward.3} parent=1 // loop_header_branch
      %17 = sbr.rel (%p15) target = $region8
    $region5: #{ggat_forward.3} parent=1 // loop_body
      %s19 = ssub.s32 %s14, 1
      %s20 = ssub.s32 %s14, 2
      %s30 = sadd.s32 1, %s23
      %p31 = scmp.ge.s32.totalorder %s30, 2
      %s32 = scalar_select %p31, 0, %s30
      %s33 = sadd.s32 1, %s22
      %s34 = scalar_select %p31, %s33, %s22
      %p35 = scmp.ge.s32.totalorder %s34, 2
      %s36 = scalar_select %p35, 0, %s34
      %s37 = sadd.s32 1, %s21
      %s38 = scalar_select %p35, %s37, %s21
      %p39 = scmp.ge.s32.totalorder %s38, 2
      %s40 = scalar_select %p39, 0, %s38
      %s41 = smul.u32 %s22, 2
      %s42 = smul.u32 %s36, 2
      %s43 = ssub.s32 %s21, %s40
      %s44 = ssub.s32 %s41, %s42
      %s45 = sor.u32 %s43, %s44
      %p46 = scmp.eq.s32.totalorder %s45, 0
      %s48 = sadd.s32 %s47, 1
      %s49 = scalar_select %p46, %s47, %s48
      %p52 = pneg %p46
      %p53 = scmp.eq.s32.totalorder %s14, 7
      %p54 = por %p52, %p53
      %p55 = scmp.ne.s32.totalorder %s47, %s50
      %p56 = scmp.eq.s32.totalorder %s14, 0
      %p57 = por %p55, %p56
      %p58 = scmp.ne.s32.totalorder %s47, %s50
      %p59 = scmp.eq.s32.totalorder %s19, 7
      %p60 = por %p58, %p59
      %p61 = scmp.ne.s32.totalorder %s50, %s51
      %p62 = scmp.eq.s32.totalorder %s19, 0
      %p63 = por %p61, %p62
      %p64 = scmp.ne.s32.totalorder %s50, %s51
      %p65 = scmp.eq.s32.totalorder %s20, 7
      %p66 = por %p64, %p65
      %p68 = scmp.ne.s32.totalorder %s51, %s67
      %p69 = scmp.eq.s32.totalorder %s20, 0
      %p70 = por %p68, %p69
      %s71 = smul.u32 %s22, 2
      %s72 = sadd.s32 %s71, 1
      %s73 = smul.u32 %s36, 2
      %s74 = sadd.s32 %s73, 1
      %s75 = ssub.s32 %s23, %s32
      %s76 = ssub.s32 %s72, %s74
      %s77 = sor.u32 %s75, %s76
      %p78 = scmp.eq.s32.totalorder %s77, 0
      %s80 = sadd.s32 %s79, 1
      %s81 = scalar_select %p78, %s79, %s80
      %p84 = pneg %p78
      %p85 = scmp.eq.s32.totalorder %s14, 7
      %p86 = por %p84, %p85
      %p87 = scmp.ne.s32.totalorder %s79, %s82
      %p88 = scmp.eq.s32.totalorder %s14, 0
      %p89 = por %p87, %p88
      %p90 = scmp.ne.s32.totalorder %s79, %s82
      %p91 = scmp.eq.s32.totalorder %s19, 7
      %p92 = por %p90, %p91
      %p93 = scmp.ne.s32.totalorder %s82, %s83
      %p94 = scmp.eq.s32.totalorder %s19, 0
      %p95 = por %p93, %p94
      %p96 = scmp.ne.s32.totalorder %s82, %s83
      %p97 = scmp.eq.s32.totalorder %s20, 7
      %p98 = por %p96, %p97
      %p100 = scmp.ne.s32.totalorder %s83, %s99
      %p101 = scmp.eq.s32.totalorder %s20, 0
      %p102 = por %p100, %p101
      %s103 = ssub.s32 %s23, %s32
      %s104 = ssub.s32 %s22, %s36
      %s105 = sor.u32 %s103, %s104
      %p106 = scmp.eq.s32.totalorder %s105, 0
      %s108 = sadd.s32 %s107, 1
      %s109 = scalar_select %p106, %s107, %s108
      %p112 = pneg %p106
      %p113 = scmp.eq.s32.totalorder %s14, 7
      %p114 = por %p112, %p113
      %p115 = scmp.ne.s32.totalorder %s107, %s110
      %p116 = scmp.eq.s32.totalorder %s14, 0
      %p117 = por %p115, %p116
      %p118 = scmp.ne.s32.totalorder %s107, %s110
      %p119 = scmp.eq.s32.totalorder %s19, 7
      %p120 = por %p118, %p119
      %p121 = scmp.ne.s32.totalorder %s110, %s111
      %p122 = scmp.eq.s32.totalorder %s19, 0
      %p123 = por %p121, %p122
      %p124 = scmp.ne.s32.totalorder %s110, %s111
      %p125 = scmp.eq.s32.totalorder %s20, 7
      %p126 = por %p124, %p125
      %p128 = scmp.ne.s32.totalorder %s111, %s127
      %p129 = scmp.eq.s32.totalorder %s20, 0
      %p130 = por %p128, %p129
      %s131 = ssub.s32 %s22, %s36
      %s132 = ssub.s32 %s21, %s40
      %s133 = sor.u32 %s131, %s132
      %s134 = ssub.s32 %s23, %s32
      %s135 = sor.u32 %s133, %s134
      %p136 = scmp.eq.s32.totalorder %s135, 0
      %s138 = sadd.s32 %s137, 1
      %s139 = scalar_select %p136, %s137, %s138
      %p142 = pneg %p136
      %p143 = scmp.eq.s32.totalorder %s14, 7
      %p144 = por %p142, %p143
      %p145 = scmp.ne.s32.totalorder %s137, %s140
      %p146 = scmp.eq.s32.totalorder %s14, 0
      %p147 = por %p145, %p146
      %p148 = scmp.ne.s32.totalorder %s137, %s140
      %p149 = scmp.eq.s32.totalorder %s19, 7
      %p150 = por %p148, %p149
      %p151 = scmp.ne.s32.totalorder %s140, %s141
      %p152 = scmp.eq.s32.totalorder %s19, 0
      %p153 = por %p151, %p152
      %p154 = scmp.ne.s32.totalorder %s140, %s141
      %p155 = scmp.eq.s32.totalorder %s20, 7
      %p156 = por %p154, %p155
      %p158 = scmp.ne.s32.totalorder %s141, %s157
      %p159 = scmp.eq.s32.totalorder %s20, 0
      %p160 = por %p158, %p159
      %s161 = ssub.s32 %s21, %s40
      %p162 = scmp.eq.s32.totalorder %s161, 0
      %s164 = sadd.s32 %s163, 1
      %s165 = scalar_select %p162, %s163, %s164
      %p168 = pneg %p162
      %p169 = scmp.eq.s32.totalorder %s14, 7
      %p170 = por %p168, %p169
      %p171 = scmp.ne.s32.totalorder %s163, %s166
      %p172 = scmp.eq.s32.totalorder %s14, 0
      %p173 = por %p171, %p172
      %p174 = scmp.ne.s32.totalorder %s163, %s166
      %p175 = scmp.eq.s32.totalorder %s19, 7
      %p176 = por %p174, %p175
      %p177 = scmp.ne.s32.totalorder %s166, %s167
      %p178 = scmp.eq.s32.totalorder %s19, 0
      %p179 = por %p177, %p178
      %p180 = scmp.ne.s32.totalorder %s166, %s167
      %p181 = scmp.eq.s32.totalorder %s20, 7
      %p182 = por %p180, %p181
      %p184 = scmp.ne.s32.totalorder %s167, %s183
      %p185 = scmp.eq.s32.totalorder %s20, 0
      %p186 = por %p184, %p185
      %s187 = ssub.s32 %s22, %s36
      %p188 = scmp.eq.s32.totalorder %s187, 0
      %s190 = sadd.s32 %s189, 1
      %s191 = scalar_select %p188, %s189, %s190
      %p194 = pneg %p188
      %p195 = scmp.eq.s32.totalorder %s14, 7
      %p196 = por %p194, %p195
      %p197 = scmp.ne.s32.totalorder %s189, %s192
      %p198 = scmp.eq.s32.totalorder %s14, 0
      %p199 = por %p197, %p198
      %p200 = scmp.ne.s32.totalorder %s189, %s192
      %p201 = scmp.eq.s32.totalorder %s19, 7
      %p202 = por %p200, %p201
      %p203 = scmp.ne.s32.totalorder %s192, %s193
      %p204 = scmp.eq.s32.totalorder %s19, 0
      %p205 = por %p203, %p204
      %p206 = scmp.ne.s32.totalorder %s192, %s193
      %p207 = scmp.eq.s32.totalorder %s20, 7
      %p208 = por %p206, %p207
      %p210 = scmp.ne.s32.totalorder %s193, %s209
      %p211 = scmp.eq.s32.totalorder %s20, 0
      %p212 = por %p210, %p211
      %s214 = sadd.s32 %s213, 1
      %p217 = scmp.eq.s32.totalorder %s14, 7
      %p218 = scmp.ne.s32.totalorder %s213, %s215
      %p219 = scmp.eq.s32.totalorder %s14, 0
      %p220 = por %p218, %p219
      %p221 = scmp.ne.s32.totalorder %s213, %s215
      %p222 = scmp.eq.s32.totalorder %s19, 7
      %p223 = por %p221, %p222
      %p224 = scmp.ne.s32.totalorder %s215, %s216
      %p225 = scmp.eq.s32.totalorder %s19, 0
      %p226 = por %p224, %p225
      %p227 = scmp.ne.s32.totalorder %s215, %s216
      %p228 = scmp.eq.s32.totalorder %s20, 7
      %p229 = por %p227, %p228
      %p231 = scmp.ne.s32.totalorder %s216, %s230
      %p232 = scmp.eq.s32.totalorder %s20, 0
      %p233 = por %p231, %p232
      %s234 = ssub.s32 %s22, %s36
      %p235 = scmp.eq.s32.totalorder %s234, 0
      %s237 = sadd.s32 %s236, 1
      %s238 = scalar_select %p235, %s236, %s237
      %p241 = pneg %p235
      %p242 = scmp.eq.s32.totalorder %s14, 7
      %p243 = por %p241, %p242
      %p244 = scmp.ne.s32.totalorder %s236, %s239
      %p245 = scmp.eq.s32.totalorder %s14, 0
      %p246 = por %p244, %p245
      %p247 = scmp.ne.s32.totalorder %s236, %s239
      %p248 = scmp.eq.s32.totalorder %s19, 7
      %p249 = por %p247, %p248
      %p250 = scmp.ne.s32.totalorder %s239, %s240
      %p251 = scmp.eq.s32.totalorder %s19, 0
      %p252 = por %p250, %p251
      %p253 = scmp.ne.s32.totalorder %s239, %s240
      %p254 = scmp.eq.s32.totalorder %s20, 7
      %p255 = por %p253, %p254
      %p257 = scmp.ne.s32.totalorder %s240, %s256
      %p258 = scmp.eq.s32.totalorder %s20, 0
      %p259 = por %p257, %p258
      %s260 = ssub.s32 %s21, %s40
      %p261 = scmp.eq.s32.totalorder %s260, 0
      %s263 = sadd.s32 %s262, 1
      %s264 = scalar_select %p261, %s262, %s263
      %p267 = pneg %p261
      %p268 = scmp.eq.s32.totalorder %s14, 7
      %p269 = por %p267, %p268
      %p270 = scmp.ne.s32.totalorder %s262, %s265
      %p271 = scmp.eq.s32.totalorder %s14, 0
      %p272 = por %p270, %p271
      %p273 = scmp.ne.s32.totalorder %s262, %s265
      %p274 = scmp.eq.s32.totalorder %s19, 7
      %p275 = por %p273, %p274
      %p276 = scmp.ne.s32.totalorder %s265, %s266
      %p277 = scmp.eq.s32.totalorder %s19, 0
      %p278 = por %p276, %p277
      %p279 = scmp.ne.s32.totalorder %s265, %s266
      %p280 = scmp.eq.s32.totalorder %s20, 7
      %p281 = por %p279, %p280
      %p283 = scmp.ne.s32.totalorder %s266, %s282
      %p284 = scmp.eq.s32.totalorder %s20, 0
      %p285 = por %p283, %p284
      %p286 = scmp.le.s32.totalorder 1, %s14
      %p287 = scmp.lt.s32.totalorder %s14, 9
      %p288 = pnand %p286, %p287
      %p289 = pneg %p288
      // Predicated region
      $region9: #{ggat_forward.3} parent=5 // pred_check
        _
      $region10: #{ggat_forward.3} parent=5 // pred_check_branch
        %291 = sbr.rel (%p288) target = $region12
      $region11: #{ggat_forward.3} parent=5 // pred_region
        %s292 = ssub.s32 %s14, 1
        // Predicated region
        $region13: #{ggat_forward.3} parent=11 // pred_check
          %p293 = pneg %p226
        $region14: #{ggat_forward.3} parent=11 // pred_check_branch
          %295 = sbr.rel (%p293) target = $region16
        $region15: #{ggat_forward.3} parent=11 // pred_region
          _
        $region16: #{ggat_forward.3} parent=11 // pred_fallthru
          _
      $region12: #{ggat_forward.3} parent=5 // pred_fallthru
        _
      %p296 = scmp.lt.s32.totalorder %s14, 8
      // Predicated region
      $region17: #{ggat_forward.3} parent=5 // pred_check
        %p297 = pneg %p296
      $region18: #{ggat_forward.3} parent=5 // pred_check_branch
        %299 = sbr.rel (%p297) target = $region20
      $region19: #{ggat_forward.3} parent=5 // pred_region
        // Predicated region
        $region21: #{ggat_forward.3} parent=19 // pred_check
          %p300 = pneg %p57
        $region22: #{ggat_forward.3} parent=19 // pred_check_branch
          %302 = sbr.rel (%p300) target = $region24
        $region23: #{ggat_forward.3} parent=19 // pred_region
          %s303 = sand.u32 %s47, 1
          %s304 = sand.u32 %s47, 1
          %s305 = smul.addr %s304, 128
          %s306 = scalar_lea.vmem [#allocation7], %s305
          %s307 = smul.u32 %s22, 2
          %s308 = smul.u32 16, %s21
          %s309 = smul.addr %s308, 4
          %s310 = sadd.s32 %s307, %s309
          %s311 = smul.addr %s310, 8
          %s312 = scalar_lea.vmem %s0, %s311
          // Predicated region
          $region25: #{ggat_forward.3} parent=23 // pred_check
            _
          $region26: #{ggat_forward.3} parent=23 // pred_check_branch
            %314 = sbr.rel (0) target = $region28
          $region27: #{ggat_forward.3} parent=23 // pred_region
            // Predicated region
            $region29: #{ggat_forward.3} parent=27 // pred_check
              _
            $region30: #{ggat_forward.3} parent=27 // pred_check_branch
              %316 = sbr.rel (0) target = $region32
            $region31: #{ggat_forward.3} parent=27 // pred_region
              // Predicated region
              $region44: #{ggat_forward.3} parent=31 // pred_check
                _
              $region45: #{ggat_forward.3} parent=31 // pred_check_branch
                %362 = sbr.rel (0) target = $region47
              $region46: #{ggat_forward.3} parent=31 // pred_region
                loop: start=0, step=1, limit=1
                $region48: #{ggat_forward.3} parent=46 // loop_pre_header
                  _
                $region49: #{ggat_forward.3} parent=46 // loop_header
                  %s364 = sphi 0, %s368
                  %p365 = scmp.ge.s32.totalorder %s364, 1
                  %s369 = sphi %s312, %s312
                  %s370 = sphi %s306, %s306
                $region50: #{ggat_forward.3} parent=46 // loop_header_branch
                  %367 = sbr.rel (%p365) target = $region54
                $region51: #{ggat_forward.3} parent=46 // loop_body
                  %v371 = vld [vmem:[%s369] sm:$0xff]
                  %372 = vst [vmem:[%s370] sm:$0xff] %v371
                  %v373 = vld [vmem:[%s369 + $0x20] sm:$0xff]
                  %374 = vst [vmem:[%s370 + $0x8] sm:$0xff] %v373
                  %v375 = vld [vmem:[%s369 + $0x40] sm:$0xff]
                  %376 = vst [vmem:[%s370 + $0x10] sm:$0xff] %v375
                  %v377 = vld [vmem:[%s369 + $0x60] sm:$0xff]
                  %378 = vst [vmem:[%s370 + $0x18] sm:$0xff] %v377
                  %v379 = vld [vmem:[%s369 + $0x80] sm:$0xff]
                  %380 = vst [vmem:[%s370 + $0x20] sm:$0xff] %v379
                  %v381 = vld [vmem:[%s369 + $0xa0] sm:$0xff]
                  %382 = vst [vmem:[%s370 + $0x28] sm:$0xff] %v381
                  %v383 = vld [vmem:[%s369 + $0xc0] sm:$0xff]
                  %384 = vst [vmem:[%s370 + $0x30] sm:$0xff] %v383
                  %v385 = vld [vmem:[%s369 + $0xe0] sm:$0xff]
                  %386 = vst [vmem:[%s370 + $0x38] sm:$0xff] %v385
                  %v387 = vld [vmem:[%s369 + $0x100] sm:$0xff]
                  %388 = vst [vmem:[%s370 + $0x40] sm:$0xff] %v387
                  %v389 = vld [vmem:[%s369 + $0x120] sm:$0xff]
                  %390 = vst [vmem:[%s370 + $0x48] sm:$0xff] %v389
                  %v391 = vld [vmem:[%s369 + $0x140] sm:$0xff]
                  %392 = vst [vmem:[%s370 + $0x50] sm:$0xff] %v391
                  %v393 = vld [vmem:[%s369 + $0x160] sm:$0xff]
                  %394 = vst [vmem:[%s370 + $0x58] sm:$0xff] %v393
                  %v395 = vld [vmem:[%s369 + $0x180] sm:$0xff]
                  %396 = vst [vmem:[%s370 + $0x60] sm:$0xff] %v395
                  %v397 = vld [vmem:[%s369 + $0x1a0] sm:$0xff]
                  %398 = vst [vmem:[%s370 + $0x68] sm:$0xff] %v397
                  %v399 = vld [vmem:[%s369 + $0x1c0] sm:$0xff]
                  %400 = vst [vmem:[%s370 + $0x70] sm:$0xff] %v399
                  %v401 = vld [vmem:[%s369 + $0x1e0] sm:$0xff]
                  %402 = vst [vmem:[%s370 + $0x78] sm:$0xff] %v401
                $region52: #{ggat_forward.3} parent=46 // loop_footer
                  %s368 = sadd.s32 1, %s364
                $region53: #{ggat_forward.3} parent=46 // loop_footer_branch
                  %363 = sbr.rel target = $region49
                $region54: #{ggat_forward.3} parent=46 // loop_exit
                  _
              $region47: #{ggat_forward.3} parent=31 // pred_fallthru
                _
              // Predicated region
              $region55: #{ggat_forward.3} parent=31 // pred_check
                _
              $region56: #{ggat_forward.3} parent=31 // pred_check_branch
                %404 = sbr.rel target = $region58
              $region57: #{ggat_forward.3} parent=31 // pred_region
                _
              $region58: #{ggat_forward.3} parent=31 // pred_fallthru
                _
            $region32: #{ggat_forward.3} parent=27 // pred_fallthru
              _
            // Predicated region
            $region33: #{ggat_forward.3} parent=27 // pred_check
              _
            $region34: #{ggat_forward.3} parent=27 // pred_check_branch
              %318 = sbr.rel target = $region36
            $region35: #{ggat_forward.3} parent=27 // pred_region
              %s320 = ssub.s32 256, 1
              loop: start=0, step=1, limit=1
              $region37: #{ggat_forward.3} parent=35 // loop_pre_header
                _
              $region38: #{ggat_forward.3} parent=35 // loop_header
                %s322 = sphi 0, %s326
                %p323 = scmp.ge.s32.totalorder %s322, 1
                %s327 = sphi %s312, %s312
                %s328 = sphi %s306, %s306
              $region39: #{ggat_forward.3} parent=35 // loop_header_branch
                %325 = sbr.rel (%p323) target = $region43
              $region40: #{ggat_forward.3} parent=35 // loop_body
                %v329 = vld [vmem:[%s327] sm:%s320]
                %330 = vst [vmem:[%s328] sm:%s320] %v329
                %v331 = vld [vmem:[%s327 + $0x20] sm:%s320]
                %332 = vst [vmem:[%s328 + $0x8] sm:%s320] %v331
                %v333 = vld [vmem:[%s327 + $0x40] sm:%s320]
                %334 = vst [vmem:[%s328 + $0x10] sm:%s320] %v333
                %v335 = vld [vmem:[%s327 + $0x60] sm:%s320]
                %336 = vst [vmem:[%s328 + $0x18] sm:%s320] %v335
                %v337 = vld [vmem:[%s327 + $0x80] sm:%s320]
                %338 = vst [vmem:[%s328 + $0x20] sm:%s320] %v337
                %v339 = vld [vmem:[%s327 + $0xa0] sm:%s320]
                %340 = vst [vmem:[%s328 + $0x28] sm:%s320] %v339
                %v341 = vld [vmem:[%s327 + $0xc0] sm:%s320]
                %342 = vst [vmem:[%s328 + $0x30] sm:%s320] %v341
                %v343 = vld [vmem:[%s327 + $0xe0] sm:%s320]
                %344 = vst [vmem:[%s328 + $0x38] sm:%s320] %v343
                %v345 = vld [vmem:[%s327 + $0x100] sm:%s320]
                %346 = vst [vmem:[%s328 + $0x40] sm:%s320] %v345
                %v347 = vld [vmem:[%s327 + $0x120] sm:%s320]
                %348 = vst [vmem:[%s328 + $0x48] sm:%s320] %v347
                %v349 = vld [vmem:[%s327 + $0x140] sm:%s320]
                %350 = vst [vmem:[%s328 + $0x50] sm:%s320] %v349
                %v351 = vld [vmem:[%s327 + $0x160] sm:%s320]
                %352 = vst [vmem:[%s328 + $0x58] sm:%s320] %v351
                %v353 = vld [vmem:[%s327 + $0x180] sm:%s320]
                %354 = vst [vmem:[%s328 + $0x60] sm:%s320] %v353
                %v355 = vld [vmem:[%s327 + $0x1a0] sm:%s320]
                %356 = vst [vmem:[%s328 + $0x68] sm:%s320] %v355
                %v357 = vld [vmem:[%s327 + $0x1c0] sm:%s320]
                %358 = vst [vmem:[%s328 + $0x70] sm:%s320] %v357
                %v359 = vld [vmem:[%s327 + $0x1e0] sm:%s320]
                %360 = vst [vmem:[%s328 + $0x78] sm:%s320] %v359
              $region41: #{ggat_forward.3} parent=35 // loop_footer
                %s326 = sadd.s32 1, %s322
              $region42: #{ggat_forward.3} parent=35 // loop_footer_branch
                %321 = sbr.rel target = $region38
              $region43: #{ggat_forward.3} parent=35 // loop_exit
                _
            $region36: #{ggat_forward.3} parent=27 // pred_fallthru
              _
          $region28: #{ggat_forward.3} parent=23 // pred_fallthru
            _
          %405 = vnop
        $region24: #{ggat_forward.3} parent=19 // pred_fallthru
          _
        // Predicated region
        $region59: #{ggat_forward.3} parent=19 // pred_check
          %p406 = pneg %p89
        $region60: #{ggat_forward.3} parent=19 // pred_check_branch
          %408 = sbr.rel (%p406) target = $region62
        $region61: #{ggat_forward.3} parent=19 // pred_region
          %s409 = sand.u32 %s79, 1
          %s410 = sand.u32 %s79, 1
          %s411 = smul.addr %s410, 128
          %s412 = scalar_lea.vmem [#allocation8], %s411
          %s413 = smul.u32 %s22, 2
          %s414 = sadd.s32 %s413, 1
          %s415 = smul.u32 16, %s23
          %s416 = smul.addr %s415, 4
          %s417 = sadd.s32 %s414, %s416
          %s418 = smul.addr %s417, 8
          %s419 = scalar_lea.vmem %s1, %s418
          // Predicated region
          $region63: #{ggat_forward.3} parent=61 // pred_check
            _
          $region64: #{ggat_forward.3} parent=61 // pred_check_branch
            %421 = sbr.rel (0) target = $region66
          $region65: #{ggat_forward.3} parent=61 // pred_region
            // Predicated region
            $region67: #{ggat_forward.3} parent=65 // pred_check
              _
            $region68: #{ggat_forward.3} parent=65 // pred_check_branch
              %423 = sbr.rel (0) target = $region70
            $region69: #{ggat_forward.3} parent=65 // pred_region
              // Predicated region
              $region82: #{ggat_forward.3} parent=69 // pred_check
                _
              $region83: #{ggat_forward.3} parent=69 // pred_check_branch
                %469 = sbr.rel (0) target = $region85
              $region84: #{ggat_forward.3} parent=69 // pred_region
                loop: start=0, step=1, limit=1
                $region86: #{ggat_forward.3} parent=84 // loop_pre_header
                  _
                $region87: #{ggat_forward.3} parent=84 // loop_header
                  %s471 = sphi 0, %s475
                  %p472 = scmp.ge.s32.totalorder %s471, 1
                  %s476 = sphi %s419, %s419
                  %s477 = sphi %s412, %s412
                $region88: #{ggat_forward.3} parent=84 // loop_header_branch
                  %474 = sbr.rel (%p472) target = $region92
                $region89: #{ggat_forward.3} parent=84 // loop_body
                  %v478 = vld [vmem:[%s476] sm:$0xff]
                  %479 = vst [vmem:[%s477] sm:$0xff] %v478
                  %v480 = vld [vmem:[%s476 + $0x20] sm:$0xff]
                  %481 = vst [vmem:[%s477 + $0x8] sm:$0xff] %v480
                  %v482 = vld [vmem:[%s476 + $0x40] sm:$0xff]
                  %483 = vst [vmem:[%s477 + $0x10] sm:$0xff] %v482
                  %v484 = vld [vmem:[%s476 + $0x60] sm:$0xff]
                  %485 = vst [vmem:[%s477 + $0x18] sm:$0xff] %v484
                  %v486 = vld [vmem:[%s476 + $0x80] sm:$0xff]
                  %487 = vst [vmem:[%s477 + $0x20] sm:$0xff] %v486
                  %v488 = vld [vmem:[%s476 + $0xa0] sm:$0xff]
                  %489 = vst [vmem:[%s477 + $0x28] sm:$0xff] %v488
                  %v490 = vld [vmem:[%s476 + $0xc0] sm:$0xff]
                  %491 = vst [vmem:[%s477 + $0x30] sm:$0xff] %v490
                  %v492 = vld [vmem:[%s476 + $0xe0] sm:$0xff]
                  %493 = vst [vmem:[%s477 + $0x38] sm:$0xff] %v492
                  %v494 = vld [vmem:[%s476 + $0x100] sm:$0xff]
                  %495 = vst [vmem:[%s477 + $0x40] sm:$0xff] %v494
                  %v496 = vld [vmem:[%s476 + $0x120] sm:$0xff]
                  %497 = vst [vmem:[%s477 + $0x48] sm:$0xff] %v496
                  %v498 = vld [vmem:[%s476 + $0x140] sm:$0xff]
                  %499 = vst [vmem:[%s477 + $0x50] sm:$0xff] %v498
                  %v500 = vld [vmem:[%s476 + $0x160] sm:$0xff]
                  %501 = vst [vmem:[%s477 + $0x58] sm:$0xff] %v500
                  %v502 = vld [vmem:[%s476 + $0x180] sm:$0xff]
                  %503 = vst [vmem:[%s477 + $0x60] sm:$0xff] %v502
                  %v504 = vld [vmem:[%s476 + $0x1a0] sm:$0xff]
                  %505 = vst [vmem:[%s477 + $0x68] sm:$0xff] %v504
                  %v506 = vld [vmem:[%s476 + $0x1c0] sm:$0xff]
                  %507 = vst [vmem:[%s477 + $0x70] sm:$0xff] %v506
                  %v508 = vld [vmem:[%s476 + $0x1e0] sm:$0xff]
                  %509 = vst [vmem:[%s477 + $0x78] sm:$0xff] %v508
                $region90: #{ggat_forward.3} parent=84 // loop_footer
                  %s475 = sadd.s32 1, %s471
                $region91: #{ggat_forward.3} parent=84 // loop_footer_branch
                  %470 = sbr.rel target = $region87
                $region92: #{ggat_forward.3} parent=84 // loop_exit
                  _
              $region85: #{ggat_forward.3} parent=69 // pred_fallthru
                _
              // Predicated region
              $region93: #{ggat_forward.3} parent=69 // pred_check
                _
              $region94: #{ggat_forward.3} parent=69 // pred_check_branch
                %511 = sbr.rel target = $region96
              $region95: #{ggat_forward.3} parent=69 // pred_region
                _
              $region96: #{ggat_forward.3} parent=69 // pred_fallthru
                _
            $region70: #{ggat_forward.3} parent=65 // pred_fallthru
              _
            // Predicated region
            $region71: #{ggat_forward.3} parent=65 // pred_check
              _
            $region72: #{ggat_forward.3} parent=65 // pred_check_branch
              %425 = sbr.rel target = $region74
            $region73: #{ggat_forward.3} parent=65 // pred_region
              %s427 = ssub.s32 256, 1
              loop: start=0, step=1, limit=1
              $region75: #{ggat_forward.3} parent=73 // loop_pre_header
                _
              $region76: #{ggat_forward.3} parent=73 // loop_header
                %s429 = sphi 0, %s433
                %p430 = scmp.ge.s32.totalorder %s429, 1
                %s434 = sphi %s419, %s419
                %s435 = sphi %s412, %s412
              $region77: #{ggat_forward.3} parent=73 // loop_header_branch
                %432 = sbr.rel (%p430) target = $region81
              $region78: #{ggat_forward.3} parent=73 // loop_body
                %v436 = vld [vmem:[%s434] sm:%s427]
                %437 = vst [vmem:[%s435] sm:%s427] %v436
                %v438 = vld [vmem:[%s434 + $0x20] sm:%s427]
                %439 = vst [vmem:[%s435 + $0x8] sm:%s427] %v438
                %v440 = vld [vmem:[%s434 + $0x40] sm:%s427]
                %441 = vst [vmem:[%s435 + $0x10] sm:%s427] %v440
                %v442 = vld [vmem:[%s434 + $0x60] sm:%s427]
                %443 = vst [vmem:[%s435 + $0x18] sm:%s427] %v442
                %v444 = vld [vmem:[%s434 + $0x80] sm:%s427]
                %445 = vst [vmem:[%s435 + $0x20] sm:%s427] %v444
                %v446 = vld [vmem:[%s434 + $0xa0] sm:%s427]
                %447 = vst [vmem:[%s435 + $0x28] sm:%s427] %v446
                %v448 = vld [vmem:[%s434 + $0xc0] sm:%s427]
                %449 = vst [vmem:[%s435 + $0x30] sm:%s427] %v448
                %v450 = vld [vmem:[%s434 + $0xe0] sm:%s427]
                %451 = vst [vmem:[%s435 + $0x38] sm:%s427] %v450
                %v452 = vld [vmem:[%s434 + $0x100] sm:%s427]
                %453 = vst [vmem:[%s435 + $0x40] sm:%s427] %v452
                %v454 = vld [vmem:[%s434 + $0x120] sm:%s427]
                %455 = vst [vmem:[%s435 + $0x48] sm:%s427] %v454
                %v456 = vld [vmem:[%s434 + $0x140] sm:%s427]
                %457 = vst [vmem:[%s435 + $0x50] sm:%s427] %v456
                %v458 = vld [vmem:[%s434 + $0x160] sm:%s427]
                %459 = vst [vmem:[%s435 + $0x58] sm:%s427] %v458
                %v460 = vld [vmem:[%s434 + $0x180] sm:%s427]
                %461 = vst [vmem:[%s435 + $0x60] sm:%s427] %v460
                %v462 = vld [vmem:[%s434 + $0x1a0] sm:%s427]
                %463 = vst [vmem:[%s435 + $0x68] sm:%s427] %v462
                %v464 = vld [vmem:[%s434 + $0x1c0] sm:%s427]
                %465 = vst [vmem:[%s435 + $0x70] sm:%s427] %v464
                %v466 = vld [vmem:[%s434 + $0x1e0] sm:%s427]
                %467 = vst [vmem:[%s435 + $0x78] sm:%s427] %v466
              $region79: #{ggat_forward.3} parent=73 // loop_footer
                %s433 = sadd.s32 1, %s429
              $region80: #{ggat_forward.3} parent=73 // loop_footer_branch
                %428 = sbr.rel target = $region76
              $region81: #{ggat_forward.3} parent=73 // loop_exit
                _
            $region74: #{ggat_forward.3} parent=65 // pred_fallthru
              _
          $region66: #{ggat_forward.3} parent=61 // pred_fallthru
            _
          %512 = vnop
        $region62: #{ggat_forward.3} parent=19 // pred_fallthru
          _
        // Predicated region
        $region97: #{ggat_forward.3} parent=19 // pred_check
          %p513 = pneg %p117
        $region98: #{ggat_forward.3} parent=19 // pred_check_branch
          %515 = sbr.rel (%p513) target = $region100
        $region99: #{ggat_forward.3} parent=19 // pred_region
          %s516 = sand.u32 %s107, 1
          %s517 = sand.u32 %s107, 1
          %s518 = smul.addr %s517, 128
          %s519 = scalar_lea.vmem [#allocation9], %s518
          %s520 = smul.u32 16, %s23
          %s521 = smul.addr %s520, 2
          %s522 = sadd.s32 %s22, %s521
          %s523 = smul.addr %s522, 8
          %s524 = scalar_lea.vmem %s2, %s523
          // Predicated region
          $region101: #{ggat_forward.3} parent=99 // pred_check
            _
          $region102: #{ggat_forward.3} parent=99 // pred_check_branch
            %526 = sbr.rel (0) target = $region104
          $region103: #{ggat_forward.3} parent=99 // pred_region
            // Predicated region
            $region105: #{ggat_forward.3} parent=103 // pred_check
              _
            $region106: #{ggat_forward.3} parent=103 // pred_check_branch
              %528 = sbr.rel (0) target = $region108
            $region107: #{ggat_forward.3} parent=103 // pred_region
              // Predicated region
              $region120: #{ggat_forward.3} parent=107 // pred_check
                _
              $region121: #{ggat_forward.3} parent=107 // pred_check_branch
                %574 = sbr.rel (0) target = $region123
              $region122: #{ggat_forward.3} parent=107 // pred_region
                loop: start=0, step=1, limit=1
                $region124: #{ggat_forward.3} parent=122 // loop_pre_header
                  _
                $region125: #{ggat_forward.3} parent=122 // loop_header
                  %s576 = sphi 0, %s580
                  %p577 = scmp.ge.s32.totalorder %s576, 1
                  %s581 = sphi %s524, %s524
                  %s582 = sphi %s519, %s519
                $region126: #{ggat_forward.3} parent=122 // loop_header_branch
                  %579 = sbr.rel (%p577) target = $region130
                $region127: #{ggat_forward.3} parent=122 // loop_body
                  %v583 = vld [vmem:[%s581] sm:$0xff]
                  %584 = vst [vmem:[%s582] sm:$0xff] %v583
                  %v585 = vld [vmem:[%s581 + $0x10] sm:$0xff]
                  %586 = vst [vmem:[%s582 + $0x8] sm:$0xff] %v585
                  %v587 = vld [vmem:[%s581 + $0x20] sm:$0xff]
                  %588 = vst [vmem:[%s582 + $0x10] sm:$0xff] %v587
                  %v589 = vld [vmem:[%s581 + $0x30] sm:$0xff]
                  %590 = vst [vmem:[%s582 + $0x18] sm:$0xff] %v589
                  %v591 = vld [vmem:[%s581 + $0x40] sm:$0xff]
                  %592 = vst [vmem:[%s582 + $0x20] sm:$0xff] %v591
                  %v593 = vld [vmem:[%s581 + $0x50] sm:$0xff]
                  %594 = vst [vmem:[%s582 + $0x28] sm:$0xff] %v593
                  %v595 = vld [vmem:[%s581 + $0x60] sm:$0xff]
                  %596 = vst [vmem:[%s582 + $0x30] sm:$0xff] %v595
                  %v597 = vld [vmem:[%s581 + $0x70] sm:$0xff]
                  %598 = vst [vmem:[%s582 + $0x38] sm:$0xff] %v597
                  %v599 = vld [vmem:[%s581 + $0x80] sm:$0xff]
                  %600 = vst [vmem:[%s582 + $0x40] sm:$0xff] %v599
                  %v601 = vld [vmem:[%s581 + $0x90] sm:$0xff]
                  %602 = vst [vmem:[%s582 + $0x48] sm:$0xff] %v601
                  %v603 = vld [vmem:[%s581 + $0xa0] sm:$0xff]
                  %604 = vst [vmem:[%s582 + $0x50] sm:$0xff] %v603
                  %v605 = vld [vmem:[%s581 + $0xb0] sm:$0xff]
                  %606 = vst [vmem:[%s582 + $0x58] sm:$0xff] %v605
                  %v607 = vld [vmem:[%s581 + $0xc0] sm:$0xff]
                  %608 = vst [vmem:[%s582 + $0x60] sm:$0xff] %v607
                  %v609 = vld [vmem:[%s581 + $0xd0] sm:$0xff]
                  %610 = vst [vmem:[%s582 + $0x68] sm:$0xff] %v609
                  %v611 = vld [vmem:[%s581 + $0xe0] sm:$0xff]
                  %612 = vst [vmem:[%s582 + $0x70] sm:$0xff] %v611
                  %v613 = vld [vmem:[%s581 + $0xf0] sm:$0xff]
                  %614 = vst [vmem:[%s582 + $0x78] sm:$0xff] %v613
                $region128: #{ggat_forward.3} parent=122 // loop_footer
                  %s580 = sadd.s32 1, %s576
                $region129: #{ggat_forward.3} parent=122 // loop_footer_branch
                  %575 = sbr.rel target = $region125
                $region130: #{ggat_forward.3} parent=122 // loop_exit
                  _
              $region123: #{ggat_forward.3} parent=107 // pred_fallthru
                _
              // Predicated region
              $region131: #{ggat_forward.3} parent=107 // pred_check
                _
              $region132: #{ggat_forward.3} parent=107 // pred_check_branch
                %616 = sbr.rel target = $region134
              $region133: #{ggat_forward.3} parent=107 // pred_region
                _
              $region134: #{ggat_forward.3} parent=107 // pred_fallthru
                _
            $region108: #{ggat_forward.3} parent=103 // pred_fallthru
              _
            // Predicated region
            $region109: #{ggat_forward.3} parent=103 // pred_check
              _
            $region110: #{ggat_forward.3} parent=103 // pred_check_branch
              %530 = sbr.rel target = $region112
            $region111: #{ggat_forward.3} parent=103 // pred_region
              %s532 = ssub.s32 256, 1
              loop: start=0, step=1, limit=1
              $region113: #{ggat_forward.3} parent=111 // loop_pre_header
                _
              $region114: #{ggat_forward.3} parent=111 // loop_header
                %s534 = sphi 0, %s538
                %p535 = scmp.ge.s32.totalorder %s534, 1
                %s539 = sphi %s524, %s524
                %s540 = sphi %s519, %s519
              $region115: #{ggat_forward.3} parent=111 // loop_header_branch
                %537 = sbr.rel (%p535) target = $region119
              $region116: #{ggat_forward.3} parent=111 // loop_body
                %v541 = vld [vmem:[%s539] sm:%s532]
                %542 = vst [vmem:[%s540] sm:%s532] %v541
                %v543 = vld [vmem:[%s539 + $0x10] sm:%s532]
                %544 = vst [vmem:[%s540 + $0x8] sm:%s532] %v543
                %v545 = vld [vmem:[%s539 + $0x20] sm:%s532]
                %546 = vst [vmem:[%s540 + $0x10] sm:%s532] %v545
                %v547 = vld [vmem:[%s539 + $0x30] sm:%s532]
                %548 = vst [vmem:[%s540 + $0x18] sm:%s532] %v547
                %v549 = vld [vmem:[%s539 + $0x40] sm:%s532]
                %550 = vst [vmem:[%s540 + $0x20] sm:%s532] %v549
                %v551 = vld [vmem:[%s539 + $0x50] sm:%s532]
                %552 = vst [vmem:[%s540 + $0x28] sm:%s532] %v551
                %v553 = vld [vmem:[%s539 + $0x60] sm:%s532]
                %554 = vst [vmem:[%s540 + $0x30] sm:%s532] %v553
                %v555 = vld [vmem:[%s539 + $0x70] sm:%s532]
                %556 = vst [vmem:[%s540 + $0x38] sm:%s532] %v555
                %v557 = vld [vmem:[%s539 + $0x80] sm:%s532]
                %558 = vst [vmem:[%s540 + $0x40] sm:%s532] %v557
                %v559 = vld [vmem:[%s539 + $0x90] sm:%s532]
                %560 = vst [vmem:[%s540 + $0x48] sm:%s532] %v559
                %v561 = vld [vmem:[%s539 + $0xa0] sm:%s532]
                %562 = vst [vmem:[%s540 + $0x50] sm:%s532] %v561
                %v563 = vld [vmem:[%s539 + $0xb0] sm:%s532]
                %564 = vst [vmem:[%s540 + $0x58] sm:%s532] %v563
                %v565 = vld [vmem:[%s539 + $0xc0] sm:%s532]
                %566 = vst [vmem:[%s540 + $0x60] sm:%s532] %v565
                %v567 = vld [vmem:[%s539 + $0xd0] sm:%s532]
                %568 = vst [vmem:[%s540 + $0x68] sm:%s532] %v567
                %v569 = vld [vmem:[%s539 + $0xe0] sm:%s532]
                %570 = vst [vmem:[%s540 + $0x70] sm:%s532] %v569
                %v571 = vld [vmem:[%s539 + $0xf0] sm:%s532]
                %572 = vst [vmem:[%s540 + $0x78] sm:%s532] %v571
              $region117: #{ggat_forward.3} parent=111 // loop_footer
                %s538 = sadd.s32 1, %s534
              $region118: #{ggat_forward.3} parent=111 // loop_footer_branch
                %533 = sbr.rel target = $region114
              $region119: #{ggat_forward.3} parent=111 // loop_exit
                _
            $region112: #{ggat_forward.3} parent=103 // pred_fallthru
              _
          $region104: #{ggat_forward.3} parent=99 // pred_fallthru
            _
          %617 = vnop
        $region100: #{ggat_forward.3} parent=19 // pred_fallthru
          _
        // Predicated region
        $region135: #{ggat_forward.3} parent=19 // pred_check
          %p618 = pneg %p147
        $region136: #{ggat_forward.3} parent=19 // pred_check_branch
          %620 = sbr.rel (%p618) target = $region138
        $region137: #{ggat_forward.3} parent=19 // pred_region
          %s621 = sand.u32 %s137, 1
          %s622 = sand.u32 %s137, 1
          %s623 = smul.addr %s622, 128
          %s624 = scalar_lea.vmem [#allocation10], %s623
          %s625 = smul.u32 16, %s21
          %s626 = smul.addr %s625, 2
          %s627 = sadd.s32 %s23, %s626
          %s628 = smul.addr %s22, 64
          %s629 = sadd.s32 %s627, %s628
          %s630 = smul.addr %s629, 8
          %s631 = scalar_lea.vmem %s3, %s630
          // Predicated region
          $region139: #{ggat_forward.3} parent=137 // pred_check
            _
          $region140: #{ggat_forward.3} parent=137 // pred_check_branch
            %633 = sbr.rel (0) target = $region142
          $region141: #{ggat_forward.3} parent=137 // pred_region
            // Predicated region
            $region143: #{ggat_forward.3} parent=141 // pred_check
              _
            $region144: #{ggat_forward.3} parent=141 // pred_check_branch
              %635 = sbr.rel (0) target = $region146
            $region145: #{ggat_forward.3} parent=141 // pred_region
              // Predicated region
              $region158: #{ggat_forward.3} parent=145 // pred_check
                _
              $region159: #{ggat_forward.3} parent=145 // pred_check_branch
                %681 = sbr.rel (0) target = $region161
              $region160: #{ggat_forward.3} parent=145 // pred_region
                loop: start=0, step=1, limit=1
                $region162: #{ggat_forward.3} parent=160 // loop_pre_header
                  _
                $region163: #{ggat_forward.3} parent=160 // loop_header
                  %s683 = sphi 0, %s687
                  %p684 = scmp.ge.s32.totalorder %s683, 1
                  %s688 = sphi %s631, %s631
                  %s689 = sphi %s624, %s624
                $region164: #{ggat_forward.3} parent=160 // loop_header_branch
                  %686 = sbr.rel (%p684) target = $region168
                $region165: #{ggat_forward.3} parent=160 // loop_body
                  %v690 = vld [vmem:[%s688] sm:$0xff]
                  %691 = vst [vmem:[%s689] sm:$0xff] %v690
                  %v692 = vld [vmem:[%s688 + $0x10] sm:$0xff]
                  %693 = vst [vmem:[%s689 + $0x8] sm:$0xff] %v692
                  %v694 = vld [vmem:[%s688 + $0x20] sm:$0xff]
                  %695 = vst [vmem:[%s689 + $0x10] sm:$0xff] %v694
                  %v696 = vld [vmem:[%s688 + $0x30] sm:$0xff]
                  %697 = vst [vmem:[%s689 + $0x18] sm:$0xff] %v696
                  %v698 = vld [vmem:[%s688 + $0x40] sm:$0xff]
                  %699 = vst [vmem:[%s689 + $0x20] sm:$0xff] %v698
                  %v700 = vld [vmem:[%s688 + $0x50] sm:$0xff]
                  %701 = vst [vmem:[%s689 + $0x28] sm:$0xff] %v700
                  %v702 = vld [vmem:[%s688 + $0x60] sm:$0xff]
                  %703 = vst [vmem:[%s689 + $0x30] sm:$0xff] %v702
                  %v704 = vld [vmem:[%s688 + $0x70] sm:$0xff]
                  %705 = vst [vmem:[%s689 + $0x38] sm:$0xff] %v704
                  %v706 = vld [vmem:[%s688 + $0x80] sm:$0xff]
                  %707 = vst [vmem:[%s689 + $0x40] sm:$0xff] %v706
                  %v708 = vld [vmem:[%s688 + $0x90] sm:$0xff]
                  %709 = vst [vmem:[%s689 + $0x48] sm:$0xff] %v708
                  %v710 = vld [vmem:[%s688 + $0xa0] sm:$0xff]
                  %711 = vst [vmem:[%s689 + $0x50] sm:$0xff] %v710
                  %v712 = vld [vmem:[%s688 + $0xb0] sm:$0xff]
                  %713 = vst [vmem:[%s689 + $0x58] sm:$0xff] %v712
                  %v714 = vld [vmem:[%s688 + $0xc0] sm:$0xff]
                  %715 = vst [vmem:[%s689 + $0x60] sm:$0xff] %v714
                  %v716 = vld [vmem:[%s688 + $0xd0] sm:$0xff]
                  %717 = vst [vmem:[%s689 + $0x68] sm:$0xff] %v716
                  %v718 = vld [vmem:[%s688 + $0xe0] sm:$0xff]
                  %719 = vst [vmem:[%s689 + $0x70] sm:$0xff] %v718
                  %v720 = vld [vmem:[%s688 + $0xf0] sm:$0xff]
                  %721 = vst [vmem:[%s689 + $0x78] sm:$0xff] %v720
                $region166: #{ggat_forward.3} parent=160 // loop_footer
                  %s687 = sadd.s32 1, %s683
                $region167: #{ggat_forward.3} parent=160 // loop_footer_branch
                  %682 = sbr.rel target = $region163
                $region168: #{ggat_forward.3} parent=160 // loop_exit
                  _
              $region161: #{ggat_forward.3} parent=145 // pred_fallthru
                _
              // Predicated region
              $region169: #{ggat_forward.3} parent=145 // pred_check
                _
              $region170: #{ggat_forward.3} parent=145 // pred_check_branch
                %723 = sbr.rel target = $region172
              $region171: #{ggat_forward.3} parent=145 // pred_region
                _
              $region172: #{ggat_forward.3} parent=145 // pred_fallthru
                _
            $region146: #{ggat_forward.3} parent=141 // pred_fallthru
              _
            // Predicated region
            $region147: #{ggat_forward.3} parent=141 // pred_check
              _
            $region148: #{ggat_forward.3} parent=141 // pred_check_branch
              %637 = sbr.rel target = $region150
            $region149: #{ggat_forward.3} parent=141 // pred_region
              %s639 = ssub.s32 256, 1
              loop: start=0, step=1, limit=1
              $region151: #{ggat_forward.3} parent=149 // loop_pre_header
                _
              $region152: #{ggat_forward.3} parent=149 // loop_header
                %s641 = sphi 0, %s645
                %p642 = scmp.ge.s32.totalorder %s641, 1
                %s646 = sphi %s631, %s631
                %s647 = sphi %s624, %s624
              $region153: #{ggat_forward.3} parent=149 // loop_header_branch
                %644 = sbr.rel (%p642) target = $region157
              $region154: #{ggat_forward.3} parent=149 // loop_body
                %v648 = vld [vmem:[%s646] sm:%s639]
                %649 = vst [vmem:[%s647] sm:%s639] %v648
                %v650 = vld [vmem:[%s646 + $0x10] sm:%s639]
                %651 = vst [vmem:[%s647 + $0x8] sm:%s639] %v650
                %v652 = vld [vmem:[%s646 + $0x20] sm:%s639]
                %653 = vst [vmem:[%s647 + $0x10] sm:%s639] %v652
                %v654 = vld [vmem:[%s646 + $0x30] sm:%s639]
                %655 = vst [vmem:[%s647 + $0x18] sm:%s639] %v654
                %v656 = vld [vmem:[%s646 + $0x40] sm:%s639]
                %657 = vst [vmem:[%s647 + $0x20] sm:%s639] %v656
                %v658 = vld [vmem:[%s646 + $0x50] sm:%s639]
                %659 = vst [vmem:[%s647 + $0x28] sm:%s639] %v658
                %v660 = vld [vmem:[%s646 + $0x60] sm:%s639]
                %661 = vst [vmem:[%s647 + $0x30] sm:%s639] %v660
                %v662 = vld [vmem:[%s646 + $0x70] sm:%s639]
                %663 = vst [vmem:[%s647 + $0x38] sm:%s639] %v662
                %v664 = vld [vmem:[%s646 + $0x80] sm:%s639]
                %665 = vst [vmem:[%s647 + $0x40] sm:%s639] %v664
                %v666 = vld [vmem:[%s646 + $0x90] sm:%s639]
                %667 = vst [vmem:[%s647 + $0x48] sm:%s639] %v666
                %v668 = vld [vmem:[%s646 + $0xa0] sm:%s639]
                %669 = vst [vmem:[%s647 + $0x50] sm:%s639] %v668
                %v670 = vld [vmem:[%s646 + $0xb0] sm:%s639]
                %671 = vst [vmem:[%s647 + $0x58] sm:%s639] %v670
                %v672 = vld [vmem:[%s646 + $0xc0] sm:%s639]
                %673 = vst [vmem:[%s647 + $0x60] sm:%s639] %v672
                %v674 = vld [vmem:[%s646 + $0xd0] sm:%s639]
                %675 = vst [vmem:[%s647 + $0x68] sm:%s639] %v674
                %v676 = vld [vmem:[%s646 + $0xe0] sm:%s639]
                %677 = vst [vmem:[%s647 + $0x70] sm:%s639] %v676
                %v678 = vld [vmem:[%s646 + $0xf0] sm:%s639]
                %679 = vst [vmem:[%s647 + $0x78] sm:%s639] %v678
              $region155: #{ggat_forward.3} parent=149 // loop_footer
                %s645 = sadd.s32 1, %s641
              $region156: #{ggat_forward.3} parent=149 // loop_footer_branch
                %640 = sbr.rel target = $region152
              $region157: #{ggat_forward.3} parent=149 // loop_exit
                _
            $region150: #{ggat_forward.3} parent=141 // pred_fallthru
              _
          $region142: #{ggat_forward.3} parent=137 // pred_fallthru
            _
          %724 = vnop
        $region138: #{ggat_forward.3} parent=19 // pred_fallthru
          _
        // Predicated region
        $region173: #{ggat_forward.3} parent=19 // pred_check
          %p725 = pneg %p173
        $region174: #{ggat_forward.3} parent=19 // pred_check_branch
          %727 = sbr.rel (%p725) target = $region176
        $region175: #{ggat_forward.3} parent=19 // pred_region
          %s728 = smul.u32 16, %s21
          %p729 = scmp.lt.s32.totalorder %s728, 31
          %s730 = scalar_select %p729, %s728, 31
          %s731 = smul.addr %s730, 8
          %s732 = scalar_lea.vmem %s4, %s731
          %s733 = smul.u32 16, %s21
        $region176: #{ggat_forward.3} parent=19 // pred_fallthru
          _
        // Predicated region
        $region177: #{ggat_forward.3} parent=19 // pred_check
          %p734 = pneg %p199
        $region178: #{ggat_forward.3} parent=19 // pred_check_branch
          %736 = sbr.rel (%p734) target = $region180
        $region179: #{ggat_forward.3} parent=19 // pred_region
          %p737 = scmp.lt.s32.totalorder %s22, 1
          %s738 = scalar_select %p737, %s22, 1
          %s739 = smul.addr %s738, 16
          %s740 = smul.addr %s739, 8
          %s741 = scalar_lea.vmem %s5, %s740
        $region180: #{ggat_forward.3} parent=19 // pred_fallthru
          _
        // Predicated region
        $region181: #{ggat_forward.3} parent=19 // pred_check
          %p742 = pneg %p246
        $region182: #{ggat_forward.3} parent=19 // pred_check_branch
          %744 = sbr.rel (%p742) target = $region184
        $region183: #{ggat_forward.3} parent=19 // pred_region
          %p745 = scmp.lt.s32.totalorder %s22, 1
          %s746 = scalar_select %p745, %s22, 1
          %s747 = smul.addr %s746, 2
          %s748 = scalar_lea.vmem %s7, %s747
        $region184: #{ggat_forward.3} parent=19 // pred_fallthru
          _
      $region20: #{ggat_forward.3} parent=5 // pred_fallthru
        _
      %p749 = scmp.le.s32.totalorder 1, %s14
      %p750 = scmp.lt.s32.totalorder %s14, 9
      %p751 = pnand %p749, %p750
      %p752 = pneg %p751
      // Predicated region
      $region185: #{ggat_forward.3} parent=5 // pred_check
        _
      $region186: #{ggat_forward.3} parent=5 // pred_check_branch
        %754 = sbr.rel (%p751) target = $region188
      $region187: #{ggat_forward.3} parent=5 // pred_region
        %s755 = ssub.s32 %s14, 1
        %s756 = sand.u32 %s50, 1
        %s757 = sand.u32 %s50, 1
        %s758 = smul.addr %s757, 128
        %s759 = scalar_lea.vmem [#allocation7], %s758
        // Predicated region
        $region189: #{ggat_forward.3} parent=187 // pred_check
          %p760 = pneg %p63
        $region190: #{ggat_forward.3} parent=187 // pred_check_branch
          %762 = sbr.rel (%p760) target = $region192
        $region191: #{ggat_forward.3} parent=187 // pred_region
          _
        $region192: #{ggat_forward.3} parent=187 // pred_fallthru
          _
        %s763 = sand.u32 %s82, 1
        %s764 = sand.u32 %s82, 1
        %s765 = smul.addr %s764, 128
        %s766 = scalar_lea.vmem [#allocation8], %s765
        // Predicated region
        $region193: #{ggat_forward.3} parent=187 // pred_check
          %p767 = pneg %p95
        $region194: #{ggat_forward.3} parent=187 // pred_check_branch
          %769 = sbr.rel (%p767) target = $region196
        $region195: #{ggat_forward.3} parent=187 // pred_region
          _
        $region196: #{ggat_forward.3} parent=187 // pred_fallthru
          _
        %s770 = sand.u32 %s110, 1
        %s771 = sand.u32 %s110, 1
        %s772 = smul.addr %s771, 128
        %s773 = scalar_lea.vmem [#allocation9], %s772
        // Predicated region
        $region197: #{ggat_forward.3} parent=187 // pred_check
          %p774 = pneg %p123
        $region198: #{ggat_forward.3} parent=187 // pred_check_branch
          %776 = sbr.rel (%p774) target = $region200
        $region199: #{ggat_forward.3} parent=187 // pred_region
          _
        $region200: #{ggat_forward.3} parent=187 // pred_fallthru
          _
        %s777 = sand.u32 %s140, 1
        %s778 = sand.u32 %s140, 1
        %s779 = smul.addr %s778, 128
        %s780 = scalar_lea.vmem [#allocation10], %s779
        // Predicated region
        $region201: #{ggat_forward.3} parent=187 // pred_check
          %p781 = pneg %p153
        $region202: #{ggat_forward.3} parent=187 // pred_check_branch
          %783 = sbr.rel (%p781) target = $region204
        $region203: #{ggat_forward.3} parent=187 // pred_region
          _
        $region204: #{ggat_forward.3} parent=187 // pred_fallthru
          _
        %s784 = sand.u32 %s50, 1
        %s785 = sand.u32 %s50, 1
        %s786 = smul.addr %s785, 128
        %s787 = scalar_lea.vmem [#allocation7], %s786
        %p788 = pneg %p63
        %p789 = pneg %p60
        %s790 = sand.u32 %s82, 1
        %s791 = sand.u32 %s82, 1
        %s792 = smul.addr %s791, 128
        %s793 = scalar_lea.vmem [#allocation8], %s792
        %p794 = pneg %p95
        %p795 = pneg %p92
        %s796 = sand.u32 %s110, 1
        %s797 = sand.u32 %s110, 1
        %s798 = smul.addr %s797, 128
        %s799 = scalar_lea.vmem [#allocation9], %s798
        %p800 = pneg %p123
        %p801 = pneg %p120
        %s802 = sand.u32 %s140, 1
        %s803 = sand.u32 %s140, 1
        %s804 = smul.addr %s803, 128
        %s805 = scalar_lea.vmem [#allocation10], %s804
        %p806 = pneg %p153
        %p807 = pneg %p150
        %s808 = smul.u32 16, %s24
        %p809 = scmp.lt.s32.totalorder %s808, 31
        %s810 = scalar_select %p809, %s808, 31
        %s811 = smul.addr %s810, 8
        %s812 = scalar_lea.vmem %s4, %s811
        %p813 = pneg %p179
        %p814 = pneg %p176
        %p815 = scmp.lt.s32.totalorder %s25, 1
        %s816 = scalar_select %p815, %s25, 1
        %s817 = smul.addr %s816, 16
        %s818 = smul.addr %s817, 8
        %s819 = scalar_lea.vmem %s5, %s818
        %p820 = pneg %p205
        %p821 = pneg %p202
        %p822 = pneg %p226
        %p823 = pneg %p223
        %p824 = scmp.lt.s32.totalorder %s25, 1
        %s825 = scalar_select %p824, %s25, 1
        %s826 = smul.addr %s825, 2
        %s827 = scalar_lea.vmem %s7, %s826
        %p828 = pneg %p252
        %p829 = pneg %p249
        %p830 = pneg %p278
        %p831 = pneg %p275
        %s832 = smul.u32 16, %s24
        %p833 = scmp.lt.s32.totalorder %s832, 31
        %s834 = scalar_select %p833, %s832, 31
        %s835 = smul.addr %s834, 8
        %s836 = scalar_lea.vmem %s8, %s835
        %s837 = smul.u32 %s25, 2
        %s838 = smul.u32 16, %s24
        %s839 = smul.u32 %s25, 2
        %s840 = sadd.s32 %s839, 1
        %s841 = smul.u32 16, %s26
        %s842 = smul.u32 16, %s26
        %s843 = smul.u32 16, %s24
        %s844 = smul.u32 16, %s24
        %p845 = scmp.lt.s32.totalorder %s844, 31
        %s846 = scalar_select %p845, %s844, 31
        %s847 = smul.addr %s846, 8
        %s848 = scalar_lea.vmem %s4, %s847
        %s849 = smul.u32 16, %s24
        %p850 = scmp.lt.s32.totalorder %s25, 1
        %s851 = scalar_select %p850, %s25, 1
        %s852 = smul.addr %s851, 16
        %s853 = smul.addr %s852, 8
        %s854 = scalar_lea.vmem %s5, %s853
        %p855 = scmp.lt.s32.totalorder %s25, 1
        %s856 = scalar_select %p855, %s25, 1
        %s857 = smul.addr %s856, 2
        %s858 = scalar_lea.vmem %s7, %s857
        %s859 = smul.u32 16, %s24
        %p860 = scmp.lt.s32.totalorder %s859, 31
        %s861 = scalar_select %p860, %s859, 31
        %s862 = smul.addr %s861, 8
        %s863 = scalar_lea.vmem %s8, %s862
        %s864 = smul.u32 16, %s24
        %p865 = scmp.eq.s32.totalorder %s26, 0
        // Predicated region
        $region205: #{ggat_forward.3} parent=187 // pred_check
          %p866 = pneg %p865
        $region206: #{ggat_forward.3} parent=187 // pred_check_branch
          %868 = sbr.rel (%p866) target = $region208
        $region207: #{ggat_forward.3} parent=187 // pred_region
          %vm869 = vcmask 7168
          %870 = vst.msk [vmem:[#allocation2] sm:$0xff] %vm869, -inf
          %871 = vst.msk [vmem:[#allocation2 + $0x8] sm:$0xff] %vm869, -inf
          %872 = vst.msk [vmem:[#allocation2 + $0x10] sm:$0xff] %vm869, -inf
          %873 = vst.msk [vmem:[#allocation2 + $0x18] sm:$0xff] %vm869, -inf
          %874 = vst.msk [vmem:[#allocation2 + $0x20] sm:$0xff] %vm869, -inf
          %875 = vst.msk [vmem:[#allocation2 + $0x28] sm:$0xff] %vm869, -inf
          %876 = vst.msk [vmem:[#allocation2 + $0x30] sm:$0xff] %vm869, -inf
          %877 = vst.msk [vmem:[#allocation2 + $0x38] sm:$0xff] %vm869, -inf
          %878 = vst.msk [vmem:[#allocation2 + $0x40] sm:$0xff] %vm869, -inf
          %879 = vst.msk [vmem:[#allocation2 + $0x48] sm:$0xff] %vm869, -inf
          %880 = vst.msk [vmem:[#allocation2 + $0x50] sm:$0xff] %vm869, -inf
          %881 = vst.msk [vmem:[#allocation2 + $0x58] sm:$0xff] %vm869, -inf
          %882 = vst.msk [vmem:[#allocation2 + $0x60] sm:$0xff] %vm869, -inf
          %883 = vst.msk [vmem:[#allocation2 + $0x68] sm:$0xff] %vm869, -inf
          %884 = vst.msk [vmem:[#allocation2 + $0x70] sm:$0xff] %vm869, -inf
          %885 = vst.msk [vmem:[#allocation2 + $0x78] sm:$0xff] %vm869, -inf
          %886 = vst.msk [vmem:[#allocation3] sm:$0xff] %vm869, 0.0
          %887 = vst.msk [vmem:[#allocation3 + $0x8] sm:$0xff] %vm869, 0.0
          %888 = vst.msk [vmem:[#allocation3 + $0x10] sm:$0xff] %vm869, 0.0
          %889 = vst.msk [vmem:[#allocation3 + $0x18] sm:$0xff] %vm869, 0.0
          %890 = vst.msk [vmem:[#allocation3 + $0x20] sm:$0xff] %vm869, 0.0
          %891 = vst.msk [vmem:[#allocation3 + $0x28] sm:$0xff] %vm869, 0.0
          %892 = vst.msk [vmem:[#allocation3 + $0x30] sm:$0xff] %vm869, 0.0
          %893 = vst.msk [vmem:[#allocation3 + $0x38] sm:$0xff] %vm869, 0.0
          %894 = vst.msk [vmem:[#allocation3 + $0x40] sm:$0xff] %vm869, 0.0
          %895 = vst.msk [vmem:[#allocation3 + $0x48] sm:$0xff] %vm869, 0.0
          %896 = vst.msk [vmem:[#allocation3 + $0x50] sm:$0xff] %vm869, 0.0
          %897 = vst.msk [vmem:[#allocation3 + $0x58] sm:$0xff] %vm869, 0.0
          %898 = vst.msk [vmem:[#allocation3 + $0x60] sm:$0xff] %vm869, 0.0
          %899 = vst.msk [vmem:[#allocation3 + $0x68] sm:$0xff] %vm869, 0.0
          %900 = vst.msk [vmem:[#allocation3 + $0x70] sm:$0xff] %vm869, 0.0
          %901 = vst.msk [vmem:[#allocation3 + $0x78] sm:$0xff] %vm869, 0.0
          %902 = vst [vmem:[#allocation4] sm:$0xff] 0.0
          %903 = vst [vmem:[#allocation4 + $0x8] sm:$0xff] 0.0
          %904 = vst [vmem:[#allocation4 + $0x10] sm:$0xff] 0.0
          %905 = vst [vmem:[#allocation4 + $0x18] sm:$0xff] 0.0
          %906 = vst [vmem:[#allocation4 + $0x20] sm:$0xff] 0.0
          %907 = vst [vmem:[#allocation4 + $0x28] sm:$0xff] 0.0
          %908 = vst [vmem:[#allocation4 + $0x30] sm:$0xff] 0.0
          %909 = vst [vmem:[#allocation4 + $0x38] sm:$0xff] 0.0
          %910 = vst [vmem:[#allocation4 + $0x40] sm:$0xff] 0.0
          %911 = vst [vmem:[#allocation4 + $0x48] sm:$0xff] 0.0
          %912 = vst [vmem:[#allocation4 + $0x50] sm:$0xff] 0.0
          %913 = vst [vmem:[#allocation4 + $0x58] sm:$0xff] 0.0
          %914 = vst [vmem:[#allocation4 + $0x60] sm:$0xff] 0.0
          %915 = vst [vmem:[#allocation4 + $0x68] sm:$0xff] 0.0
          %916 = vst [vmem:[#allocation4 + $0x70] sm:$0xff] 0.0
          %917 = vst [vmem:[#allocation4 + $0x78] sm:$0xff] 0.0
          %918 = vst [vmem:[#allocation5] sm:$0xff] 0.0
          %919 = vst [vmem:[#allocation5 + $0x8] sm:$0xff] 0.0
          %920 = vst [vmem:[#allocation5 + $0x10] sm:$0xff] 0.0
          %921 = vst [vmem:[#allocation5 + $0x18] sm:$0xff] 0.0
          %922 = vst [vmem:[#allocation5 + $0x20] sm:$0xff] 0.0
          %923 = vst [vmem:[#allocation5 + $0x28] sm:$0xff] 0.0
          %924 = vst [vmem:[#allocation5 + $0x30] sm:$0xff] 0.0
          %925 = vst [vmem:[#allocation5 + $0x38] sm:$0xff] 0.0
          %926 = vst [vmem:[#allocation5 + $0x40] sm:$0xff] 0.0
          %927 = vst [vmem:[#allocation5 + $0x48] sm:$0xff] 0.0
          %928 = vst [vmem:[#allocation5 + $0x50] sm:$0xff] 0.0
          %929 = vst [vmem:[#allocation5 + $0x58] sm:$0xff] 0.0
          %930 = vst [vmem:[#allocation5 + $0x60] sm:$0xff] 0.0
          %931 = vst [vmem:[#allocation5 + $0x68] sm:$0xff] 0.0
          %932 = vst [vmem:[#allocation5 + $0x70] sm:$0xff] 0.0
          %933 = vst [vmem:[#allocation5 + $0x78] sm:$0xff] 0.0
        $region208: #{ggat_forward.3} parent=187 // pred_fallthru
          _
        %p934 = scmp.eq.s32.totalorder %s25, 0
        %p935 = pnand %p934, %p865
        %p936 = pneg %p935
        // Predicated region
        $region209: #{ggat_forward.3} parent=187 // pred_check
          _
        $region210: #{ggat_forward.3} parent=187 // pred_check_branch
          %938 = sbr.rel (%p935) target = $region212
        $region211: #{ggat_forward.3} parent=187 // pred_region
          %v939 = vld [vmem:[%s848] sm:$0xff]
          %v940 = vld [vmem:[%s848 + $0x8] sm:$0xff]
          %v941 = vld [vmem:[%s848 + $0x10] sm:$0xff]
          %v942 = vld [vmem:[%s848 + $0x18] sm:$0xff]
          %v943 = vld [vmem:[%s848 + $0x20] sm:$0xff]
          %v944 = vld [vmem:[%s848 + $0x28] sm:$0xff]
          %v945 = vld [vmem:[%s848 + $0x30] sm:$0xff]
          %v946 = vld [vmem:[%s848 + $0x38] sm:$0xff]
          %v947 = vld [vmem:[%s848 + $0x40] sm:$0xff]
          %v948 = vld [vmem:[%s848 + $0x48] sm:$0xff]
          %v949 = vld [vmem:[%s848 + $0x50] sm:$0xff]
          %v950 = vld [vmem:[%s848 + $0x58] sm:$0xff]
          %v951 = vld [vmem:[%s848 + $0x60] sm:$0xff]
          %v952 = vld [vmem:[%s848 + $0x68] sm:$0xff]
          %v953 = vld [vmem:[%s848 + $0x70] sm:$0xff]
          %v954 = vld [vmem:[%s848 + $0x78] sm:$0xff]
          %955 = vst [vmem:[#allocation6] sm:$0xff] %v939
          %956 = vst [vmem:[#allocation6 + $0x8] sm:$0xff] %v940
          %957 = vst [vmem:[#allocation6 + $0x10] sm:$0xff] %v941
          %958 = vst [vmem:[#allocation6 + $0x18] sm:$0xff] %v942
          %959 = vst [vmem:[#allocation6 + $0x20] sm:$0xff] %v943
          %960 = vst [vmem:[#allocation6 + $0x28] sm:$0xff] %v944
          %961 = vst [vmem:[#allocation6 + $0x30] sm:$0xff] %v945
          %962 = vst [vmem:[#allocation6 + $0x38] sm:$0xff] %v946
          %963 = vst [vmem:[#allocation6 + $0x40] sm:$0xff] %v947
          %964 = vst [vmem:[#allocation6 + $0x48] sm:$0xff] %v948
          %965 = vst [vmem:[#allocation6 + $0x50] sm:$0xff] %v949
          %966 = vst [vmem:[#allocation6 + $0x58] sm:$0xff] %v950
          %967 = vst [vmem:[#allocation6 + $0x60] sm:$0xff] %v951
          %968 = vst [vmem:[#allocation6 + $0x68] sm:$0xff] %v952
          %969 = vst [vmem:[#allocation6 + $0x70] sm:$0xff] %v953
          %970 = vst [vmem:[#allocation6 + $0x78] sm:$0xff] %v954
        $region212: #{ggat_forward.3} parent=187 // pred_fallthru
          _
        %v971 = vld [vmem:[%s780] sm:$0xff]
        %v972 = vld [vmem:[%s780 + $0x8] sm:$0xff]
        %v973 = vld [vmem:[%s780 + $0x10] sm:$0xff]
        %v974 = vld [vmem:[%s780 + $0x18] sm:$0xff]
        %v975 = vld [vmem:[%s780 + $0x20] sm:$0xff]
        %v976 = vld [vmem:[%s780 + $0x28] sm:$0xff]
        %v977 = vld [vmem:[%s780 + $0x30] sm:$0xff]
        %v978 = vld [vmem:[%s780 + $0x38] sm:$0xff]
        %v979 = vld [vmem:[%s780 + $0x40] sm:$0xff]
        %v980 = vld [vmem:[%s780 + $0x48] sm:$0xff]
        %v981 = vld [vmem:[%s780 + $0x50] sm:$0xff]
        %v982 = vld [vmem:[%s780 + $0x58] sm:$0xff]
        %v983 = vld [vmem:[%s780 + $0x60] sm:$0xff]
        %v984 = vld [vmem:[%s780 + $0x68] sm:$0xff]
        %v985 = vld [vmem:[%s780 + $0x70] sm:$0xff]
        %v986 = vld [vmem:[%s780 + $0x78] sm:$0xff]
        %v987 = vld [vmem:[%s773] sm:$0xff]
        %v988 = vld [vmem:[%s773 + $0x8] sm:$0xff]
        %v989 = vld [vmem:[%s773 + $0x10] sm:$0xff]
        %v990 = vld [vmem:[%s773 + $0x18] sm:$0xff]
        %v991 = vld [vmem:[%s773 + $0x20] sm:$0xff]
        %v992 = vld [vmem:[%s773 + $0x28] sm:$0xff]
        %v993 = vld [vmem:[%s773 + $0x30] sm:$0xff]
        %v994 = vld [vmem:[%s773 + $0x38] sm:$0xff]
        %v995 = vld [vmem:[%s773 + $0x40] sm:$0xff]
        %v996 = vld [vmem:[%s773 + $0x48] sm:$0xff]
        %v997 = vld [vmem:[%s773 + $0x50] sm:$0xff]
        %v998 = vld [vmem:[%s773 + $0x58] sm:$0xff]
        %v999 = vld [vmem:[%s773 + $0x60] sm:$0xff]
        %v1000 = vld [vmem:[%s773 + $0x68] sm:$0xff]
        %v1001 = vld [vmem:[%s773 + $0x70] sm:$0xff]
        %v1002 = vld [vmem:[%s773 + $0x78] sm:$0xff]
        %v1003 = vld [vmem:[%s759] sm:$0xff]
        %v1004 = vld [vmem:[%s759 + $0x8] sm:$0xff]
        %v1005 = vld [vmem:[%s759 + $0x10] sm:$0xff]
        %v1006 = vld [vmem:[%s759 + $0x18] sm:$0xff]
        %v1007 = vld [vmem:[%s759 + $0x20] sm:$0xff]
        %v1008 = vld [vmem:[%s759 + $0x28] sm:$0xff]
        %v1009 = vld [vmem:[%s759 + $0x30] sm:$0xff]
        %v1010 = vld [vmem:[%s759 + $0x38] sm:$0xff]
        %v1011 = vld [vmem:[%s759 + $0x40] sm:$0xff]
        %v1012 = vld [vmem:[%s759 + $0x48] sm:$0xff]
        %v1013 = vld [vmem:[%s759 + $0x50] sm:$0xff]
        %v1014 = vld [vmem:[%s759 + $0x58] sm:$0xff]
        %v1015 = vld [vmem:[%s759 + $0x60] sm:$0xff]
        %v1016 = vld [vmem:[%s759 + $0x68] sm:$0xff]
        %v1017 = vld [vmem:[%s759 + $0x70] sm:$0xff]
        %v1018 = vld [vmem:[%s759 + $0x78] sm:$0xff]
        %v1019 = vld [vmem:[%s766] sm:$0xff]
        %v1020 = vld [vmem:[%s766 + $0x8] sm:$0xff]
        %v1021 = vld [vmem:[%s766 + $0x10] sm:$0xff]
        %v1022 = vld [vmem:[%s766 + $0x18] sm:$0xff]
        %v1023 = vld [vmem:[%s766 + $0x20] sm:$0xff]
        %v1024 = vld [vmem:[%s766 + $0x28] sm:$0xff]
        %v1025 = vld [vmem:[%s766 + $0x30] sm:$0xff]
        %v1026 = vld [vmem:[%s766 + $0x38] sm:$0xff]
        %v1027 = vld [vmem:[%s766 + $0x40] sm:$0xff]
        %v1028 = vld [vmem:[%s766 + $0x48] sm:$0xff]
        %v1029 = vld [vmem:[%s766 + $0x50] sm:$0xff]
        %v1030 = vld [vmem:[%s766 + $0x58] sm:$0xff]
        %v1031 = vld [vmem:[%s766 + $0x60] sm:$0xff]
        %v1032 = vld [vmem:[%s766 + $0x68] sm:$0xff]
        %v1033 = vld [vmem:[%s766 + $0x70] sm:$0xff]
        %v1034 = vld [vmem:[%s766 + $0x78] sm:$0xff]
        %1035 = vmatprep.subr.mxu0 0.0
        %1036 = vmatpush1.xpose.msra.mxu0 %v1034
        %1037 = vmatprep.subr.mxu0 0.0
        %1038 = vmatpush1.xpose.msra.mxu0 %v1033
        %1039 = vmatprep.subr.mxu0 0.0
        %1040 = vmatpush1.xpose.msra.mxu0 %v1032
        %1041 = vmatprep.subr.mxu0 0.0
        %1042 = vmatpush1.xpose.msra.mxu0 %v1031
        %1043 = vmatprep.subr.mxu0 0.0
        %1044 = vmatpush1.xpose.msra.mxu0 %v1030
        %1045 = vmatprep.subr.mxu0 0.0
        %1046 = vmatpush1.xpose.msra.mxu0 %v1029
        %1047 = vmatprep.subr.mxu0 0.0
        %1048 = vmatpush1.xpose.msra.mxu0 %v1028
        %1049 = vmatprep.subr.mxu0 0.0
        %1050 = vmatpush1.xpose.msra.mxu0 %v1027
        %1051 = vmatprep.subr.mxu0 0.0
        %1052 = vmatpush1.xpose.msra.mxu0 %v1026
        %1053 = vmatprep.subr.mxu0 0.0
        %1054 = vmatpush1.xpose.msra.mxu0 %v1025
        %1055 = vmatprep.subr.mxu0 0.0
        %1056 = vmatpush1.xpose.msra.mxu0 %v1024
        %1057 = vmatprep.subr.mxu0 0.0
        %1058 = vmatpush1.xpose.msra.mxu0 %v1023
        %1059 = vmatprep.subr.mxu0 0.0
        %1060 = vmatpush1.xpose.msra.mxu0 %v1022
        %1061 = vmatprep.subr.mxu0 0.0
        %1062 = vmatpush1.xpose.msra.mxu0 %v1021
        %1063 = vmatprep.subr.mxu0 0.0
        %1064 = vmatpush1.xpose.msra.mxu0 %v1020
        %1065 = vmatprep.subr.mxu0 0.0
        %1066 = vmatpush1.xpose.msra.mxu0 %v1019
        %1067 = vmatprep.subr.mxu0 0.0
        %1068 = vmatpush2.xpose.msra.mxu0 0.0
        %1069 = vmatprep.subr.mxu0 0.0
        %1070 = vmatpush2.xpose.msra.mxu0 0.0
        %1071 = vmatprep.subr.mxu0 0.0
        %1072 = vmatpush2.xpose.msra.mxu0 0.0
        %1073 = vmatprep.subr.mxu0 0.0
        %1074 = vmatpush2.xpose.msra.mxu0 0.0
        %1075 = vmatprep.subr.mxu0 0.0
        %1076 = vmatpush2.xpose.msra.mxu0 0.0
        %1077 = vmatprep.subr.mxu0 0.0
        %1078 = vmatpush2.xpose.msra.mxu0 0.0
        %1079 = vmatprep.subr.mxu0 0.0
        %1080 = vmatpush2.xpose.msra.mxu0 0.0
        %1081 = vmatprep.subr.mxu0 0.0
        %1082 = vmatpush2.xpose.msra.mxu0 0.0
        %1083 = vmatprep.subr.mxu0 0.0
        %1084 = vmatpush2.xpose.msra.mxu0 0.0
        %1085 = vmatprep.subr.mxu0 0.0
        %1086 = vmatpush2.xpose.msra.mxu0 0.0
        %1087 = vmatprep.subr.mxu0 0.0
        %1088 = vmatpush2.xpose.msra.mxu0 0.0
        %1089 = vmatprep.subr.mxu0 0.0
        %1090 = vmatpush2.xpose.msra.mxu0 0.0
        %1091 = vmatprep.subr.mxu0 0.0
        %1092 = vmatpush2.xpose.msra.mxu0 0.0
        %1093 = vmatprep.subr.mxu0 0.0
        %1094 = vmatpush2.xpose.msra.mxu0 0.0
        %1095 = vmatprep.subr.mxu0 0.0
        %1096 = vmatpush2.xpose.msra.mxu0 0.0
        %1097 = vmatprep.subr.mxu0 0.0
        %1098 = vmatpush2.xpose.msra.mxu0 0.0
        %1099 = vmatprep.mubr.f32.mxu0 0.0
        %1100 = vmatmul.mubr.f32.gmra.mxu0 %v1003
        %v1101 = vpop.f32.mrf.mxu0
        %v1102 = vadd.f32 0.0, %v1101
        %v1103 = vpop.f32.mrf.mxu0
        %1104 = vmatprep.mubr.f32.mxu0 0.0
        %1105 = vmatmul.mubr.f32.gmra.mxu0 %v1004
        %v1106 = vpop.f32.mrf.mxu0
        %v1107 = vadd.f32 0.0, %v1106
        %v1108 = vpop.f32.mrf.mxu0
        %1109 = vmatprep.mubr.f32.mxu0 0.0
        %1110 = vmatmul.mubr.f32.gmra.mxu0 %v1005
        %v1111 = vpop.f32.mrf.mxu0
        %v1112 = vadd.f32 0.0, %v1111
        %v1113 = vpop.f32.mrf.mxu0
        %1114 = vmatprep.mubr.f32.mxu0 0.0
        %1115 = vmatmul.mubr.f32.gmra.mxu0 %v1006
        %v1116 = vpop.f32.mrf.mxu0
        %v1117 = vadd.f32 0.0, %v1116
        %v1118 = vpop.f32.mrf.mxu0
        %1119 = vmatprep.mubr.f32.mxu0 0.0
        %1120 = vmatmul.mubr.f32.gmra.mxu0 %v1007
        %v1121 = vpop.f32.mrf.mxu0
        %v1122 = vadd.f32 0.0, %v1121
        %v1123 = vpop.f32.mrf.mxu0
        %1124 = vmatprep.mubr.f32.mxu0 0.0
        %1125 = vmatmul.mubr.f32.gmra.mxu0 %v1008
        %v1126 = vpop.f32.mrf.mxu0
        %v1127 = vadd.f32 0.0, %v1126
        %v1128 = vpop.f32.mrf.mxu0
        %1129 = vmatprep.mubr.f32.mxu0 0.0
        %1130 = vmatmul.mubr.f32.gmra.mxu0 %v1009
        %v1131 = vpop.f32.mrf.mxu0
        %v1132 = vadd.f32 0.0, %v1131
        %v1133 = vpop.f32.mrf.mxu0
        %1134 = vmatprep.mubr.f32.mxu0 0.0
        %1135 = vmatmul.mubr.f32.gmra.mxu0 %v1010
        %v1136 = vpop.f32.mrf.mxu0
        %v1137 = vadd.f32 0.0, %v1136
        %v1138 = vpop.f32.mrf.mxu0
        %1139 = vmatprep.mubr.f32.mxu0 0.0
        %1140 = vmatmul.mubr.f32.gmra.mxu0 %v1011
        %v1141 = vpop.f32.mrf.mxu0
        %v1142 = vadd.f32 0.0, %v1141
        %v1143 = vpop.f32.mrf.mxu0
        %1144 = vmatprep.mubr.f32.mxu0 0.0
        %1145 = vmatmul.mubr.f32.gmra.mxu0 %v1012
        %v1146 = vpop.f32.mrf.mxu0
        %v1147 = vadd.f32 0.0, %v1146
        %v1148 = vpop.f32.mrf.mxu0
        %1149 = vmatprep.mubr.f32.mxu0 0.0
        %1150 = vmatmul.mubr.f32.gmra.mxu0 %v1013
        %v1151 = vpop.f32.mrf.mxu0
        %v1152 = vadd.f32 0.0, %v1151
        %v1153 = vpop.f32.mrf.mxu0
        %1154 = vmatprep.mubr.f32.mxu0 0.0
        %1155 = vmatmul.mubr.f32.gmra.mxu0 %v1014
        %v1156 = vpop.f32.mrf.mxu0
        %v1157 = vadd.f32 0.0, %v1156
        %v1158 = vpop.f32.mrf.mxu0
        %1159 = vmatprep.mubr.f32.mxu0 0.0
        %1160 = vmatmul.mubr.f32.gmra.mxu0 %v1015
        %v1161 = vpop.f32.mrf.mxu0
        %v1162 = vadd.f32 0.0, %v1161
        %v1163 = vpop.f32.mrf.mxu0
        %1164 = vmatprep.mubr.f32.mxu0 0.0
        %1165 = vmatmul.mubr.f32.gmra.mxu0 %v1016
        %v1166 = vpop.f32.mrf.mxu0
        %v1167 = vadd.f32 0.0, %v1166
        %v1168 = vpop.f32.mrf.mxu0
        %1169 = vmatprep.mubr.f32.mxu0 0.0
        %1170 = vmatmul.mubr.f32.gmra.mxu0 %v1017
        %v1171 = vpop.f32.mrf.mxu0
        %v1172 = vadd.f32 0.0, %v1171
        %v1173 = vpop.f32.mrf.mxu0
        %1174 = vmatprep.mubr.f32.mxu0 0.0
        %1175 = vmatmul.mubr.f32.gmra.mxu0 %v1018
        %v1176 = vpop.f32.mrf.mxu0
        %v1177 = vadd.f32 0.0, %v1176
        %v1178 = vpop.f32.mrf.mxu0
        %1179 = vdwg.mxu0
        %vm1180 = vcmp.gt.f32.partialorder %v971, 0.0
        %vm1181 = vcmp.gt.f32.partialorder %v972, 0.0
        %vm1182 = vcmp.gt.f32.partialorder %v973, 0.0
        %vm1183 = vcmp.gt.f32.partialorder %v974, 0.0
        %vm1184 = vcmp.gt.f32.partialorder %v975, 0.0
        %vm1185 = vcmp.gt.f32.partialorder %v976, 0.0
        %vm1186 = vcmp.gt.f32.partialorder %v977, 0.0
        %vm1187 = vcmp.gt.f32.partialorder %v978, 0.0
        %vm1188 = vcmp.gt.f32.partialorder %v979, 0.0
        %vm1189 = vcmp.gt.f32.partialorder %v980, 0.0
        %vm1190 = vcmp.gt.f32.partialorder %v981, 0.0
        %vm1191 = vcmp.gt.f32.partialorder %v982, 0.0
        %vm1192 = vcmp.gt.f32.partialorder %v983, 0.0
        %vm1193 = vcmp.gt.f32.partialorder %v984, 0.0
        %vm1194 = vcmp.gt.f32.partialorder %v985, 0.0
        %vm1195 = vcmp.gt.f32.partialorder %v986, 0.0
        %v1196 = vsel %vm1180, %v1102, -9e+15
        %v1197 = vsel %vm1181, %v1107, -9e+15
        %v1198 = vsel %vm1182, %v1112, -9e+15
        %v1199 = vsel %vm1183, %v1117, -9e+15
        %v1200 = vsel %vm1184, %v1122, -9e+15
        %v1201 = vsel %vm1185, %v1127, -9e+15
        %v1202 = vsel %vm1186, %v1132, -9e+15
        %v1203 = vsel %vm1187, %v1137, -9e+15
        %v1204 = vsel %vm1188, %v1142, -9e+15
        %v1205 = vsel %vm1189, %v1147, -9e+15
        %v1206 = vsel %vm1190, %v1152, -9e+15
        %v1207 = vsel %vm1191, %v1157, -9e+15
        %v1208 = vsel %vm1192, %v1162, -9e+15
        %v1209 = vsel %vm1193, %v1167, -9e+15
        %v1210 = vsel %vm1194, %v1172, -9e+15
        %v1211 = vsel %vm1195, %v1177, -9e+15
        %v1212 = vld [vmem:[#allocation2] sm:$0xff]
        %v1213 = vld [vmem:[#allocation2 + $0x8] sm:$0xff]
        %v1214 = vld [vmem:[#allocation2 + $0x10] sm:$0xff]
        %v1215 = vld [vmem:[#allocation2 + $0x18] sm:$0xff]
        %v1216 = vld [vmem:[#allocation2 + $0x20] sm:$0xff]
        %v1217 = vld [vmem:[#allocation2 + $0x28] sm:$0xff]
        %v1218 = vld [vmem:[#allocation2 + $0x30] sm:$0xff]
        %v1219 = vld [vmem:[#allocation2 + $0x38] sm:$0xff]
        %v1220 = vld [vmem:[#allocation2 + $0x40] sm:$0xff]
        %v1221 = vld [vmem:[#allocation2 + $0x48] sm:$0xff]
        %v1222 = vld [vmem:[#allocation2 + $0x50] sm:$0xff]
        %v1223 = vld [vmem:[#allocation2 + $0x58] sm:$0xff]
        %v1224 = vld [vmem:[#allocation2 + $0x60] sm:$0xff]
        %v1225 = vld [vmem:[#allocation2 + $0x68] sm:$0xff]
        %v1226 = vld [vmem:[#allocation2 + $0x70] sm:$0xff]
        %v1227 = vld [vmem:[#allocation2 + $0x78] sm:$0xff]
        %1228 = vmax.xlane.f32.xlu0 %v1196
        %v1229 = vpop.xlane.xlu0 %1228
        %1230 = vmax.xlane.f32.xlu0 %v1197
        %v1231 = vpop.xlane.xlu0 %1230
        %1232 = vmax.xlane.f32.xlu0 %v1198
        %v1233 = vpop.xlane.xlu0 %1232
        %1234 = vmax.xlane.f32.xlu0 %v1199
        %v1235 = vpop.xlane.xlu0 %1234
        %1236 = vmax.xlane.f32.xlu0 %v1200
        %v1237 = vpop.xlane.xlu0 %1236
        %1238 = vmax.xlane.f32.xlu0 %v1201
        %v1239 = vpop.xlane.xlu0 %1238
        %1240 = vmax.xlane.f32.xlu0 %v1202
        %v1241 = vpop.xlane.xlu0 %1240
        %1242 = vmax.xlane.f32.xlu0 %v1203
        %v1243 = vpop.xlane.xlu0 %1242
        %1244 = vmax.xlane.f32.xlu0 %v1204
        %v1245 = vpop.xlane.xlu0 %1244
        %1246 = vmax.xlane.f32.xlu0 %v1205
        %v1247 = vpop.xlane.xlu0 %1246
        %1248 = vmax.xlane.f32.xlu0 %v1206
        %v1249 = vpop.xlane.xlu0 %1248
        %1250 = vmax.xlane.f32.xlu0 %v1207
        %v1251 = vpop.xlane.xlu0 %1250
        %1252 = vmax.xlane.f32.xlu0 %v1208
        %v1253 = vpop.xlane.xlu0 %1252
        %1254 = vmax.xlane.f32.xlu0 %v1209
        %v1255 = vpop.xlane.xlu0 %1254
        %1256 = vmax.xlane.f32.xlu0 %v1210
        %v1257 = vpop.xlane.xlu0 %1256
        %1258 = vmax.xlane.f32.xlu0 %v1211
        %v1259 = vpop.xlane.xlu0 %1258
        %v1260 = vmax.f32 %v1212, %v1229
        %v1261 = vmax.f32 %v1213, %v1231
        %v1262 = vmax.f32 %v1214, %v1233
        %v1263 = vmax.f32 %v1215, %v1235
        %v1264 = vmax.f32 %v1216, %v1237
        %v1265 = vmax.f32 %v1217, %v1239
        %v1266 = vmax.f32 %v1218, %v1241
        %v1267 = vmax.f32 %v1219, %v1243
        %v1268 = vmax.f32 %v1220, %v1245
        %v1269 = vmax.f32 %v1221, %v1247
        %v1270 = vmax.f32 %v1222, %v1249
        %v1271 = vmax.f32 %v1223, %v1251
        %v1272 = vmax.f32 %v1224, %v1253
        %v1273 = vmax.f32 %v1225, %v1255
        %v1274 = vmax.f32 %v1226, %v1257
        %v1275 = vmax.f32 %v1227, %v1259
        %v1276 = vsub.f32 %v1212, %v1260
        %v1277 = vsub.f32 %v1213, %v1261
        %v1278 = vsub.f32 %v1214, %v1262
        %v1279 = vsub.f32 %v1215, %v1263
        %v1280 = vsub.f32 %v1216, %v1264
        %v1281 = vsub.f32 %v1217, %v1265
        %v1282 = vsub.f32 %v1218, %v1266
        %v1283 = vsub.f32 %v1219, %v1267
        %v1284 = vsub.f32 %v1220, %v1268
        %v1285 = vsub.f32 %v1221, %v1269
        %v1286 = vsub.f32 %v1222, %v1270
        %v1287 = vsub.f32 %v1223, %v1271
        %v1288 = vsub.f32 %v1224, %v1272
        %v1289 = vsub.f32 %v1225, %v1273
        %v1290 = vsub.f32 %v1226, %v1274
        %v1291 = vsub.f32 %v1227, %v1275
        %v1292 = vmul.f32 %v1276, 1.442695
        %v1293 = vpow.pop %v1292
        %v1294 = vmul.f32 %v1277, 1.442695
        %v1295 = vpow.pop %v1294
        %v1296 = vmul.f32 %v1278, 1.442695
        %v1297 = vpow.pop %v1296
        %v1298 = vmul.f32 %v1279, 1.442695
        %v1299 = vpow.pop %v1298
        %v1300 = vmul.f32 %v1280, 1.442695
        %v1301 = vpow.pop %v1300
        %v1302 = vmul.f32 %v1281, 1.442695
        %v1303 = vpow.pop %v1302
        %v1304 = vmul.f32 %v1282, 1.442695
        %v1305 = vpow.pop %v1304
        %v1306 = vmul.f32 %v1283, 1.442695
        %v1307 = vpow.pop %v1306
        %v1308 = vmul.f32 %v1284, 1.442695
        %v1309 = vpow.pop %v1308
        %v1310 = vmul.f32 %v1285, 1.442695
        %v1311 = vpow.pop %v1310
        %v1312 = vmul.f32 %v1286, 1.442695
        %v1313 = vpow.pop %v1312
        %v1314 = vmul.f32 %v1287, 1.442695
        %v1315 = vpow.pop %v1314
        %v1316 = vmul.f32 %v1288, 1.442695
        %v1317 = vpow.pop %v1316
        %v1318 = vmul.f32 %v1289, 1.442695
        %v1319 = vpow.pop %v1318
        %v1320 = vmul.f32 %v1290, 1.442695
        %v1321 = vpow.pop %v1320
        %v1322 = vmul.f32 %v1291, 1.442695
        %v1323 = vpow.pop %v1322
        %1325 = vset.pattern.permute.xlu0 0
        %1326 = vperm.xlu0 %1325, %v1260
        %v1327 = vpop.permute.xlu0 %1326
        %1330 = vset.pattern.permute.xlu0 0
        %1331 = vperm.xlu0 %1330, %v1261
        %v1332 = vpop.permute.xlu0 %1331
        %1335 = vset.pattern.permute.xlu0 0
        %1336 = vperm.xlu0 %1335, %v1262
        %v1337 = vpop.permute.xlu0 %1336
        %1340 = vset.pattern.permute.xlu0 0
        %1341 = vperm.xlu0 %1340, %v1263
        %v1342 = vpop.permute.xlu0 %1341
        %1345 = vset.pattern.permute.xlu0 0
        %1346 = vperm.xlu0 %1345, %v1264
        %v1347 = vpop.permute.xlu0 %1346
        %1350 = vset.pattern.permute.xlu0 0
        %1351 = vperm.xlu0 %1350, %v1265
        %v1352 = vpop.permute.xlu0 %1351
        %1355 = vset.pattern.permute.xlu0 0
        %1356 = vperm.xlu0 %1355, %v1266
        %v1357 = vpop.permute.xlu0 %1356
        %1360 = vset.pattern.permute.xlu0 0
        %1361 = vperm.xlu0 %1360, %v1267
        %v1362 = vpop.permute.xlu0 %1361
        %1365 = vset.pattern.permute.xlu0 0
        %1366 = vperm.xlu0 %1365, %v1268
        %v1367 = vpop.permute.xlu0 %1366
        %1370 = vset.pattern.permute.xlu0 0
        %1371 = vperm.xlu0 %1370, %v1269
        %v1372 = vpop.permute.xlu0 %1371
        %1375 = vset.pattern.permute.xlu0 0
        %1376 = vperm.xlu0 %1375, %v1270
        %v1377 = vpop.permute.xlu0 %1376
        %1380 = vset.pattern.permute.xlu0 0
        %1381 = vperm.xlu0 %1380, %v1271
        %v1382 = vpop.permute.xlu0 %1381
        %1385 = vset.pattern.permute.xlu0 0
        %1386 = vperm.xlu0 %1385, %v1272
        %v1387 = vpop.permute.xlu0 %1386
        %1390 = vset.pattern.permute.xlu0 0
        %1391 = vperm.xlu0 %1390, %v1273
        %v1392 = vpop.permute.xlu0 %1391
        %1395 = vset.pattern.permute.xlu0 0
        %1396 = vperm.xlu0 %1395, %v1274
        %v1397 = vpop.permute.xlu0 %1396
        %1400 = vset.pattern.permute.xlu0 0
        %1401 = vperm.xlu0 %1400, %v1275
        %v1402 = vpop.permute.xlu0 %1401
        %v1404 = vsub.f32 %v1196, %v1327
        %v1405 = vsub.f32 %v1197, %v1332
        %v1406 = vsub.f32 %v1198, %v1337
        %v1407 = vsub.f32 %v1199, %v1342
        %v1408 = vsub.f32 %v1200, %v1347
        %v1409 = vsub.f32 %v1201, %v1352
        %v1410 = vsub.f32 %v1202, %v1357
        %v1411 = vsub.f32 %v1203, %v1362
        %v1412 = vsub.f32 %v1204, %v1367
        %v1413 = vsub.f32 %v1205, %v1372
        %v1414 = vsub.f32 %v1206, %v1377
        %v1415 = vsub.f32 %v1207, %v1382
        %v1416 = vsub.f32 %v1208, %v1387
        %v1417 = vsub.f32 %v1209, %v1392
        %v1418 = vsub.f32 %v1210, %v1397
        %v1419 = vsub.f32 %v1211, %v1402
        %v1420 = vmul.f32 %v1404, 1.442695
        %v1421 = vpow.pop %v1420
        %v1422 = vmul.f32 %v1405, 1.442695
        %v1423 = vpow.pop %v1422
        %v1424 = vmul.f32 %v1406, 1.442695
        %v1425 = vpow.pop %v1424
        %v1426 = vmul.f32 %v1407, 1.442695
        %v1427 = vpow.pop %v1426
        %v1428 = vmul.f32 %v1408, 1.442695
        %v1429 = vpow.pop %v1428
        %v1430 = vmul.f32 %v1409, 1.442695
        %v1431 = vpow.pop %v1430
        %v1432 = vmul.f32 %v1410, 1.442695
        %v1433 = vpow.pop %v1432
        %v1434 = vmul.f32 %v1411, 1.442695
        %v1435 = vpow.pop %v1434
        %v1436 = vmul.f32 %v1412, 1.442695
        %v1437 = vpow.pop %v1436
        %v1438 = vmul.f32 %v1413, 1.442695
        %v1439 = vpow.pop %v1438
        %v1440 = vmul.f32 %v1414, 1.442695
        %v1441 = vpow.pop %v1440
        %v1442 = vmul.f32 %v1415, 1.442695
        %v1443 = vpow.pop %v1442
        %v1444 = vmul.f32 %v1416, 1.442695
        %v1445 = vpow.pop %v1444
        %v1446 = vmul.f32 %v1417, 1.442695
        %v1447 = vpow.pop %v1446
        %v1448 = vmul.f32 %v1418, 1.442695
        %v1449 = vpow.pop %v1448
        %v1450 = vmul.f32 %v1419, 1.442695
        %v1451 = vpow.pop %v1450
        %v1452 = vld [vmem:[#allocation3] sm:$0xff]
        %v1453 = vld [vmem:[#allocation3 + $0x8] sm:$0xff]
        %v1454 = vld [vmem:[#allocation3 + $0x10] sm:$0xff]
        %v1455 = vld [vmem:[#allocation3 + $0x18] sm:$0xff]
        %v1456 = vld [vmem:[#allocation3 + $0x20] sm:$0xff]
        %v1457 = vld [vmem:[#allocation3 + $0x28] sm:$0xff]
        %v1458 = vld [vmem:[#allocation3 + $0x30] sm:$0xff]
        %v1459 = vld [vmem:[#allocation3 + $0x38] sm:$0xff]
        %v1460 = vld [vmem:[#allocation3 + $0x40] sm:$0xff]
        %v1461 = vld [vmem:[#allocation3 + $0x48] sm:$0xff]
        %v1462 = vld [vmem:[#allocation3 + $0x50] sm:$0xff]
        %v1463 = vld [vmem:[#allocation3 + $0x58] sm:$0xff]
        %v1464 = vld [vmem:[#allocation3 + $0x60] sm:$0xff]
        %v1465 = vld [vmem:[#allocation3 + $0x68] sm:$0xff]
        %v1466 = vld [vmem:[#allocation3 + $0x70] sm:$0xff]
        %v1467 = vld [vmem:[#allocation3 + $0x78] sm:$0xff]
        %v1468 = vmul.f32 %v1293, %v1452
        %v1469 = vmul.f32 %v1295, %v1453
        %v1470 = vmul.f32 %v1297, %v1454
        %v1471 = vmul.f32 %v1299, %v1455
        %v1472 = vmul.f32 %v1301, %v1456
        %v1473 = vmul.f32 %v1303, %v1457
        %v1474 = vmul.f32 %v1305, %v1458
        %v1475 = vmul.f32 %v1307, %v1459
        %v1476 = vmul.f32 %v1309, %v1460
        %v1477 = vmul.f32 %v1311, %v1461
        %v1478 = vmul.f32 %v1313, %v1462
        %v1479 = vmul.f32 %v1315, %v1463
        %v1480 = vmul.f32 %v1317, %v1464
        %v1481 = vmul.f32 %v1319, %v1465
        %v1482 = vmul.f32 %v1321, %v1466
        %v1483 = vmul.f32 %v1323, %v1467
        %1484 = vadd.xlane.f32.xlu0 %v1421
        %v1485 = vpop.xlane.xlu0 %1484
        %1486 = vadd.xlane.f32.xlu0 %v1423
        %v1487 = vpop.xlane.xlu0 %1486
        %1488 = vadd.xlane.f32.xlu0 %v1425
        %v1489 = vpop.xlane.xlu0 %1488
        %1490 = vadd.xlane.f32.xlu0 %v1427
        %v1491 = vpop.xlane.xlu0 %1490
        %1492 = vadd.xlane.f32.xlu0 %v1429
        %v1493 = vpop.xlane.xlu0 %1492
        %1494 = vadd.xlane.f32.xlu0 %v1431
        %v1495 = vpop.xlane.xlu0 %1494
        %1496 = vadd.xlane.f32.xlu0 %v1433
        %v1497 = vpop.xlane.xlu0 %1496
        %1498 = vadd.xlane.f32.xlu0 %v1435
        %v1499 = vpop.xlane.xlu0 %1498
        %1500 = vadd.xlane.f32.xlu0 %v1437
        %v1501 = vpop.xlane.xlu0 %1500
        %1502 = vadd.xlane.f32.xlu0 %v1439
        %v1503 = vpop.xlane.xlu0 %1502
        %1504 = vadd.xlane.f32.xlu0 %v1441
        %v1505 = vpop.xlane.xlu0 %1504
        %1506 = vadd.xlane.f32.xlu0 %v1443
        %v1507 = vpop.xlane.xlu0 %1506
        %1508 = vadd.xlane.f32.xlu0 %v1445
        %v1509 = vpop.xlane.xlu0 %1508
        %1510 = vadd.xlane.f32.xlu0 %v1447
        %v1511 = vpop.xlane.xlu0 %1510
        %1512 = vadd.xlane.f32.xlu0 %v1449
        %v1513 = vpop.xlane.xlu0 %1512
        %1514 = vadd.xlane.f32.xlu0 %v1451
        %v1515 = vpop.xlane.xlu0 %1514
        %v1516 = vadd.f32 %v1468, %v1485
        %v1517 = vadd.f32 %v1469, %v1487
        %v1518 = vadd.f32 %v1470, %v1489
        %v1519 = vadd.f32 %v1471, %v1491
        %v1520 = vadd.f32 %v1472, %v1493
        %v1521 = vadd.f32 %v1473, %v1495
        %v1522 = vadd.f32 %v1474, %v1497
        %v1523 = vadd.f32 %v1475, %v1499
        %v1524 = vadd.f32 %v1476, %v1501
        %v1525 = vadd.f32 %v1477, %v1503
        %v1526 = vadd.f32 %v1478, %v1505
        %v1527 = vadd.f32 %v1479, %v1507
        %v1528 = vadd.f32 %v1480, %v1509
        %v1529 = vadd.f32 %v1481, %v1511
        %v1530 = vadd.f32 %v1482, %v1513
        %v1531 = vadd.f32 %v1483, %v1515
        %vm1532 = vcmask 7168
        %1533 = vst.msk [vmem:[#allocation3] sm:$0xff] %vm1532, %v1516
        %1534 = vst.msk [vmem:[#allocation3 + $0x8] sm:$0xff] %vm1532, %v1517
        %1535 = vst.msk [vmem:[#allocation3 + $0x10] sm:$0xff] %vm1532, %v1518
        %1536 = vst.msk [vmem:[#allocation3 + $0x18] sm:$0xff] %vm1532, %v1519
        %1537 = vst.msk [vmem:[#allocation3 + $0x20] sm:$0xff] %vm1532, %v1520
        %1538 = vst.msk [vmem:[#allocation3 + $0x28] sm:$0xff] %vm1532, %v1521
        %1539 = vst.msk [vmem:[#allocation3 + $0x30] sm:$0xff] %vm1532, %v1522
        %1540 = vst.msk [vmem:[#allocation3 + $0x38] sm:$0xff] %vm1532, %v1523
        %1541 = vst.msk [vmem:[#allocation3 + $0x40] sm:$0xff] %vm1532, %v1524
        %1542 = vst.msk [vmem:[#allocation3 + $0x48] sm:$0xff] %vm1532, %v1525
        %1543 = vst.msk [vmem:[#allocation3 + $0x50] sm:$0xff] %vm1532, %v1526
        %1544 = vst.msk [vmem:[#allocation3 + $0x58] sm:$0xff] %vm1532, %v1527
        %1545 = vst.msk [vmem:[#allocation3 + $0x60] sm:$0xff] %vm1532, %v1528
        %1546 = vst.msk [vmem:[#allocation3 + $0x68] sm:$0xff] %vm1532, %v1529
        %1547 = vst.msk [vmem:[#allocation3 + $0x70] sm:$0xff] %vm1532, %v1530
        %1548 = vst.msk [vmem:[#allocation3 + $0x78] sm:$0xff] %vm1532, %v1531
        %v1549 = vld [vmem:[#allocation4] sm:$0xff]
        %v1550 = vld [vmem:[#allocation4 + $0x8] sm:$0xff]
        %v1551 = vld [vmem:[#allocation4 + $0x10] sm:$0xff]
        %v1552 = vld [vmem:[#allocation4 + $0x18] sm:$0xff]
        %v1553 = vld [vmem:[#allocation4 + $0x20] sm:$0xff]
        %v1554 = vld [vmem:[#allocation4 + $0x28] sm:$0xff]
        %v1555 = vld [vmem:[#allocation4 + $0x30] sm:$0xff]
        %v1556 = vld [vmem:[#allocation4 + $0x38] sm:$0xff]
        %v1557 = vld [vmem:[#allocation4 + $0x40] sm:$0xff]
        %v1558 = vld [vmem:[#allocation4 + $0x48] sm:$0xff]
        %v1559 = vld [vmem:[#allocation4 + $0x50] sm:$0xff]
        %v1560 = vld [vmem:[#allocation4 + $0x58] sm:$0xff]
        %v1561 = vld [vmem:[#allocation4 + $0x60] sm:$0xff]
        %v1562 = vld [vmem:[#allocation4 + $0x68] sm:$0xff]
        %v1563 = vld [vmem:[#allocation4 + $0x70] sm:$0xff]
        %v1564 = vld [vmem:[#allocation4 + $0x78] sm:$0xff]
        %1566 = vset.pattern.permute.xlu0 0
        %1567 = vperm.xlu0 %1566, %v1293
        %v1568 = vpop.permute.xlu0 %1567
        %1571 = vset.pattern.permute.xlu0 0
        %1572 = vperm.xlu0 %1571, %v1295
        %v1573 = vpop.permute.xlu0 %1572
        %1576 = vset.pattern.permute.xlu0 0
        %1577 = vperm.xlu0 %1576, %v1297
        %v1578 = vpop.permute.xlu0 %1577
        %1581 = vset.pattern.permute.xlu0 0
        %1582 = vperm.xlu0 %1581, %v1299
        %v1583 = vpop.permute.xlu0 %1582
        %1586 = vset.pattern.permute.xlu0 0
        %1587 = vperm.xlu0 %1586, %v1301
        %v1588 = vpop.permute.xlu0 %1587
        %1591 = vset.pattern.permute.xlu0 0
        %1592 = vperm.xlu0 %1591, %v1303
        %v1593 = vpop.permute.xlu0 %1592
        %1596 = vset.pattern.permute.xlu0 0
        %1597 = vperm.xlu0 %1596, %v1305
        %v1598 = vpop.permute.xlu0 %1597
        %1601 = vset.pattern.permute.xlu0 0
        %1602 = vperm.xlu0 %1601, %v1307
        %v1603 = vpop.permute.xlu0 %1602
        %1606 = vset.pattern.permute.xlu0 0
        %1607 = vperm.xlu0 %1606, %v1309
        %v1608 = vpop.permute.xlu0 %1607
        %1611 = vset.pattern.permute.xlu0 0
        %1612 = vperm.xlu0 %1611, %v1311
        %v1613 = vpop.permute.xlu0 %1612
        %1616 = vset.pattern.permute.xlu0 0
        %1617 = vperm.xlu0 %1616, %v1313
        %v1618 = vpop.permute.xlu0 %1617
        %1621 = vset.pattern.permute.xlu0 0
        %1622 = vperm.xlu0 %1621, %v1315
        %v1623 = vpop.permute.xlu0 %1622
        %1626 = vset.pattern.permute.xlu0 0
        %1627 = vperm.xlu0 %1626, %v1317
        %v1628 = vpop.permute.xlu0 %1627
        %1631 = vset.pattern.permute.xlu0 0
        %1632 = vperm.xlu0 %1631, %v1319
        %v1633 = vpop.permute.xlu0 %1632
        %1636 = vset.pattern.permute.xlu0 0
        %1637 = vperm.xlu0 %1636, %v1321
        %v1638 = vpop.permute.xlu0 %1637
        %1641 = vset.pattern.permute.xlu0 0
        %1642 = vperm.xlu0 %1641, %v1323
        %v1643 = vpop.permute.xlu0 %1642
        %v1645 = vmul.f32 %v1568, %v1549
        %v1646 = vmul.f32 %v1573, %v1550
        %v1647 = vmul.f32 %v1578, %v1551
        %v1648 = vmul.f32 %v1583, %v1552
        %v1649 = vmul.f32 %v1588, %v1553
        %v1650 = vmul.f32 %v1593, %v1554
        %v1651 = vmul.f32 %v1598, %v1555
        %v1652 = vmul.f32 %v1603, %v1556
        %v1653 = vmul.f32 %v1608, %v1557
        %v1654 = vmul.f32 %v1613, %v1558
        %v1655 = vmul.f32 %v1618, %v1559
        %v1656 = vmul.f32 %v1623, %v1560
        %v1657 = vmul.f32 %v1628, %v1561
        %v1658 = vmul.f32 %v1633, %v1562
        %v1659 = vmul.f32 %v1638, %v1563
        %v1660 = vmul.f32 %v1643, %v1564
        %1661 = vmatprep.subr.mxu0 0.0
        %1662 = vmatpush1.msra.mxu0 %v1002
        %1663 = vmatprep.subr.mxu0 0.0
        %1664 = vmatpush1.msra.mxu0 %v1001
        %1665 = vmatprep.subr.mxu0 0.0
        %1666 = vmatpush1.msra.mxu0 %v1000
        %1667 = vmatprep.subr.mxu0 0.0
        %1668 = vmatpush1.msra.mxu0 %v999
        %1669 = vmatprep.subr.mxu0 0.0
        %1670 = vmatpush1.msra.mxu0 %v998
        %1671 = vmatprep.subr.mxu0 0.0
        %1672 = vmatpush1.msra.mxu0 %v997
        %1673 = vmatprep.subr.mxu0 0.0
        %1674 = vmatpush1.msra.mxu0 %v996
        %1675 = vmatprep.subr.mxu0 0.0
        %1676 = vmatpush1.msra.mxu0 %v995
        %1677 = vmatprep.subr.mxu0 0.0
        %1678 = vmatpush1.msra.mxu0 %v994
        %1679 = vmatprep.subr.mxu0 0.0
        %1680 = vmatpush1.msra.mxu0 %v993
        %1681 = vmatprep.subr.mxu0 0.0
        %1682 = vmatpush1.msra.mxu0 %v992
        %1683 = vmatprep.subr.mxu0 0.0
        %1684 = vmatpush1.msra.mxu0 %v991
        %1685 = vmatprep.subr.mxu0 0.0
        %1686 = vmatpush1.msra.mxu0 %v990
        %1687 = vmatprep.subr.mxu0 0.0
        %1688 = vmatpush1.msra.mxu0 %v989
        %1689 = vmatprep.subr.mxu0 0.0
        %1690 = vmatpush1.msra.mxu0 %v988
        %1691 = vmatprep.subr.mxu0 0.0
        %1692 = vmatpush1.msra.mxu0 %v987
        %1693 = vmatprep.subr.mxu0 0.0
        %1694 = vmatpush2.msra.mxu0 0.0
        %1695 = vmatprep.subr.mxu0 0.0
        %1696 = vmatpush2.msra.mxu0 0.0
        %1697 = vmatprep.subr.mxu0 0.0
        %1698 = vmatpush2.msra.mxu0 0.0
        %1699 = vmatprep.subr.mxu0 0.0
        %1700 = vmatpush2.msra.mxu0 0.0
        %1701 = vmatprep.subr.mxu0 0.0
        %1702 = vmatpush2.msra.mxu0 0.0
        %1703 = vmatprep.subr.mxu0 0.0
        %1704 = vmatpush2.msra.mxu0 0.0
        %1705 = vmatprep.subr.mxu0 0.0
        %1706 = vmatpush2.msra.mxu0 0.0
        %1707 = vmatprep.subr.mxu0 0.0
        %1708 = vmatpush2.msra.mxu0 0.0
        %1709 = vmatprep.subr.mxu0 0.0
        %1710 = vmatpush2.msra.mxu0 0.0
        %1711 = vmatprep.subr.mxu0 0.0
        %1712 = vmatpush2.msra.mxu0 0.0
        %1713 = vmatprep.subr.mxu0 0.0
        %1714 = vmatpush2.msra.mxu0 0.0
        %1715 = vmatprep.subr.mxu0 0.0
        %1716 = vmatpush2.msra.mxu0 0.0
        %1717 = vmatprep.subr.mxu0 0.0
        %1718 = vmatpush2.msra.mxu0 0.0
        %1719 = vmatprep.subr.mxu0 0.0
        %1720 = vmatpush2.msra.mxu0 0.0
        %1721 = vmatprep.subr.mxu0 0.0
        %1722 = vmatpush2.msra.mxu0 0.0
        %1723 = vmatprep.subr.mxu0 0.0
        %1724 = vmatpush2.msra.mxu0 0.0
        %1725 = vmatprep.mubr.f32.mxu0 0.0
        %1726 = vmatmul.mubr.f32.gmra.mxu0 %v1421
        %v1727 = vpop.f32.mrf.mxu0
        %v1728 = vadd.f32 0.0, %v1727
        %v1729 = vpop.f32.mrf.mxu0
        %1730 = vmatprep.mubr.f32.mxu0 0.0
        %1731 = vmatmul.mubr.f32.gmra.mxu0 %v1423
        %v1732 = vpop.f32.mrf.mxu0
        %v1733 = vadd.f32 0.0, %v1732
        %v1734 = vpop.f32.mrf.mxu0
        %1735 = vmatprep.mubr.f32.mxu0 0.0
        %1736 = vmatmul.mubr.f32.gmra.mxu0 %v1425
        %v1737 = vpop.f32.mrf.mxu0
        %v1738 = vadd.f32 0.0, %v1737
        %v1739 = vpop.f32.mrf.mxu0
        %1740 = vmatprep.mubr.f32.mxu0 0.0
        %1741 = vmatmul.mubr.f32.gmra.mxu0 %v1427
        %v1742 = vpop.f32.mrf.mxu0
        %v1743 = vadd.f32 0.0, %v1742
        %v1744 = vpop.f32.mrf.mxu0
        %1745 = vmatprep.mubr.f32.mxu0 0.0
        %1746 = vmatmul.mubr.f32.gmra.mxu0 %v1429
        %v1747 = vpop.f32.mrf.mxu0
        %v1748 = vadd.f32 0.0, %v1747
        %v1749 = vpop.f32.mrf.mxu0
        %1750 = vmatprep.mubr.f32.mxu0 0.0
        %1751 = vmatmul.mubr.f32.gmra.mxu0 %v1431
        %v1752 = vpop.f32.mrf.mxu0
        %v1753 = vadd.f32 0.0, %v1752
        %v1754 = vpop.f32.mrf.mxu0
        %1755 = vmatprep.mubr.f32.mxu0 0.0
        %1756 = vmatmul.mubr.f32.gmra.mxu0 %v1433
        %v1757 = vpop.f32.mrf.mxu0
        %v1758 = vadd.f32 0.0, %v1757
        %v1759 = vpop.f32.mrf.mxu0
        %1760 = vmatprep.mubr.f32.mxu0 0.0
        %1761 = vmatmul.mubr.f32.gmra.mxu0 %v1435
        %v1762 = vpop.f32.mrf.mxu0
        %v1763 = vadd.f32 0.0, %v1762
        %v1764 = vpop.f32.mrf.mxu0
        %1765 = vmatprep.mubr.f32.mxu0 0.0
        %1766 = vmatmul.mubr.f32.gmra.mxu0 %v1437
        %v1767 = vpop.f32.mrf.mxu0
        %v1768 = vadd.f32 0.0, %v1767
        %v1769 = vpop.f32.mrf.mxu0
        %1770 = vmatprep.mubr.f32.mxu0 0.0
        %1771 = vmatmul.mubr.f32.gmra.mxu0 %v1439
        %v1772 = vpop.f32.mrf.mxu0
        %v1773 = vadd.f32 0.0, %v1772
        %v1774 = vpop.f32.mrf.mxu0
        %1775 = vmatprep.mubr.f32.mxu0 0.0
        %1776 = vmatmul.mubr.f32.gmra.mxu0 %v1441
        %v1777 = vpop.f32.mrf.mxu0
        %v1778 = vadd.f32 0.0, %v1777
        %v1779 = vpop.f32.mrf.mxu0
        %1780 = vmatprep.mubr.f32.mxu0 0.0
        %1781 = vmatmul.mubr.f32.gmra.mxu0 %v1443
        %v1782 = vpop.f32.mrf.mxu0
        %v1783 = vadd.f32 0.0, %v1782
        %v1784 = vpop.f32.mrf.mxu0
        %1785 = vmatprep.mubr.f32.mxu0 0.0
        %1786 = vmatmul.mubr.f32.gmra.mxu0 %v1445
        %v1787 = vpop.f32.mrf.mxu0
        %v1788 = vadd.f32 0.0, %v1787
        %v1789 = vpop.f32.mrf.mxu0
        %1790 = vmatprep.mubr.f32.mxu0 0.0
        %1791 = vmatmul.mubr.f32.gmra.mxu0 %v1447
        %v1792 = vpop.f32.mrf.mxu0
        %v1793 = vadd.f32 0.0, %v1792
        %v1794 = vpop.f32.mrf.mxu0
        %1795 = vmatprep.mubr.f32.mxu0 0.0
        %1796 = vmatmul.mubr.f32.gmra.mxu0 %v1449
        %v1797 = vpop.f32.mrf.mxu0
        %v1798 = vadd.f32 0.0, %v1797
        %v1799 = vpop.f32.mrf.mxu0
        %1800 = vmatprep.mubr.f32.mxu0 0.0
        %1801 = vmatmul.mubr.f32.gmra.mxu0 %v1451
        %v1802 = vpop.f32.mrf.mxu0
        %v1803 = vadd.f32 0.0, %v1802
        %v1804 = vpop.f32.mrf.mxu0
        %1805 = vdwg.mxu0
        %v1806 = vadd.f32 %v1645, %v1728
        %v1807 = vadd.f32 %v1646, %v1733
        %v1808 = vadd.f32 %v1647, %v1738
        %v1809 = vadd.f32 %v1648, %v1743
        %v1810 = vadd.f32 %v1649, %v1748
        %v1811 = vadd.f32 %v1650, %v1753
        %v1812 = vadd.f32 %v1651, %v1758
        %v1813 = vadd.f32 %v1652, %v1763
        %v1814 = vadd.f32 %v1653, %v1768
        %v1815 = vadd.f32 %v1654, %v1773
        %v1816 = vadd.f32 %v1655, %v1778
        %v1817 = vadd.f32 %v1656, %v1783
        %v1818 = vadd.f32 %v1657, %v1788
        %v1819 = vadd.f32 %v1658, %v1793
        %v1820 = vadd.f32 %v1659, %v1798
        %v1821 = vadd.f32 %v1660, %v1803
        %1822 = vst [vmem:[#allocation4] sm:$0xff] %v1806
        %1823 = vst [vmem:[#allocation4 + $0x8] sm:$0xff] %v1807
        %1824 = vst [vmem:[#allocation4 + $0x10] sm:$0xff] %v1808
        %1825 = vst [vmem:[#allocation4 + $0x18] sm:$0xff] %v1809
        %1826 = vst [vmem:[#allocation4 + $0x20] sm:$0xff] %v1810
        %1827 = vst [vmem:[#allocation4 + $0x28] sm:$0xff] %v1811
        %1828 = vst [vmem:[#allocation4 + $0x30] sm:$0xff] %v1812
        %1829 = vst [vmem:[#allocation4 + $0x38] sm:$0xff] %v1813
        %1830 = vst [vmem:[#allocation4 + $0x40] sm:$0xff] %v1814
        %1831 = vst [vmem:[#allocation4 + $0x48] sm:$0xff] %v1815
        %1832 = vst [vmem:[#allocation4 + $0x50] sm:$0xff] %v1816
        %1833 = vst [vmem:[#allocation4 + $0x58] sm:$0xff] %v1817
        %1834 = vst [vmem:[#allocation4 + $0x60] sm:$0xff] %v1818
        %1835 = vst [vmem:[#allocation4 + $0x68] sm:$0xff] %v1819
        %1836 = vst [vmem:[#allocation4 + $0x70] sm:$0xff] %v1820
        %1837 = vst [vmem:[#allocation4 + $0x78] sm:$0xff] %v1821
        %v1838 = vld [vmem:[#allocation5] sm:$0xff]
        %v1839 = vld [vmem:[#allocation5 + $0x8] sm:$0xff]
        %v1840 = vld [vmem:[#allocation5 + $0x10] sm:$0xff]
        %v1841 = vld [vmem:[#allocation5 + $0x18] sm:$0xff]
        %v1842 = vld [vmem:[#allocation5 + $0x20] sm:$0xff]
        %v1843 = vld [vmem:[#allocation5 + $0x28] sm:$0xff]
        %v1844 = vld [vmem:[#allocation5 + $0x30] sm:$0xff]
        %v1845 = vld [vmem:[#allocation5 + $0x38] sm:$0xff]
        %v1846 = vld [vmem:[#allocation5 + $0x40] sm:$0xff]
        %v1847 = vld [vmem:[#allocation5 + $0x48] sm:$0xff]
        %v1848 = vld [vmem:[#allocation5 + $0x50] sm:$0xff]
        %v1849 = vld [vmem:[#allocation5 + $0x58] sm:$0xff]
        %v1850 = vld [vmem:[#allocation5 + $0x60] sm:$0xff]
        %v1851 = vld [vmem:[#allocation5 + $0x68] sm:$0xff]
        %v1852 = vld [vmem:[#allocation5 + $0x70] sm:$0xff]
        %v1853 = vld [vmem:[#allocation5 + $0x78] sm:$0xff]
        %1854 = vmatprep.subr.mxu0 0.0
        %1855 = vmatpush1.msra.mxu0 %v1002
        %1856 = vmatprep.subr.mxu0 0.0
        %1857 = vmatpush1.msra.mxu0 %v1001
        %1858 = vmatprep.subr.mxu0 0.0
        %1859 = vmatpush1.msra.mxu0 %v1000
        %1860 = vmatprep.subr.mxu0 0.0
        %1861 = vmatpush1.msra.mxu0 %v999
        %1862 = vmatprep.subr.mxu0 0.0
        %1863 = vmatpush1.msra.mxu0 %v998
        %1864 = vmatprep.subr.mxu0 0.0
        %1865 = vmatpush1.msra.mxu0 %v997
        %1866 = vmatprep.subr.mxu0 0.0
        %1867 = vmatpush1.msra.mxu0 %v996
        %1868 = vmatprep.subr.mxu0 0.0
        %1869 = vmatpush1.msra.mxu0 %v995
        %1870 = vmatprep.subr.mxu0 0.0
        %1871 = vmatpush1.msra.mxu0 %v994
        %1872 = vmatprep.subr.mxu0 0.0
        %1873 = vmatpush1.msra.mxu0 %v993
        %1874 = vmatprep.subr.mxu0 0.0
        %1875 = vmatpush1.msra.mxu0 %v992
        %1876 = vmatprep.subr.mxu0 0.0
        %1877 = vmatpush1.msra.mxu0 %v991
        %1878 = vmatprep.subr.mxu0 0.0
        %1879 = vmatpush1.msra.mxu0 %v990
        %1880 = vmatprep.subr.mxu0 0.0
        %1881 = vmatpush1.msra.mxu0 %v989
        %1882 = vmatprep.subr.mxu0 0.0
        %1883 = vmatpush1.msra.mxu0 %v988
        %1884 = vmatprep.subr.mxu0 0.0
        %1885 = vmatpush1.msra.mxu0 %v987
        %1886 = vmatprep.subr.mxu0 0.0
        %1887 = vmatpush2.msra.mxu0 0.0
        %1888 = vmatprep.subr.mxu0 0.0
        %1889 = vmatpush2.msra.mxu0 0.0
        %1890 = vmatprep.subr.mxu0 0.0
        %1891 = vmatpush2.msra.mxu0 0.0
        %1892 = vmatprep.subr.mxu0 0.0
        %1893 = vmatpush2.msra.mxu0 0.0
        %1894 = vmatprep.subr.mxu0 0.0
        %1895 = vmatpush2.msra.mxu0 0.0
        %1896 = vmatprep.subr.mxu0 0.0
        %1897 = vmatpush2.msra.mxu0 0.0
        %1898 = vmatprep.subr.mxu0 0.0
        %1899 = vmatpush2.msra.mxu0 0.0
        %1900 = vmatprep.subr.mxu0 0.0
        %1901 = vmatpush2.msra.mxu0 0.0
        %1902 = vmatprep.subr.mxu0 0.0
        %1903 = vmatpush2.msra.mxu0 0.0
        %1904 = vmatprep.subr.mxu0 0.0
        %1905 = vmatpush2.msra.mxu0 0.0
        %1906 = vmatprep.subr.mxu0 0.0
        %1907 = vmatpush2.msra.mxu0 0.0
        %1908 = vmatprep.subr.mxu0 0.0
        %1909 = vmatpush2.msra.mxu0 0.0
        %1910 = vmatprep.subr.mxu0 0.0
        %1911 = vmatpush2.msra.mxu0 0.0
        %1912 = vmatprep.subr.mxu0 0.0
        %1913 = vmatpush2.msra.mxu0 0.0
        %1914 = vmatprep.subr.mxu0 0.0
        %1915 = vmatpush2.msra.mxu0 0.0
        %1916 = vmatprep.subr.mxu0 0.0
        %1917 = vmatpush2.msra.mxu0 0.0
        %1918 = vmatprep.mubr.f32.mxu0 0.0
        %1919 = vmatmul.mubr.f32.gmra.mxu0 %v971
        %v1920 = vpop.f32.mrf.mxu0
        %v1921 = vadd.f32 0.0, %v1920
        %v1922 = vpop.f32.mrf.mxu0
        %1923 = vmatprep.mubr.f32.mxu0 0.0
        %1924 = vmatmul.mubr.f32.gmra.mxu0 %v972
        %v1925 = vpop.f32.mrf.mxu0
        %v1926 = vadd.f32 0.0, %v1925
        %v1927 = vpop.f32.mrf.mxu0
        %1928 = vmatprep.mubr.f32.mxu0 0.0
        %1929 = vmatmul.mubr.f32.gmra.mxu0 %v973
        %v1930 = vpop.f32.mrf.mxu0
        %v1931 = vadd.f32 0.0, %v1930
        %v1932 = vpop.f32.mrf.mxu0
        %1933 = vmatprep.mubr.f32.mxu0 0.0
        %1934 = vmatmul.mubr.f32.gmra.mxu0 %v974
        %v1935 = vpop.f32.mrf.mxu0
        %v1936 = vadd.f32 0.0, %v1935
        %v1937 = vpop.f32.mrf.mxu0
        %1938 = vmatprep.mubr.f32.mxu0 0.0
        %1939 = vmatmul.mubr.f32.gmra.mxu0 %v975
        %v1940 = vpop.f32.mrf.mxu0
        %v1941 = vadd.f32 0.0, %v1940
        %v1942 = vpop.f32.mrf.mxu0
        %1943 = vmatprep.mubr.f32.mxu0 0.0
        %1944 = vmatmul.mubr.f32.gmra.mxu0 %v976
        %v1945 = vpop.f32.mrf.mxu0
        %v1946 = vadd.f32 0.0, %v1945
        %v1947 = vpop.f32.mrf.mxu0
        %1948 = vmatprep.mubr.f32.mxu0 0.0
        %1949 = vmatmul.mubr.f32.gmra.mxu0 %v977
        %v1950 = vpop.f32.mrf.mxu0
        %v1951 = vadd.f32 0.0, %v1950
        %v1952 = vpop.f32.mrf.mxu0
        %1953 = vmatprep.mubr.f32.mxu0 0.0
        %1954 = vmatmul.mubr.f32.gmra.mxu0 %v978
        %v1955 = vpop.f32.mrf.mxu0
        %v1956 = vadd.f32 0.0, %v1955
        %v1957 = vpop.f32.mrf.mxu0
        %1958 = vmatprep.mubr.f32.mxu0 0.0
        %1959 = vmatmul.mubr.f32.gmra.mxu0 %v979
        %v1960 = vpop.f32.mrf.mxu0
        %v1961 = vadd.f32 0.0, %v1960
        %v1962 = vpop.f32.mrf.mxu0
        %1963 = vmatprep.mubr.f32.mxu0 0.0
        %1964 = vmatmul.mubr.f32.gmra.mxu0 %v980
        %v1965 = vpop.f32.mrf.mxu0
        %v1966 = vadd.f32 0.0, %v1965
        %v1967 = vpop.f32.mrf.mxu0
        %1968 = vmatprep.mubr.f32.mxu0 0.0
        %1969 = vmatmul.mubr.f32.gmra.mxu0 %v981
        %v1970 = vpop.f32.mrf.mxu0
        %v1971 = vadd.f32 0.0, %v1970
        %v1972 = vpop.f32.mrf.mxu0
        %1973 = vmatprep.mubr.f32.mxu0 0.0
        %1974 = vmatmul.mubr.f32.gmra.mxu0 %v982
        %v1975 = vpop.f32.mrf.mxu0
        %v1976 = vadd.f32 0.0, %v1975
        %v1977 = vpop.f32.mrf.mxu0
        %1978 = vmatprep.mubr.f32.mxu0 0.0
        %1979 = vmatmul.mubr.f32.gmra.mxu0 %v983
        %v1980 = vpop.f32.mrf.mxu0
        %v1981 = vadd.f32 0.0, %v1980
        %v1982 = vpop.f32.mrf.mxu0
        %1983 = vmatprep.mubr.f32.mxu0 0.0
        %1984 = vmatmul.mubr.f32.gmra.mxu0 %v984
        %v1985 = vpop.f32.mrf.mxu0
        %v1986 = vadd.f32 0.0, %v1985
        %v1987 = vpop.f32.mrf.mxu0
        %1988 = vmatprep.mubr.f32.mxu0 0.0
        %1989 = vmatmul.mubr.f32.gmra.mxu0 %v985
        %v1990 = vpop.f32.mrf.mxu0
        %v1991 = vadd.f32 0.0, %v1990
        %v1992 = vpop.f32.mrf.mxu0
        %1993 = vmatprep.mubr.f32.mxu0 0.0
        %1994 = vmatmul.mubr.f32.gmra.mxu0 %v986
        %v1995 = vpop.f32.mrf.mxu0
        %v1996 = vadd.f32 0.0, %v1995
        %v1997 = vpop.f32.mrf.mxu0
        %1998 = vdwg.mxu0
        %v1999 = vadd.f32 %v1838, %v1921
        %v2000 = vadd.f32 %v1839, %v1926
        %v2001 = vadd.f32 %v1840, %v1931
        %v2002 = vadd.f32 %v1841, %v1936
        %v2003 = vadd.f32 %v1842, %v1941
        %v2004 = vadd.f32 %v1843, %v1946
        %v2005 = vadd.f32 %v1844, %v1951
        %v2006 = vadd.f32 %v1845, %v1956
        %v2007 = vadd.f32 %v1846, %v1961
        %v2008 = vadd.f32 %v1847, %v1966
        %v2009 = vadd.f32 %v1848, %v1971
        %v2010 = vadd.f32 %v1849, %v1976
        %v2011 = vadd.f32 %v1850, %v1981
        %v2012 = vadd.f32 %v1851, %v1986
        %v2013 = vadd.f32 %v1852, %v1991
        %v2014 = vadd.f32 %v1853, %v1996
        %2015 = vst [vmem:[#allocation5] sm:$0xff] %v1999
        %2016 = vst [vmem:[#allocation5 + $0x8] sm:$0xff] %v2000
        %2017 = vst [vmem:[#allocation5 + $0x10] sm:$0xff] %v2001
        %2018 = vst [vmem:[#allocation5 + $0x18] sm:$0xff] %v2002
        %2019 = vst [vmem:[#allocation5 + $0x20] sm:$0xff] %v2003
        %2020 = vst [vmem:[#allocation5 + $0x28] sm:$0xff] %v2004
        %2021 = vst [vmem:[#allocation5 + $0x30] sm:$0xff] %v2005
        %2022 = vst [vmem:[#allocation5 + $0x38] sm:$0xff] %v2006
        %2023 = vst [vmem:[#allocation5 + $0x40] sm:$0xff] %v2007
        %2024 = vst [vmem:[#allocation5 + $0x48] sm:$0xff] %v2008
        %2025 = vst [vmem:[#allocation5 + $0x50] sm:$0xff] %v2009
        %2026 = vst [vmem:[#allocation5 + $0x58] sm:$0xff] %v2010
        %2027 = vst [vmem:[#allocation5 + $0x60] sm:$0xff] %v2011
        %2028 = vst [vmem:[#allocation5 + $0x68] sm:$0xff] %v2012
        %2029 = vst [vmem:[#allocation5 + $0x70] sm:$0xff] %v2013
        %2030 = vst [vmem:[#allocation5 + $0x78] sm:$0xff] %v2014
        %2031 = vst.msk [vmem:[#allocation2] sm:$0xff] %vm1532, %v1260
        %2032 = vst.msk [vmem:[#allocation2 + $0x8] sm:$0xff] %vm1532, %v1261
        %2033 = vst.msk [vmem:[#allocation2 + $0x10] sm:$0xff] %vm1532, %v1262
        %2034 = vst.msk [vmem:[#allocation2 + $0x18] sm:$0xff] %vm1532, %v1263
        %2035 = vst.msk [vmem:[#allocation2 + $0x20] sm:$0xff] %vm1532, %v1264
        %2036 = vst.msk [vmem:[#allocation2 + $0x28] sm:$0xff] %vm1532, %v1265
        %2037 = vst.msk [vmem:[#allocation2 + $0x30] sm:$0xff] %vm1532, %v1266
        %2038 = vst.msk [vmem:[#allocation2 + $0x38] sm:$0xff] %vm1532, %v1267
        %2039 = vst.msk [vmem:[#allocation2 + $0x40] sm:$0xff] %vm1532, %v1268
        %2040 = vst.msk [vmem:[#allocation2 + $0x48] sm:$0xff] %vm1532, %v1269
        %2041 = vst.msk [vmem:[#allocation2 + $0x50] sm:$0xff] %vm1532, %v1270
        %2042 = vst.msk [vmem:[#allocation2 + $0x58] sm:$0xff] %vm1532, %v1271
        %2043 = vst.msk [vmem:[#allocation2 + $0x60] sm:$0xff] %vm1532, %v1272
        %2044 = vst.msk [vmem:[#allocation2 + $0x68] sm:$0xff] %vm1532, %v1273
        %2045 = vst.msk [vmem:[#allocation2 + $0x70] sm:$0xff] %vm1532, %v1274
        %2046 = vst.msk [vmem:[#allocation2 + $0x78] sm:$0xff] %vm1532, %v1275
        %p2047 = scmp.eq.s32.totalorder %s26, 1
        // Predicated region
        $region213: #{ggat_forward.3} parent=187 // pred_check
          %p2048 = pneg %p2047
        $region214: #{ggat_forward.3} parent=187 // pred_check_branch
          %2050 = sbr.rel (%p2048) target = $region216
        $region215: #{ggat_forward.3} parent=187 // pred_region
          %v2051 = vld [vmem:[%s858] sm:$0x3]
          %v2052 = vld [vmem:[#allocation4] sm:$0xff]
          %v2053 = vld [vmem:[#allocation4 + $0x8] sm:$0xff]
          %v2054 = vld [vmem:[#allocation4 + $0x10] sm:$0xff]
          %v2055 = vld [vmem:[#allocation4 + $0x18] sm:$0xff]
          %v2056 = vld [vmem:[#allocation4 + $0x20] sm:$0xff]
          %v2057 = vld [vmem:[#allocation4 + $0x28] sm:$0xff]
          %v2058 = vld [vmem:[#allocation4 + $0x30] sm:$0xff]
          %v2059 = vld [vmem:[#allocation4 + $0x38] sm:$0xff]
          %v2060 = vld [vmem:[#allocation4 + $0x40] sm:$0xff]
          %v2061 = vld [vmem:[#allocation4 + $0x48] sm:$0xff]
          %v2062 = vld [vmem:[#allocation4 + $0x50] sm:$0xff]
          %v2063 = vld [vmem:[#allocation4 + $0x58] sm:$0xff]
          %v2064 = vld [vmem:[#allocation4 + $0x60] sm:$0xff]
          %v2065 = vld [vmem:[#allocation4 + $0x68] sm:$0xff]
          %v2066 = vld [vmem:[#allocation4 + $0x70] sm:$0xff]
          %v2067 = vld [vmem:[#allocation4 + $0x78] sm:$0xff]
          %v2068 = vld [vmem:[#allocation3] sm:$0xff]
          %v2069 = vld [vmem:[#allocation3 + $0x8] sm:$0xff]
          %v2070 = vld [vmem:[#allocation3 + $0x10] sm:$0xff]
          %v2071 = vld [vmem:[#allocation3 + $0x18] sm:$0xff]
          %v2072 = vld [vmem:[#allocation3 + $0x20] sm:$0xff]
          %v2073 = vld [vmem:[#allocation3 + $0x28] sm:$0xff]
          %v2074 = vld [vmem:[#allocation3 + $0x30] sm:$0xff]
          %v2075 = vld [vmem:[#allocation3 + $0x38] sm:$0xff]
          %v2076 = vld [vmem:[#allocation3 + $0x40] sm:$0xff]
          %v2077 = vld [vmem:[#allocation3 + $0x48] sm:$0xff]
          %v2078 = vld [vmem:[#allocation3 + $0x50] sm:$0xff]
          %v2079 = vld [vmem:[#allocation3 + $0x58] sm:$0xff]
          %v2080 = vld [vmem:[#allocation3 + $0x60] sm:$0xff]
          %v2081 = vld [vmem:[#allocation3 + $0x68] sm:$0xff]
          %v2082 = vld [vmem:[#allocation3 + $0x70] sm:$0xff]
          %v2083 = vld [vmem:[#allocation3 + $0x78] sm:$0xff]
          %v2084 = vrcp.pop %v2068
          %v2085 = vrcp.pop %v2069
          %v2086 = vrcp.pop %v2070
          %v2087 = vrcp.pop %v2071
          %v2088 = vrcp.pop %v2072
          %v2089 = vrcp.pop %v2073
          %v2090 = vrcp.pop %v2074
          %v2091 = vrcp.pop %v2075
          %v2092 = vrcp.pop %v2076
          %v2093 = vrcp.pop %v2077
          %v2094 = vrcp.pop %v2078
          %v2095 = vrcp.pop %v2079
          %v2096 = vrcp.pop %v2080
          %v2097 = vrcp.pop %v2081
          %v2098 = vrcp.pop %v2082
          %v2099 = vrcp.pop %v2083
          %2101 = vset.pattern.permute.xlu0 0
          %2102 = vperm.xlu0 %2101, %v2084
          %v2103 = vpop.permute.xlu0 %2102
          %2106 = vset.pattern.permute.xlu0 0
          %2107 = vperm.xlu0 %2106, %v2085
          %v2108 = vpop.permute.xlu0 %2107
          %2111 = vset.pattern.permute.xlu0 0
          %2112 = vperm.xlu0 %2111, %v2086
          %v2113 = vpop.permute.xlu0 %2112
          %2116 = vset.pattern.permute.xlu0 0
          %2117 = vperm.xlu0 %2116, %v2087
          %v2118 = vpop.permute.xlu0 %2117
          %2121 = vset.pattern.permute.xlu0 0
          %2122 = vperm.xlu0 %2121, %v2088
          %v2123 = vpop.permute.xlu0 %2122
          %2126 = vset.pattern.permute.xlu0 0
          %2127 = vperm.xlu0 %2126, %v2089
          %v2128 = vpop.permute.xlu0 %2127
          %2131 = vset.pattern.permute.xlu0 0
          %2132 = vperm.xlu0 %2131, %v2090
          %v2133 = vpop.permute.xlu0 %2132
          %2136 = vset.pattern.permute.xlu0 0
          %2137 = vperm.xlu0 %2136, %v2091
          %v2138 = vpop.permute.xlu0 %2137
          %2141 = vset.pattern.permute.xlu0 0
          %2142 = vperm.xlu0 %2141, %v2092
          %v2143 = vpop.permute.xlu0 %2142
          %2146 = vset.pattern.permute.xlu0 0
          %2147 = vperm.xlu0 %2146, %v2093
          %v2148 = vpop.permute.xlu0 %2147
          %2151 = vset.pattern.permute.xlu0 0
          %2152 = vperm.xlu0 %2151, %v2094
          %v2153 = vpop.permute.xlu0 %2152
          %2156 = vset.pattern.permute.xlu0 0
          %2157 = vperm.xlu0 %2156, %v2095
          %v2158 = vpop.permute.xlu0 %2157
          %2161 = vset.pattern.permute.xlu0 0
          %2162 = vperm.xlu0 %2161, %v2096
          %v2163 = vpop.permute.xlu0 %2162
          %2166 = vset.pattern.permute.xlu0 0
          %2167 = vperm.xlu0 %2166, %v2097
          %v2168 = vpop.permute.xlu0 %2167
          %2171 = vset.pattern.permute.xlu0 0
          %2172 = vperm.xlu0 %2171, %v2098
          %v2173 = vpop.permute.xlu0 %2172
          %2176 = vset.pattern.permute.xlu0 0
          %2177 = vperm.xlu0 %2176, %v2099
          %v2178 = vpop.permute.xlu0 %2177
          %v2180 = vmul.f32 %v2052, %v2103
          %v2181 = vmul.f32 %v2053, %v2108
          %v2182 = vmul.f32 %v2054, %v2113
          %v2183 = vmul.f32 %v2055, %v2118
          %v2184 = vmul.f32 %v2056, %v2123
          %v2185 = vmul.f32 %v2057, %v2128
          %v2186 = vmul.f32 %v2058, %v2133
          %v2187 = vmul.f32 %v2059, %v2138
          %v2188 = vmul.f32 %v2060, %v2143
          %v2189 = vmul.f32 %v2061, %v2148
          %v2190 = vmul.f32 %v2062, %v2153
          %v2191 = vmul.f32 %v2063, %v2158
          %v2192 = vmul.f32 %v2064, %v2163
          %v2193 = vmul.f32 %v2065, %v2168
          %v2194 = vmul.f32 %v2066, %v2173
          %v2195 = vmul.f32 %v2067, %v2178
          %v2196 = vlaneseq
          %v2197 = vshrl.u32 %v2196, 7
          %v2198 = vsub.s32 0, %v2197
          %v2199 = vrot.slane %v2051, %v2198
          %v2200 = vmul.f32 %v2180, %v2199
          %v2201 = vmul.f32 %v2181, %v2199
          %v2202 = vmul.f32 %v2182, %v2199
          %v2203 = vmul.f32 %v2183, %v2199
          %v2204 = vmul.f32 %v2184, %v2199
          %v2205 = vmul.f32 %v2185, %v2199
          %v2206 = vmul.f32 %v2186, %v2199
          %v2207 = vmul.f32 %v2187, %v2199
          %v2208 = vmul.f32 %v2188, %v2199
          %v2209 = vmul.f32 %v2189, %v2199
          %v2210 = vmul.f32 %v2190, %v2199
          %v2211 = vmul.f32 %v2191, %v2199
          %v2212 = vmul.f32 %v2192, %v2199
          %v2213 = vmul.f32 %v2193, %v2199
          %v2214 = vmul.f32 %v2194, %v2199
          %v2215 = vmul.f32 %v2195, %v2199
          %v2216 = vld [vmem:[#allocation5] sm:$0xff]
          %v2217 = vld [vmem:[#allocation5 + $0x8] sm:$0xff]
          %v2218 = vld [vmem:[#allocation5 + $0x10] sm:$0xff]
          %v2219 = vld [vmem:[#allocation5 + $0x18] sm:$0xff]
          %v2220 = vld [vmem:[#allocation5 + $0x20] sm:$0xff]
          %v2221 = vld [vmem:[#allocation5 + $0x28] sm:$0xff]
          %v2222 = vld [vmem:[#allocation5 + $0x30] sm:$0xff]
          %v2223 = vld [vmem:[#allocation5 + $0x38] sm:$0xff]
          %v2224 = vld [vmem:[#allocation5 + $0x40] sm:$0xff]
          %v2225 = vld [vmem:[#allocation5 + $0x48] sm:$0xff]
          %v2226 = vld [vmem:[#allocation5 + $0x50] sm:$0xff]
          %v2227 = vld [vmem:[#allocation5 + $0x58] sm:$0xff]
          %v2228 = vld [vmem:[#allocation5 + $0x60] sm:$0xff]
          %v2229 = vld [vmem:[#allocation5 + $0x68] sm:$0xff]
          %v2230 = vld [vmem:[#allocation5 + $0x70] sm:$0xff]
          %v2231 = vld [vmem:[#allocation5 + $0x78] sm:$0xff]
          %v2232 = vlaneseq
          %v2233 = vshrl.u32 %v2232, 7
          %v2234 = vsub.s32 1, %v2233
          %v2235 = vrot.slane %v2051, %v2234
          %v2236 = vmul.f32 %v2216, %v2235
          %v2237 = vmul.f32 %v2217, %v2235
          %v2238 = vmul.f32 %v2218, %v2235
          %v2239 = vmul.f32 %v2219, %v2235
          %v2240 = vmul.f32 %v2220, %v2235
          %v2241 = vmul.f32 %v2221, %v2235
          %v2242 = vmul.f32 %v2222, %v2235
          %v2243 = vmul.f32 %v2223, %v2235
          %v2244 = vmul.f32 %v2224, %v2235
          %v2245 = vmul.f32 %v2225, %v2235
          %v2246 = vmul.f32 %v2226, %v2235
          %v2247 = vmul.f32 %v2227, %v2235
          %v2248 = vmul.f32 %v2228, %v2235
          %v2249 = vmul.f32 %v2229, %v2235
          %v2250 = vmul.f32 %v2230, %v2235
          %v2251 = vmul.f32 %v2231, %v2235
          %v2252 = vadd.f32 %v2200, %v2236
          %v2253 = vadd.f32 %v2201, %v2237
          %v2254 = vadd.f32 %v2202, %v2238
          %v2255 = vadd.f32 %v2203, %v2239
          %v2256 = vadd.f32 %v2204, %v2240
          %v2257 = vadd.f32 %v2205, %v2241
          %v2258 = vadd.f32 %v2206, %v2242
          %v2259 = vadd.f32 %v2207, %v2243
          %v2260 = vadd.f32 %v2208, %v2244
          %v2261 = vadd.f32 %v2209, %v2245
          %v2262 = vadd.f32 %v2210, %v2246
          %v2263 = vadd.f32 %v2211, %v2247
          %v2264 = vadd.f32 %v2212, %v2248
          %v2265 = vadd.f32 %v2213, %v2249
          %v2266 = vadd.f32 %v2214, %v2250
          %v2267 = vadd.f32 %v2215, %v2251
          %v2268 = vmul.f32 %v2252, %v2252
          %v2269 = vmul.f32 %v2253, %v2253
          %v2270 = vmul.f32 %v2254, %v2254
          %v2271 = vmul.f32 %v2255, %v2255
          %v2272 = vmul.f32 %v2256, %v2256
          %v2273 = vmul.f32 %v2257, %v2257
          %v2274 = vmul.f32 %v2258, %v2258
          %v2275 = vmul.f32 %v2259, %v2259
          %v2276 = vmul.f32 %v2260, %v2260
          %v2277 = vmul.f32 %v2261, %v2261
          %v2278 = vmul.f32 %v2262, %v2262
          %v2279 = vmul.f32 %v2263, %v2263
          %v2280 = vmul.f32 %v2264, %v2264
          %v2281 = vmul.f32 %v2265, %v2265
          %v2282 = vmul.f32 %v2266, %v2266
          %v2283 = vmul.f32 %v2267, %v2267
          %2284 = vadd.xlane.f32.xlu0 %v2268
          %v2285 = vpop.xlane.xlu0 %2284
          %2286 = vadd.xlane.f32.xlu0 %v2269
          %v2287 = vpop.xlane.xlu0 %2286
          %2288 = vadd.xlane.f32.xlu0 %v2270
          %v2289 = vpop.xlane.xlu0 %2288
          %2290 = vadd.xlane.f32.xlu0 %v2271
          %v2291 = vpop.xlane.xlu0 %2290
          %2292 = vadd.xlane.f32.xlu0 %v2272
          %v2293 = vpop.xlane.xlu0 %2292
          %2294 = vadd.xlane.f32.xlu0 %v2273
          %v2295 = vpop.xlane.xlu0 %2294
          %2296 = vadd.xlane.f32.xlu0 %v2274
          %v2297 = vpop.xlane.xlu0 %2296
          %2298 = vadd.xlane.f32.xlu0 %v2275
          %v2299 = vpop.xlane.xlu0 %2298
          %2300 = vadd.xlane.f32.xlu0 %v2276
          %v2301 = vpop.xlane.xlu0 %2300
          %2302 = vadd.xlane.f32.xlu0 %v2277
          %v2303 = vpop.xlane.xlu0 %2302
          %2304 = vadd.xlane.f32.xlu0 %v2278
          %v2305 = vpop.xlane.xlu0 %2304
          %2306 = vadd.xlane.f32.xlu0 %v2279
          %v2307 = vpop.xlane.xlu0 %2306
          %2308 = vadd.xlane.f32.xlu0 %v2280
          %v2309 = vpop.xlane.xlu0 %2308
          %2310 = vadd.xlane.f32.xlu0 %v2281
          %v2311 = vpop.xlane.xlu0 %2310
          %2312 = vadd.xlane.f32.xlu0 %v2282
          %v2313 = vpop.xlane.xlu0 %2312
          %2314 = vadd.xlane.f32.xlu0 %v2283
          %v2315 = vpop.xlane.xlu0 %2314
          %v2316 = vmax.f32 %v2285, 1e-24
          %v2317 = vmax.f32 %v2287, 1e-24
          %v2318 = vmax.f32 %v2289, 1e-24
          %v2319 = vmax.f32 %v2291, 1e-24
          %v2320 = vmax.f32 %v2293, 1e-24
          %v2321 = vmax.f32 %v2295, 1e-24
          %v2322 = vmax.f32 %v2297, 1e-24
          %v2323 = vmax.f32 %v2299, 1e-24
          %v2324 = vmax.f32 %v2301, 1e-24
          %v2325 = vmax.f32 %v2303, 1e-24
          %v2326 = vmax.f32 %v2305, 1e-24
          %v2327 = vmax.f32 %v2307, 1e-24
          %v2328 = vmax.f32 %v2309, 1e-24
          %v2329 = vmax.f32 %v2311, 1e-24
          %v2330 = vmax.f32 %v2313, 1e-24
          %v2331 = vmax.f32 %v2315, 1e-24
          %v2332 = vrsqrt.pop %v2316
          %v2333 = vrsqrt.pop %v2317
          %v2334 = vrsqrt.pop %v2318
          %v2335 = vrsqrt.pop %v2319
          %v2336 = vrsqrt.pop %v2320
          %v2337 = vrsqrt.pop %v2321
          %v2338 = vrsqrt.pop %v2322
          %v2339 = vrsqrt.pop %v2323
          %v2340 = vrsqrt.pop %v2324
          %v2341 = vrsqrt.pop %v2325
          %v2342 = vrsqrt.pop %v2326
          %v2343 = vrsqrt.pop %v2327
          %v2344 = vrsqrt.pop %v2328
          %v2345 = vrsqrt.pop %v2329
          %v2346 = vrsqrt.pop %v2330
          %v2347 = vrsqrt.pop %v2331
          %v2348 = vmul.f32 %v2252, %v2332
          %v2349 = vmul.f32 %v2253, %v2333
          %v2350 = vmul.f32 %v2254, %v2334
          %v2351 = vmul.f32 %v2255, %v2335
          %v2352 = vmul.f32 %v2256, %v2336
          %v2353 = vmul.f32 %v2257, %v2337
          %v2354 = vmul.f32 %v2258, %v2338
          %v2355 = vmul.f32 %v2259, %v2339
          %v2356 = vmul.f32 %v2260, %v2340
          %v2357 = vmul.f32 %v2261, %v2341
          %v2358 = vmul.f32 %v2262, %v2342
          %v2359 = vmul.f32 %v2263, %v2343
          %v2360 = vmul.f32 %v2264, %v2344
          %v2361 = vmul.f32 %v2265, %v2345
          %v2362 = vmul.f32 %v2266, %v2346
          %v2363 = vmul.f32 %v2267, %v2347
          %v2364 = vld [vmem:[#allocation6] sm:$0xff]
          %v2365 = vld [vmem:[#allocation6 + $0x8] sm:$0xff]
          %v2366 = vld [vmem:[#allocation6 + $0x10] sm:$0xff]
          %v2367 = vld [vmem:[#allocation6 + $0x18] sm:$0xff]
          %v2368 = vld [vmem:[#allocation6 + $0x20] sm:$0xff]
          %v2369 = vld [vmem:[#allocation6 + $0x28] sm:$0xff]
          %v2370 = vld [vmem:[#allocation6 + $0x30] sm:$0xff]
          %v2371 = vld [vmem:[#allocation6 + $0x38] sm:$0xff]
          %v2372 = vld [vmem:[#allocation6 + $0x40] sm:$0xff]
          %v2373 = vld [vmem:[#allocation6 + $0x48] sm:$0xff]
          %v2374 = vld [vmem:[#allocation6 + $0x50] sm:$0xff]
          %v2375 = vld [vmem:[#allocation6 + $0x58] sm:$0xff]
          %v2376 = vld [vmem:[#allocation6 + $0x60] sm:$0xff]
          %v2377 = vld [vmem:[#allocation6 + $0x68] sm:$0xff]
          %v2378 = vld [vmem:[#allocation6 + $0x70] sm:$0xff]
          %v2379 = vld [vmem:[#allocation6 + $0x78] sm:$0xff]
          %v2380 = vmax.f32 %v2348, 0.0
          %v2381 = vmax.f32 %v2349, 0.0
          %v2382 = vmax.f32 %v2350, 0.0
          %v2383 = vmax.f32 %v2351, 0.0
          %v2384 = vmax.f32 %v2352, 0.0
          %v2385 = vmax.f32 %v2353, 0.0
          %v2386 = vmax.f32 %v2354, 0.0
          %v2387 = vmax.f32 %v2355, 0.0
          %v2388 = vmax.f32 %v2356, 0.0
          %v2389 = vmax.f32 %v2357, 0.0
          %v2390 = vmax.f32 %v2358, 0.0
          %v2391 = vmax.f32 %v2359, 0.0
          %v2392 = vmax.f32 %v2360, 0.0
          %v2393 = vmax.f32 %v2361, 0.0
          %v2394 = vmax.f32 %v2362, 0.0
          %v2395 = vmax.f32 %v2363, 0.0
          %v2396 = vld [vmem:[%s854] sm:$0xff]
          %v2397 = vld [vmem:[%s854 + $0x8] sm:$0xff]
          %v2398 = vld [vmem:[%s854 + $0x10] sm:$0xff]
          %v2399 = vld [vmem:[%s854 + $0x18] sm:$0xff]
          %v2400 = vld [vmem:[%s854 + $0x20] sm:$0xff]
          %v2401 = vld [vmem:[%s854 + $0x28] sm:$0xff]
          %v2402 = vld [vmem:[%s854 + $0x30] sm:$0xff]
          %v2403 = vld [vmem:[%s854 + $0x38] sm:$0xff]
          %v2404 = vld [vmem:[%s854 + $0x40] sm:$0xff]
          %v2405 = vld [vmem:[%s854 + $0x48] sm:$0xff]
          %v2406 = vld [vmem:[%s854 + $0x50] sm:$0xff]
          %v2407 = vld [vmem:[%s854 + $0x58] sm:$0xff]
          %v2408 = vld [vmem:[%s854 + $0x60] sm:$0xff]
          %v2409 = vld [vmem:[%s854 + $0x68] sm:$0xff]
          %v2410 = vld [vmem:[%s854 + $0x70] sm:$0xff]
          %v2411 = vld [vmem:[%s854 + $0x78] sm:$0xff]
          %2412 = vmatprep.subr.mxu0 0.0
          %2413 = vmatpush1.msra.mxu0 %v2411
          %2414 = vmatprep.subr.mxu0 0.0
          %2415 = vmatpush1.msra.mxu0 %v2410
          %2416 = vmatprep.subr.mxu0 0.0
          %2417 = vmatpush1.msra.mxu0 %v2409
          %2418 = vmatprep.subr.mxu0 0.0
          %2419 = vmatpush1.msra.mxu0 %v2408
          %2420 = vmatprep.subr.mxu0 0.0
          %2421 = vmatpush1.msra.mxu0 %v2407
          %2422 = vmatprep.subr.mxu0 0.0
          %2423 = vmatpush1.msra.mxu0 %v2406
          %2424 = vmatprep.subr.mxu0 0.0
          %2425 = vmatpush1.msra.mxu0 %v2405
          %2426 = vmatprep.subr.mxu0 0.0
          %2427 = vmatpush1.msra.mxu0 %v2404
          %2428 = vmatprep.subr.mxu0 0.0
          %2429 = vmatpush1.msra.mxu0 %v2403
          %2430 = vmatprep.subr.mxu0 0.0
          %2431 = vmatpush1.msra.mxu0 %v2402
          %2432 = vmatprep.subr.mxu0 0.0
          %2433 = vmatpush1.msra.mxu0 %v2401
          %2434 = vmatprep.subr.mxu0 0.0
          %2435 = vmatpush1.msra.mxu0 %v2400
          %2436 = vmatprep.subr.mxu0 0.0
          %2437 = vmatpush1.msra.mxu0 %v2399
          %2438 = vmatprep.subr.mxu0 0.0
          %2439 = vmatpush1.msra.mxu0 %v2398
          %2440 = vmatprep.subr.mxu0 0.0
          %2441 = vmatpush1.msra.mxu0 %v2397
          %2442 = vmatprep.subr.mxu0 0.0
          %2443 = vmatpush1.msra.mxu0 %v2396
          %2444 = vmatprep.subr.mxu0 0.0
          %2445 = vmatpush2.msra.mxu0 0.0
          %2446 = vmatprep.subr.mxu0 0.0
          %2447 = vmatpush2.msra.mxu0 0.0
          %2448 = vmatprep.subr.mxu0 0.0
          %2449 = vmatpush2.msra.mxu0 0.0
          %2450 = vmatprep.subr.mxu0 0.0
          %2451 = vmatpush2.msra.mxu0 0.0
          %2452 = vmatprep.subr.mxu0 0.0
          %2453 = vmatpush2.msra.mxu0 0.0
          %2454 = vmatprep.subr.mxu0 0.0
          %2455 = vmatpush2.msra.mxu0 0.0
          %2456 = vmatprep.subr.mxu0 0.0
          %2457 = vmatpush2.msra.mxu0 0.0
          %2458 = vmatprep.subr.mxu0 0.0
          %2459 = vmatpush2.msra.mxu0 0.0
          %2460 = vmatprep.subr.mxu0 0.0
          %2461 = vmatpush2.msra.mxu0 0.0
          %2462 = vmatprep.subr.mxu0 0.0
          %2463 = vmatpush2.msra.mxu0 0.0
          %2464 = vmatprep.subr.mxu0 0.0
          %2465 = vmatpush2.msra.mxu0 0.0
          %2466 = vmatprep.subr.mxu0 0.0
          %2467 = vmatpush2.msra.mxu0 0.0
          %2468 = vmatprep.subr.mxu0 0.0
          %2469 = vmatpush2.msra.mxu0 0.0
          %2470 = vmatprep.subr.mxu0 0.0
          %2471 = vmatpush2.msra.mxu0 0.0
          %2472 = vmatprep.subr.mxu0 0.0
          %2473 = vmatpush2.msra.mxu0 0.0
          %2474 = vmatprep.subr.mxu0 0.0
          %2475 = vmatpush2.msra.mxu0 0.0
          %2476 = vmatprep.mubr.f32.mxu0 0.0
          %2477 = vmatmul.mubr.f32.gmra.mxu0 %v2380
          %v2478 = vpop.f32.mrf.mxu0
          %v2479 = vadd.f32 0.0, %v2478
          %v2480 = vpop.f32.mrf.mxu0
          %2481 = vmatprep.mubr.f32.mxu0 0.0
          %2482 = vmatmul.mubr.f32.gmra.mxu0 %v2381
          %v2483 = vpop.f32.mrf.mxu0
          %v2484 = vadd.f32 0.0, %v2483
          %v2485 = vpop.f32.mrf.mxu0
          %2486 = vmatprep.mubr.f32.mxu0 0.0
          %2487 = vmatmul.mubr.f32.gmra.mxu0 %v2382
          %v2488 = vpop.f32.mrf.mxu0
          %v2489 = vadd.f32 0.0, %v2488
          %v2490 = vpop.f32.mrf.mxu0
          %2491 = vmatprep.mubr.f32.mxu0 0.0
          %2492 = vmatmul.mubr.f32.gmra.mxu0 %v2383
          %v2493 = vpop.f32.mrf.mxu0
          %v2494 = vadd.f32 0.0, %v2493
          %v2495 = vpop.f32.mrf.mxu0
          %2496 = vmatprep.mubr.f32.mxu0 0.0
          %2497 = vmatmul.mubr.f32.gmra.mxu0 %v2384
          %v2498 = vpop.f32.mrf.mxu0
          %v2499 = vadd.f32 0.0, %v2498
          %v2500 = vpop.f32.mrf.mxu0
          %2501 = vmatprep.mubr.f32.mxu0 0.0
          %2502 = vmatmul.mubr.f32.gmra.mxu0 %v2385
          %v2503 = vpop.f32.mrf.mxu0
          %v2504 = vadd.f32 0.0, %v2503
          %v2505 = vpop.f32.mrf.mxu0
          %2506 = vmatprep.mubr.f32.mxu0 0.0
          %2507 = vmatmul.mubr.f32.gmra.mxu0 %v2386
          %v2508 = vpop.f32.mrf.mxu0
          %v2509 = vadd.f32 0.0, %v2508
          %v2510 = vpop.f32.mrf.mxu0
          %2511 = vmatprep.mubr.f32.mxu0 0.0
          %2512 = vmatmul.mubr.f32.gmra.mxu0 %v2387
          %v2513 = vpop.f32.mrf.mxu0
          %v2514 = vadd.f32 0.0, %v2513
          %v2515 = vpop.f32.mrf.mxu0
          %2516 = vmatprep.mubr.f32.mxu0 0.0
          %2517 = vmatmul.mubr.f32.gmra.mxu0 %v2388
          %v2518 = vpop.f32.mrf.mxu0
          %v2519 = vadd.f32 0.0, %v2518
          %v2520 = vpop.f32.mrf.mxu0
          %2521 = vmatprep.mubr.f32.mxu0 0.0
          %2522 = vmatmul.mubr.f32.gmra.mxu0 %v2389
          %v2523 = vpop.f32.mrf.mxu0
          %v2524 = vadd.f32 0.0, %v2523
          %v2525 = vpop.f32.mrf.mxu0
          %2526 = vmatprep.mubr.f32.mxu0 0.0
          %2527 = vmatmul.mubr.f32.gmra.mxu0 %v2390
          %v2528 = vpop.f32.mrf.mxu0
          %v2529 = vadd.f32 0.0, %v2528
          %v2530 = vpop.f32.mrf.mxu0
          %2531 = vmatprep.mubr.f32.mxu0 0.0
          %2532 = vmatmul.mubr.f32.gmra.mxu0 %v2391
          %v2533 = vpop.f32.mrf.mxu0
          %v2534 = vadd.f32 0.0, %v2533
          %v2535 = vpop.f32.mrf.mxu0
          %2536 = vmatprep.mubr.f32.mxu0 0.0
          %2537 = vmatmul.mubr.f32.gmra.mxu0 %v2392
          %v2538 = vpop.f32.mrf.mxu0
          %v2539 = vadd.f32 0.0, %v2538
          %v2540 = vpop.f32.mrf.mxu0
          %2541 = vmatprep.mubr.f32.mxu0 0.0
          %2542 = vmatmul.mubr.f32.gmra.mxu0 %v2393
          %v2543 = vpop.f32.mrf.mxu0
          %v2544 = vadd.f32 0.0, %v2543
          %v2545 = vpop.f32.mrf.mxu0
          %2546 = vmatprep.mubr.f32.mxu0 0.0
          %2547 = vmatmul.mubr.f32.gmra.mxu0 %v2394
          %v2548 = vpop.f32.mrf.mxu0
          %v2549 = vadd.f32 0.0, %v2548
          %v2550 = vpop.f32.mrf.mxu0
          %2551 = vmatprep.mubr.f32.mxu0 0.0
          %2552 = vmatmul.mubr.f32.gmra.mxu0 %v2395
          %v2553 = vpop.f32.mrf.mxu0
          %v2554 = vadd.f32 0.0, %v2553
          %v2555 = vpop.f32.mrf.mxu0
          %2556 = vdwg.mxu0
          %v2557 = vadd.f32 %v2364, %v2479
          %v2558 = vadd.f32 %v2365, %v2484
          %v2559 = vadd.f32 %v2366, %v2489
          %v2560 = vadd.f32 %v2367, %v2494
          %v2561 = vadd.f32 %v2368, %v2499
          %v2562 = vadd.f32 %v2369, %v2504
          %v2563 = vadd.f32 %v2370, %v2509
          %v2564 = vadd.f32 %v2371, %v2514
          %v2565 = vadd.f32 %v2372, %v2519
          %v2566 = vadd.f32 %v2373, %v2524
          %v2567 = vadd.f32 %v2374, %v2529
          %v2568 = vadd.f32 %v2375, %v2534
          %v2569 = vadd.f32 %v2376, %v2539
          %v2570 = vadd.f32 %v2377, %v2544
          %v2571 = vadd.f32 %v2378, %v2549
          %v2572 = vadd.f32 %v2379, %v2554
          %2573 = vst [vmem:[#allocation6] sm:$0xff] %v2557
          %2574 = vst [vmem:[#allocation6 + $0x8] sm:$0xff] %v2558
          %2575 = vst [vmem:[#allocation6 + $0x10] sm:$0xff] %v2559
          %2576 = vst [vmem:[#allocation6 + $0x18] sm:$0xff] %v2560
          %2577 = vst [vmem:[#allocation6 + $0x20] sm:$0xff] %v2561
          %2578 = vst [vmem:[#allocation6 + $0x28] sm:$0xff] %v2562
          %2579 = vst [vmem:[#allocation6 + $0x30] sm:$0xff] %v2563
          %2580 = vst [vmem:[#allocation6 + $0x38] sm:$0xff] %v2564
          %2581 = vst [vmem:[#allocation6 + $0x40] sm:$0xff] %v2565
          %2582 = vst [vmem:[#allocation6 + $0x48] sm:$0xff] %v2566
          %2583 = vst [vmem:[#allocation6 + $0x50] sm:$0xff] %v2567
          %2584 = vst [vmem:[#allocation6 + $0x58] sm:$0xff] %v2568
          %2585 = vst [vmem:[#allocation6 + $0x60] sm:$0xff] %v2569
          %2586 = vst [vmem:[#allocation6 + $0x68] sm:$0xff] %v2570
          %2587 = vst [vmem:[#allocation6 + $0x70] sm:$0xff] %v2571
          %2588 = vst [vmem:[#allocation6 + $0x78] sm:$0xff] %v2572
        $region216: #{ggat_forward.3} parent=187 // pred_fallthru
          _
        %p2589 = scmp.eq.s32.totalorder %s25, 1
        %p2590 = pnand %p2589, %p2047
        %p2591 = pneg %p2590
        // Predicated region
        $region217: #{ggat_forward.3} parent=187 // pred_check
          _
        $region218: #{ggat_forward.3} parent=187 // pred_check_branch
          %2593 = sbr.rel (%p2590) target = $region220
        $region219: #{ggat_forward.3} parent=187 // pred_region
          %v2594 = vld [vmem:[#allocation6] sm:$0xff]
          %v2595 = vld [vmem:[#allocation6 + $0x8] sm:$0xff]
          %v2596 = vld [vmem:[#allocation6 + $0x10] sm:$0xff]
          %v2597 = vld [vmem:[#allocation6 + $0x18] sm:$0xff]
          %v2598 = vld [vmem:[#allocation6 + $0x20] sm:$0xff]
          %v2599 = vld [vmem:[#allocation6 + $0x28] sm:$0xff]
          %v2600 = vld [vmem:[#allocation6 + $0x30] sm:$0xff]
          %v2601 = vld [vmem:[#allocation6 + $0x38] sm:$0xff]
          %v2602 = vld [vmem:[#allocation6 + $0x40] sm:$0xff]
          %v2603 = vld [vmem:[#allocation6 + $0x48] sm:$0xff]
          %v2604 = vld [vmem:[#allocation6 + $0x50] sm:$0xff]
          %v2605 = vld [vmem:[#allocation6 + $0x58] sm:$0xff]
          %v2606 = vld [vmem:[#allocation6 + $0x60] sm:$0xff]
          %v2607 = vld [vmem:[#allocation6 + $0x68] sm:$0xff]
          %v2608 = vld [vmem:[#allocation6 + $0x70] sm:$0xff]
          %v2609 = vld [vmem:[#allocation6 + $0x78] sm:$0xff]
          %v2610 = vld [vmem:[%s6] sm:$0x1]
          %v2612 = vlaneseq
          %v2613 = vshrl.u32 %v2612, 7
          %v2614 = vsub.s32 0, %v2613
          %v2615 = vrot.slane %v2610, %v2614
          %v2617 = vadd.f32 %v2594, %v2615
          %v2618 = vadd.f32 %v2595, %v2615
          %v2619 = vadd.f32 %v2596, %v2615
          %v2620 = vadd.f32 %v2597, %v2615
          %v2621 = vadd.f32 %v2598, %v2615
          %v2622 = vadd.f32 %v2599, %v2615
          %v2623 = vadd.f32 %v2600, %v2615
          %v2624 = vadd.f32 %v2601, %v2615
          %v2625 = vadd.f32 %v2602, %v2615
          %v2626 = vadd.f32 %v2603, %v2615
          %v2627 = vadd.f32 %v2604, %v2615
          %v2628 = vadd.f32 %v2605, %v2615
          %v2629 = vadd.f32 %v2606, %v2615
          %v2630 = vadd.f32 %v2607, %v2615
          %v2631 = vadd.f32 %v2608, %v2615
          %v2632 = vadd.f32 %v2609, %v2615
          %2633 = vmax.xlane.f32.xlu0 %v2617
          %v2634 = vpop.xlane.xlu0 %2633
          %2635 = vmax.xlane.f32.xlu0 %v2618
          %v2636 = vpop.xlane.xlu0 %2635
          %2637 = vmax.xlane.f32.xlu0 %v2619
          %v2638 = vpop.xlane.xlu0 %2637
          %2639 = vmax.xlane.f32.xlu0 %v2620
          %v2640 = vpop.xlane.xlu0 %2639
          %2641 = vmax.xlane.f32.xlu0 %v2621
          %v2642 = vpop.xlane.xlu0 %2641
          %2643 = vmax.xlane.f32.xlu0 %v2622
          %v2644 = vpop.xlane.xlu0 %2643
          %2645 = vmax.xlane.f32.xlu0 %v2623
          %v2646 = vpop.xlane.xlu0 %2645
          %2647 = vmax.xlane.f32.xlu0 %v2624
          %v2648 = vpop.xlane.xlu0 %2647
          %2649 = vmax.xlane.f32.xlu0 %v2625
          %v2650 = vpop.xlane.xlu0 %2649
          %2651 = vmax.xlane.f32.xlu0 %v2626
          %v2652 = vpop.xlane.xlu0 %2651
          %2653 = vmax.xlane.f32.xlu0 %v2627
          %v2654 = vpop.xlane.xlu0 %2653
          %2655 = vmax.xlane.f32.xlu0 %v2628
          %v2656 = vpop.xlane.xlu0 %2655
          %2657 = vmax.xlane.f32.xlu0 %v2629
          %v2658 = vpop.xlane.xlu0 %2657
          %2659 = vmax.xlane.f32.xlu0 %v2630
          %v2660 = vpop.xlane.xlu0 %2659
          %2661 = vmax.xlane.f32.xlu0 %v2631
          %v2662 = vpop.xlane.xlu0 %2661
          %2663 = vmax.xlane.f32.xlu0 %v2632
          %v2664 = vpop.xlane.xlu0 %2663
          %v2665 = vsub.f32 %v2617, %v2634
          %v2666 = vsub.f32 %v2618, %v2636
          %v2667 = vsub.f32 %v2619, %v2638
          %v2668 = vsub.f32 %v2620, %v2640
          %v2669 = vsub.f32 %v2621, %v2642
          %v2670 = vsub.f32 %v2622, %v2644
          %v2671 = vsub.f32 %v2623, %v2646
          %v2672 = vsub.f32 %v2624, %v2648
          %v2673 = vsub.f32 %v2625, %v2650
          %v2674 = vsub.f32 %v2626, %v2652
          %v2675 = vsub.f32 %v2627, %v2654
          %v2676 = vsub.f32 %v2628, %v2656
          %v2677 = vsub.f32 %v2629, %v2658
          %v2678 = vsub.f32 %v2630, %v2660
          %v2679 = vsub.f32 %v2631, %v2662
          %v2680 = vsub.f32 %v2632, %v2664
          %v2681 = vmul.f32 %v2665, 1.442695
          %v2682 = vpow.pop %v2681
          %v2683 = vmul.f32 %v2666, 1.442695
          %v2684 = vpow.pop %v2683
          %v2685 = vmul.f32 %v2667, 1.442695
          %v2686 = vpow.pop %v2685
          %v2687 = vmul.f32 %v2668, 1.442695
          %v2688 = vpow.pop %v2687
          %v2689 = vmul.f32 %v2669, 1.442695
          %v2690 = vpow.pop %v2689
          %v2691 = vmul.f32 %v2670, 1.442695
          %v2692 = vpow.pop %v2691
          %v2693 = vmul.f32 %v2671, 1.442695
          %v2694 = vpow.pop %v2693
          %v2695 = vmul.f32 %v2672, 1.442695
          %v2696 = vpow.pop %v2695
          %v2697 = vmul.f32 %v2673, 1.442695
          %v2698 = vpow.pop %v2697
          %v2699 = vmul.f32 %v2674, 1.442695
          %v2700 = vpow.pop %v2699
          %v2701 = vmul.f32 %v2675, 1.442695
          %v2702 = vpow.pop %v2701
          %v2703 = vmul.f32 %v2676, 1.442695
          %v2704 = vpow.pop %v2703
          %v2705 = vmul.f32 %v2677, 1.442695
          %v2706 = vpow.pop %v2705
          %v2707 = vmul.f32 %v2678, 1.442695
          %v2708 = vpow.pop %v2707
          %v2709 = vmul.f32 %v2679, 1.442695
          %v2710 = vpow.pop %v2709
          %v2711 = vmul.f32 %v2680, 1.442695
          %v2712 = vpow.pop %v2711
          %2713 = vadd.xlane.f32.xlu0 %v2682
          %v2714 = vpop.xlane.xlu0 %2713
          %2715 = vadd.xlane.f32.xlu0 %v2684
          %v2716 = vpop.xlane.xlu0 %2715
          %2717 = vadd.xlane.f32.xlu0 %v2686
          %v2718 = vpop.xlane.xlu0 %2717
          %2719 = vadd.xlane.f32.xlu0 %v2688
          %v2720 = vpop.xlane.xlu0 %2719
          %2721 = vadd.xlane.f32.xlu0 %v2690
          %v2722 = vpop.xlane.xlu0 %2721
          %2723 = vadd.xlane.f32.xlu0 %v2692
          %v2724 = vpop.xlane.xlu0 %2723
          %2725 = vadd.xlane.f32.xlu0 %v2694
          %v2726 = vpop.xlane.xlu0 %2725
          %2727 = vadd.xlane.f32.xlu0 %v2696
          %v2728 = vpop.xlane.xlu0 %2727
          %2729 = vadd.xlane.f32.xlu0 %v2698
          %v2730 = vpop.xlane.xlu0 %2729
          %2731 = vadd.xlane.f32.xlu0 %v2700
          %v2732 = vpop.xlane.xlu0 %2731
          %2733 = vadd.xlane.f32.xlu0 %v2702
          %v2734 = vpop.xlane.xlu0 %2733
          %2735 = vadd.xlane.f32.xlu0 %v2704
          %v2736 = vpop.xlane.xlu0 %2735
          %2737 = vadd.xlane.f32.xlu0 %v2706
          %v2738 = vpop.xlane.xlu0 %2737
          %2739 = vadd.xlane.f32.xlu0 %v2708
          %v2740 = vpop.xlane.xlu0 %2739
          %2741 = vadd.xlane.f32.xlu0 %v2710
          %v2742 = vpop.xlane.xlu0 %2741
          %2743 = vadd.xlane.f32.xlu0 %v2712
          %v2744 = vpop.xlane.xlu0 %2743
          %v2745 = vlog2.pop %v2714
          %v2746 = vmul.f32 %v2745, 0.6931472
          %v2747 = vlog2.pop %v2716
          %v2748 = vmul.f32 %v2747, 0.6931472
          %v2749 = vlog2.pop %v2718
          %v2750 = vmul.f32 %v2749, 0.6931472
          %v2751 = vlog2.pop %v2720
          %v2752 = vmul.f32 %v2751, 0.6931472
          %v2753 = vlog2.pop %v2722
          %v2754 = vmul.f32 %v2753, 0.6931472
          %v2755 = vlog2.pop %v2724
          %v2756 = vmul.f32 %v2755, 0.6931472
          %v2757 = vlog2.pop %v2726
          %v2758 = vmul.f32 %v2757, 0.6931472
          %v2759 = vlog2.pop %v2728
          %v2760 = vmul.f32 %v2759, 0.6931472
          %v2761 = vlog2.pop %v2730
          %v2762 = vmul.f32 %v2761, 0.6931472
          %v2763 = vlog2.pop %v2732
          %v2764 = vmul.f32 %v2763, 0.6931472
          %v2765 = vlog2.pop %v2734
          %v2766 = vmul.f32 %v2765, 0.6931472
          %v2767 = vlog2.pop %v2736
          %v2768 = vmul.f32 %v2767, 0.6931472
          %v2769 = vlog2.pop %v2738
          %v2770 = vmul.f32 %v2769, 0.6931472
          %v2771 = vlog2.pop %v2740
          %v2772 = vmul.f32 %v2771, 0.6931472
          %v2773 = vlog2.pop %v2742
          %v2774 = vmul.f32 %v2773, 0.6931472
          %v2775 = vlog2.pop %v2744
          %v2776 = vmul.f32 %v2775, 0.6931472
          %v2777 = vadd.f32 %v2746, %v2634
          %v2778 = vadd.f32 %v2748, %v2636
          %v2779 = vadd.f32 %v2750, %v2638
          %v2780 = vadd.f32 %v2752, %v2640
          %v2781 = vadd.f32 %v2754, %v2642
          %v2782 = vadd.f32 %v2756, %v2644
          %v2783 = vadd.f32 %v2758, %v2646
          %v2784 = vadd.f32 %v2760, %v2648
          %v2785 = vadd.f32 %v2762, %v2650
          %v2786 = vadd.f32 %v2764, %v2652
          %v2787 = vadd.f32 %v2766, %v2654
          %v2788 = vadd.f32 %v2768, %v2656
          %v2789 = vadd.f32 %v2770, %v2658
          %v2790 = vadd.f32 %v2772, %v2660
          %v2791 = vadd.f32 %v2774, %v2662
          %v2792 = vadd.f32 %v2776, %v2664
          %v2793 = vsub.f32 %v2617, %v2777
          %v2794 = vsub.f32 %v2618, %v2778
          %v2795 = vsub.f32 %v2619, %v2779
          %v2796 = vsub.f32 %v2620, %v2780
          %v2797 = vsub.f32 %v2621, %v2781
          %v2798 = vsub.f32 %v2622, %v2782
          %v2799 = vsub.f32 %v2623, %v2783
          %v2800 = vsub.f32 %v2624, %v2784
          %v2801 = vsub.f32 %v2625, %v2785
          %v2802 = vsub.f32 %v2626, %v2786
          %v2803 = vsub.f32 %v2627, %v2787
          %v2804 = vsub.f32 %v2628, %v2788
          %v2805 = vsub.f32 %v2629, %v2789
          %v2806 = vsub.f32 %v2630, %v2790
          %v2807 = vsub.f32 %v2631, %v2791
          %v2808 = vsub.f32 %v2632, %v2792
          %2809 = vst [vmem:[%s863] sm:$0xff] %v2793
          %2810 = vst [vmem:[%s863 + $0x8] sm:$0xff] %v2794
          %2811 = vst [vmem:[%s863 + $0x10] sm:$0xff] %v2795
          %2812 = vst [vmem:[%s863 + $0x18] sm:$0xff] %v2796
          %2813 = vst [vmem:[%s863 + $0x20] sm:$0xff] %v2797
          %2814 = vst [vmem:[%s863 + $0x28] sm:$0xff] %v2798
          %2815 = vst [vmem:[%s863 + $0x30] sm:$0xff] %v2799
          %2816 = vst [vmem:[%s863 + $0x38] sm:$0xff] %v2800
          %2817 = vst [vmem:[%s863 + $0x40] sm:$0xff] %v2801
          %2818 = vst [vmem:[%s863 + $0x48] sm:$0xff] %v2802
          %2819 = vst [vmem:[%s863 + $0x50] sm:$0xff] %v2803
          %2820 = vst [vmem:[%s863 + $0x58] sm:$0xff] %v2804
          %2821 = vst [vmem:[%s863 + $0x60] sm:$0xff] %v2805
          %2822 = vst [vmem:[%s863 + $0x68] sm:$0xff] %v2806
          %2823 = vst [vmem:[%s863 + $0x70] sm:$0xff] %v2807
          %2824 = vst [vmem:[%s863 + $0x78] sm:$0xff] %v2808
        $region220: #{ggat_forward.3} parent=187 // pred_fallthru
          _
        %s2825 = smul.u32 16, %s24
        %p2826 = scmp.lt.s32.totalorder %s2825, 31
        %s2827 = scalar_select %p2826, %s2825, 31
        %s2828 = smul.addr %s2827, 8
        %s2829 = scalar_lea.vmem %s8, %s2828
        // Predicated region
        $region221: #{ggat_forward.3} parent=187 // pred_check
          %p2830 = pneg %p275
        $region222: #{ggat_forward.3} parent=187 // pred_check_branch
          %2832 = sbr.rel (%p2830) target = $region224
        $region223: #{ggat_forward.3} parent=187 // pred_region
          %s2833 = smul.u32 16, %s24
        $region224: #{ggat_forward.3} parent=187 // pred_fallthru
          _
      $region188: #{ggat_forward.3} parent=5 // pred_fallthru
        _
      %p2834 = scmp.le.s32.totalorder 2, %s14
      // Predicated region
      $region225: #{ggat_forward.3} parent=5 // pred_check
        %p2835 = pneg %p2834
      $region226: #{ggat_forward.3} parent=5 // pred_check_branch
        %2837 = sbr.rel (%p2835) target = $region228
      $region227: #{ggat_forward.3} parent=5 // pred_region
        %s2838 = ssub.s32 %s14, 2
        // Predicated region
        $region229: #{ggat_forward.3} parent=227 // pred_check
          %p2839 = pneg %p281
        $region230: #{ggat_forward.3} parent=227 // pred_check_branch
          %2841 = sbr.rel (%p2839) target = $region232
        $region231: #{ggat_forward.3} parent=227 // pred_region
          %s2842 = smul.u32 16, %s27
          %p2843 = scmp.lt.s32.totalorder %s2842, 31
          %s2844 = scalar_select %p2843, %s2842, 31
          %s2845 = smul.addr %s2844, 8
          %s2846 = scalar_lea.vmem %s8, %s2845
        $region232: #{ggat_forward.3} parent=227 // pred_fallthru
          _
      $region228: #{ggat_forward.3} parent=5 // pred_fallthru
        _
    $region6: #{ggat_forward.3} parent=1 // loop_footer
      %s18 = sadd.s32 1, %s14
    $region7: #{ggat_forward.3} parent=1 // loop_footer_branch
      %13 = sbr.rel target = $region3
    $region8: #{ggat_forward.3} parent=1 // loop_exit
      _

</llo_original>
